<compile_context>
chip_gen: v5e
topology: v5e:2x2
jax: 0.10.0
libtpu: 0.0.40
codegen_flags: <defaults>
</compile_context>

<pallas_src>
import functools

import jax
import jax.numpy as jnp
from jax import lax
from jax.experimental import pallas as pl
from jax.experimental.pallas import tpu as pltpu

EPS = 1e-5                   # PyTorch InstanceNorm2d default (affine=False)
MATMUL_DTYPE = jnp.bfloat16  # MXU operand dtype; accumulation stays f32.


def _conv3x3_reflect(xf, wr_ref, is_first_col, is_last_col,
                     is_first_row, is_last_row, H, W, C):
    """3x3 conv with ReflectionPad2d(1) semantics, bias-free.

    xf: (H*W, C) f32 flat NHWC image.  wr_ref: (3C, 3C) packed weights with
    wr[kx*C + ci, ky*C + co] = w_hwio[ky, kx, ci, co].  Masks are (H*W, 1)
    bools broadcast across the channel lanes.  Returns (H*W, C) f32.
    """
    P = H * W
    # dx = +-1 column shifts: sublane rolls on the flat slab (XLU slot, no
    # relayout).  roll(x, s)[p] == x[(p - s) % P].  The single reflected
    # boundary column (and cross-row wraps) is fixed by a lane-broadcast mask.
    rl = pltpu.roll(xf, shift=1, axis=0)          # xf[p-1]
    rr = pltpu.roll(xf, shift=P - 1, axis=0)      # xf[p+1]
    s_left = jnp.where(is_first_col, rr, rl)      # x_reflect[h, w-1]  (kx=0)
    s_right = jnp.where(is_last_col, rl, rr)      # x_reflect[h, w+1]  (kx=2)

    # One MXU matmul for all 9 taps: K=3C, N=3C; bf16 operands, f32 accumulate.
    # (On v7x this could be split into three K=C matmuls accumulating in the
    # MRB to skip the concat buffer entirely; kept fused for portability.)
    patches = jnp.concatenate(
        [s_left.astype(MATMUL_DTYPE),
         xf.astype(MATMUL_DTYPE),
         s_right.astype(MATMUL_DTYPE)], axis=-1)                 # (P, 3C) bf16
    r = jnp.dot(patches, wr_ref[...], preferred_element_type=jnp.float32)
    r0 = r[:, 0 * C:1 * C]    # input-row partial, ky=0 weights -> out row h'+1
    r1 = r[:, 1 * C:2 * C]    # ky=1 weights -> out row h'
    r2 = r[:, 2 * C:3 * C]    # ky=2 weights -> out row h'-1

    # dy = +-1 row shifts on the f32 partials: flat +-W rolls + masked fix-up
    # of the reflected rows (row -1 -> row 1, row H -> row H-2).
    r0_dn = pltpu.roll(r0, shift=W, axis=0)        # r0[p-W]  (row h-1)
    r0_up = pltpu.roll(r0, shift=P - W, axis=0)    # r0[p+W]  (reflect @ h=0)
    r2_up = pltpu.roll(r2, shift=P - W, axis=0)    # r2[p+W]  (row h+1)
    r2_dn = pltpu.roll(r2, shift=W, axis=0)        # r2[p-W]  (reflect @ h=H-1)
    return (r1
            + jnp.where(is_first_row, r0_up, r0_dn)
            + jnp.where(is_last_row, r2_dn, r2_up))


def _instance_norm(y, P):
    # Single-pass per-channel stats (var = E[y^2] - E[y]^2), all f32.
    inv_n = 1.0 / float(P)
    mu = jnp.sum(y, axis=0, keepdims=True) * inv_n
    msq = jnp.sum(y * y, axis=0, keepdims=True) * inv_n
    var = jnp.maximum(msq - mu * mu, 0.0)
    return (y - mu) * lax.rsqrt(var + EPS)


def _resblk_kernel(x_ref, w1_ref, w2_ref, o_ref, *, H, W, C):
    P = H * W
    # Boundary masks depend only on the flattened spatial (sublane) index, so
    # keep them (P, 1) and let jnp.where broadcast across the channel lanes.
    pos = lax.broadcasted_iota(jnp.int32, (P, 1), 0)
    w_idx = pos % W
    is_first_col = w_idx == 0
    is_last_col = w_idx == W - 1
    is_first_row = pos < W
    is_last_row = pos >= P - W

    x = x_ref[0].reshape(P, C)          # resident f32 block (also skip source)

    # pad -> conv1 -> IN -> ReLU
    y = _conv3x3_reflect(x, w1_ref, is_first_col, is_last_col,
                         is_first_row, is_last_row, H, W, C)
    y = jnp.maximum(_instance_norm(y, P), 0.0)
    # pad -> conv2 -> IN
    y = _conv3x3_reflect(y, w2_ref, is_first_col, is_last_col,
                         is_first_row, is_last_row, H, W, C)
    y = _instance_norm(y, P)
    # Residual: re-read the skip from the resident input block.
    o_ref[0] = (y + x).reshape(H, W, C).astype(o_ref.dtype)


def _pack_weight(w_hwio, C):
    # (ky, kx, ci, co) -> rows kx*C+ci, cols ky*C+co; cast to bf16 once here.
    return jnp.transpose(w_hwio, (1, 2, 0, 3)).reshape(3 * C, 3 * C).astype(
        MATMUL_DTYPE)


def _vmem_capacity_bytes():
    # Generation-aware VMEM capacity (v5e/v6e: 128 MiB, v7x: 64 MiB per TC);
    # fall back to the most conservative figure if the query is unavailable.
    try:
        cap = getattr(pltpu.get_tpu_info(), "vmem_capacity_bytes", None)
        if cap:
            return int(cap)
    except Exception:
        pass
    return 64 << 20


def resblk_forward(x_nchw, w1, b1, w2, b2):
    """ResBlk forward.  x_nchw: (N, C, H, W) f32; w*: (3,3,C,C) HWIO; b*: (C,).

    The conv biases are exact no-ops in front of InstanceNorm2d(affine=False)
    (mean subtraction cancels a per-channel constant), so they are accepted for
    interface parity but never sent to the kernel.
    """
    del b1, b2
    N, C, H, W = x_nchw.shape
    x = jnp.transpose(x_nchw, (0, 2, 3, 1))          # NCHW -> NHWC
    w1p = _pack_weight(w1, C)
    w2p = _pack_weight(w2, C)

    # VMEM budget: double-buffered in/out image blocks + both packed weights
    # (double-buffered) + in-kernel temporaries (bf16 patches, f32 partials and
    # their rolls, IN temps) ~= 16 * act.  Leave ~15% of capacity as headroom
    # for Mosaic internal scratch instead of requesting the whole part.
    act = H * W * C * 4
    wbytes = 2 * 2 * (3 * C) * (3 * C) * jnp.dtype(MATMUL_DTYPE).itemsize
    need = 4 * act + wbytes + 16 * act + (2 << 20)
    headroom_cap = int(_vmem_capacity_bytes() * 0.85)
    vmem_limit = int(min(max(need, 32 << 20), headroom_cap))
    # TODO(synk): at full MUNIT scale (C=256, H=W=64) whole-image residency fits
    # the 128 MiB v5e/v6e parts but not v7x (64 MiB/TC); an H-strip grid with a
    # 1-row halo and a two-pass InstanceNorm (sum/sumsq scratch across strips)
    # is required there.

    flops = N * 2 * 2 * (H * W) * (3 * C) * (3 * C)  # two fused-tap matmuls
    cost = pl.CostEstimate(flops=flops, transcendentals=2 * N * C,
                           bytes_accessed=2 * N * act + wbytes)

    kernel = functools.partial(_resblk_kernel, H=H, W=W, C=C)
    out_nhwc = pl.pallas_call(
        kernel,
        out_shape=jax.ShapeDtypeStruct((N, H, W, C), x.dtype),
        grid_spec=pltpu.PrefetchScalarGridSpec(
            num_scalar_prefetch=0,
            grid=(N,),
            in_specs=[
                pl.BlockSpec((1, H, W, C), lambda n: (n, 0, 0, 0)),
                pl.BlockSpec((3 * C, 3 * C), lambda n: (0, 0)),
                pl.BlockSpec((3 * C, 3 * C), lambda n: (0, 0)),
            ],
            out_specs=pl.BlockSpec((1, H, W, C), lambda n: (n, 0, 0, 0)),
        ),
        compiler_params=pltpu.CompilerParams(
            dimension_semantics=("parallel",),       # batch images independent
            vmem_limit_bytes=vmem_limit),
        cost_estimate=cost,
    )(x, w1p, w2p)
    return jnp.transpose(out_nhwc, (0, 3, 1, 2))     # NHWC -> NCHW


def resblk_reference(x_nchw, w1, b1, w2, b2):
    # Pure-JAX f32 reference (XLA convs, biases kept) for the correctness check.
    x = jnp.transpose(x_nchw, (0, 2, 3, 1))

    def conv(z, w, b):
        zp = jnp.pad(z, ((0, 0), (1, 1), (1, 1), (0, 0)), mode="reflect")
        return lax.conv_general_dilated(
            zp, w, (1, 1), "VALID",
            dimension_numbers=("NHWC", "HWIO", "NHWC")) + b

    def inorm(z):
        mu = jnp.mean(z, axis=(1, 2), keepdims=True)
        var = jnp.mean((z - mu) ** 2, axis=(1, 2), keepdims=True)
        return (z - mu) * lax.rsqrt(var + EPS)

    y = jax.nn.relu(inorm(conv(x, w1, b1)))
    y = inorm(conv(y, w2, b2))
    return jnp.transpose(y + x, (0, 3, 1, 2))


if __name__ == "__main__":
    # Small demo shapes (production MUNIT: C=256, H=W=64 -> 3C = 768 fills the
    # 256x256 MXU; here 3C = 12 under-fills lanes but remains correct).
    N, C, H, W = 2, 4, 16, 16
    key = jax.random.PRNGKey(0)
    kx, k1, k2, k3, k4 = jax.random.split(key, 5)

    x = jax.random.normal(kx, (N, C, H, W), jnp.float32)
    fan_in = C * 3 * 3
    # Deterministic synthetic params (nn.Conv2d(dim, dim, 3) x 2, with bias).
    w1 = jax.random.normal(k1, (3, 3, C, C), jnp.float32) / jnp.sqrt(fan_in)
    b1 = jax.random.normal(k2, (C,), jnp.float32) * 0.1
    w2 = jax.random.normal(k3, (3, 3, C, C), jnp.float32) / jnp.sqrt(fan_in)
    b2 = jax.random.normal(k4, (C,), jnp.float32) * 0.1

    out = resblk_forward(x, w1, b1, w2, b2)
    out = jax.block_until_ready(out)

    ref = resblk_reference(x, w1, b1, w2, b2)
    assert out.shape == (N, C, H, W)
    # Tolerance loosened vs the pure-f32 reference because MXU operands are
    # bf16 (accumulation and InstanceNorm stats remain f32).
    assert jnp.allclose(out, ref, atol=5e-2, rtol=5e-2)
    print("KERNEL_OK")
</pallas_src>

<mosaic_0001>
module attributes {stable_mosaic.version = 11 : i64} {
  func.func @_resblk_kernel(%arg0: i32, %arg1: memref<1x16x16x4xf32, #tpu.memory_space<vmem>>, %arg2: memref<12x12xbf16, #tpu.memory_space<vmem>>, %arg3: memref<12x12xbf16, #tpu.memory_space<vmem>>, %arg4: memref<1x16x16x4xf32, #tpu.memory_space<vmem>>) attributes {dimension_semantics = [#tpu.dimension_semantics<parallel>], iteration_bounds = array<i64: 2>, scalar_prefetch = 0 : i64, scratch_operands = 0 : i64, tpu.core_type = #tpu.core_type<tc>, window_params = [{transform_indices = @transform_0, window_bounds = array<i64: 1, 16, 16, 4>}, {pipeline_mode = #tpu.pipeline_mode<synchronous>, transform_indices = @transform_1, window_bounds = array<i64: 12, 12>}, {pipeline_mode = #tpu.pipeline_mode<synchronous>, transform_indices = @transform_2, window_bounds = array<i64: 12, 12>}, {transform_indices = @transform_3, window_bounds = array<i64: 1, 16, 16, 4>}]} {
    %0 = tpu.iota {dimensions = array<i32: 0>} : vector<256x1xi32>
    %c16_i32 = arith.constant 16 : i32
    %c0_i32 = arith.constant 0 : i32
    %1 = arith.cmpi eq, %c16_i32, %c0_i32 : i32
    %c1_i32 = arith.constant 1 : i32
    %2 = arith.select %1, %c1_i32, %c16_i32 : i32
    %3 = vector.broadcast %2 : i32 to vector<256x1xi32>
    %4 = arith.remsi %0, %3 : vector<256x1xi32>
    %c0_i32_0 = arith.constant 0 : i32
    %5 = vector.broadcast %c0_i32_0 : i32 to vector<256x1xi32>
    %6 = arith.cmpi ne, %4, %5 : vector<256x1xi32>
    %c0_i32_1 = arith.constant 0 : i32
    %7 = vector.broadcast %c0_i32_1 : i32 to vector<256x1xi32>
    %8 = arith.cmpi slt, %4, %7 : vector<256x1xi32>
    %c0_i32_2 = arith.constant 0 : i32
    %9 = arith.cmpi slt, %2, %c0_i32_2 : i32
    %10 = vector.broadcast %9 : i1 to vector<256x1xi1>
    %11 = vector.broadcast %10 : vector<256x1xi1> to vector<256x1xi1>
    %12 = arith.xori %8, %11 : vector<256x1xi1>
    %13 = arith.andi %12, %6 : vector<256x1xi1>
    %14 = vector.broadcast %2 : i32 to vector<256x1xi32>
    %15 = arith.addi %4, %14 : vector<256x1xi32>
    %16 = arith.select %13, %15, %4 : vector<256x1xi1>, vector<256x1xi32>
    %c0_i32_3 = arith.constant 0 : i32
    %17 = vector.broadcast %c0_i32_3 : i32 to vector<256x1xi32>
    %18 = arith.cmpi eq, %16, %17 : vector<256x1xi32>
    %c15_i32 = arith.constant 15 : i32
    %19 = vector.broadcast %c15_i32 : i32 to vector<256x1xi32>
    %20 = arith.cmpi eq, %16, %19 : vector<256x1xi32>
    %c16_i32_4 = arith.constant 16 : i32
    %21 = vector.broadcast %c16_i32_4 : i32 to vector<256x1xi32>
    %22 = arith.cmpi slt, %0, %21 : vector<256x1xi32>
    %c240_i32 = arith.constant 240 : i32
    %23 = vector.broadcast %c240_i32 : i32 to vector<256x1xi32>
    %24 = arith.cmpi sge, %0, %23 : vector<256x1xi32>
    %c0 = arith.constant 0 : index
    %c0_5 = arith.constant 0 : index
    %c0_6 = arith.constant 0 : index
    %c0_7 = arith.constant 0 : index
    %25 = vector.load %arg1[%c0, %c0_5, %c0_6, %c0_7] : memref<1x16x16x4xf32, #tpu.memory_space<vmem>>, vector<1x16x16x4xf32>
    %26 = vector.shape_cast %25 : vector<1x16x16x4xf32> to vector<16x16x4xf32>
    %27 = vector.shape_cast %26 : vector<16x16x4xf32> to vector<256x4xf32>
    %c1_i32_8 = arith.constant 1 : i32
    %28 = tpu.dynamic_rotate %27 by %c1_i32_8 dim 0 : vector<256x4xf32>, i32 -> vector<256x4xf32>
    %c255_i32 = arith.constant 255 : i32
    %29 = tpu.dynamic_rotate %27 by %c255_i32 dim 0 : vector<256x4xf32>, i32 -> vector<256x4xf32>
    %30 = vector.shape_cast %18 : vector<256x1xi1> to vector<256x1xi1>
    %31 = vector.broadcast %30 : vector<256x1xi1> to vector<256x4xi1>
    %32 = arith.select %31, %29, %28 : vector<256x4xi1>, vector<256x4xf32>
    %33 = vector.shape_cast %20 : vector<256x1xi1> to vector<256x1xi1>
    %34 = vector.broadcast %33 : vector<256x1xi1> to vector<256x4xi1>
    %35 = arith.select %34, %28, %29 : vector<256x4xi1>, vector<256x4xf32>
    %36 = arith.truncf %32 : vector<256x4xf32> to vector<256x4xbf16>
    %37 = arith.truncf %27 : vector<256x4xf32> to vector<256x4xbf16>
    %38 = arith.truncf %35 : vector<256x4xf32> to vector<256x4xbf16>
    %39 = tpu.concatenate %36, %37, %38 in 1 : vector<256x4xbf16>, vector<256x4xbf16>, vector<256x4xbf16> -> vector<256x12xbf16>
    %c0_9 = arith.constant 0 : index
    %c0_10 = arith.constant 0 : index
    %40 = vector.load %arg2[%c0_9, %c0_10] : memref<12x12xbf16, #tpu.memory_space<vmem>>, vector<12x12xbf16>
    %cst = arith.constant dense<0.000000e+00> : vector<256x12xf32>
    %41 = tpu.matmul %39, %40, %cst {dimension_numbers = #tpu.dot_dimension_numbers<[1], [0], [0], [1], [0, 0, 1, 1], [], []>} : vector<256x12xbf16>, vector<12x12xbf16>, vector<256x12xf32> -> vector<256x12xf32>
    %42 = vector.extract_strided_slice %41 {offsets = [0, 0], sizes = [256, 4], strides = [1, 1]} : vector<256x12xf32> to vector<256x4xf32>
    %43 = vector.extract_strided_slice %41 {offsets = [0, 4], sizes = [256, 4], strides = [1, 1]} : vector<256x12xf32> to vector<256x4xf32>
    %44 = vector.extract_strided_slice %41 {offsets = [0, 8], sizes = [256, 4], strides = [1, 1]} : vector<256x12xf32> to vector<256x4xf32>
    %c16_i32_11 = arith.constant 16 : i32
    %45 = tpu.dynamic_rotate %42 by %c16_i32_11 dim 0 : vector<256x4xf32>, i32 -> vector<256x4xf32>
    %c240_i32_12 = arith.constant 240 : i32
    %46 = tpu.dynamic_rotate %42 by %c240_i32_12 dim 0 : vector<256x4xf32>, i32 -> vector<256x4xf32>
    %c240_i32_13 = arith.constant 240 : i32
    %47 = tpu.dynamic_rotate %44 by %c240_i32_13 dim 0 : vector<256x4xf32>, i32 -> vector<256x4xf32>
    %c16_i32_14 = arith.constant 16 : i32
    %48 = tpu.dynamic_rotate %44 by %c16_i32_14 dim 0 : vector<256x4xf32>, i32 -> vector<256x4xf32>
    %49 = vector.shape_cast %22 : vector<256x1xi1> to vector<256x1xi1>
    %50 = vector.broadcast %49 : vector<256x1xi1> to vector<256x4xi1>
    %51 = arith.select %50, %46, %45 : vector<256x4xi1>, vector<256x4xf32>
    %52 = arith.addf %43, %51 : vector<256x4xf32>
    %53 = vector.shape_cast %24 : vector<256x1xi1> to vector<256x1xi1>
    %54 = vector.broadcast %53 : vector<256x1xi1> to vector<256x4xi1>
    %55 = arith.select %54, %48, %47 : vector<256x4xi1>, vector<256x4xf32>
    %56 = arith.addf %52, %55 : vector<256x4xf32>
    %cst_15 = arith.constant dense<0.000000e+00> : vector<4xf32>
    %57 = vector.multi_reduction <add>, %56, %cst_15 [0] : vector<256x4xf32> to vector<4xf32>
    %58 = vector.shape_cast %57 : vector<4xf32> to vector<1x4xf32>
    %cst_16 = arith.constant 3.906250e-03 : f32
    %59 = vector.broadcast %cst_16 : f32 to vector<1x4xf32>
    %60 = arith.mulf %58, %59 : vector<1x4xf32>
    %61 = arith.mulf %56, %56 : vector<256x4xf32>
    %cst_17 = arith.constant dense<0.000000e+00> : vector<4xf32>
    %62 = vector.multi_reduction <add>, %61, %cst_17 [0] : vector<256x4xf32> to vector<4xf32>
    %63 = vector.shape_cast %62 : vector<4xf32> to vector<1x4xf32>
    %cst_18 = arith.constant 3.906250e-03 : f32
    %64 = vector.broadcast %cst_18 : f32 to vector<1x4xf32>
    %65 = arith.mulf %63, %64 : vector<1x4xf32>
    %66 = arith.mulf %60, %60 : vector<1x4xf32>
    %67 = arith.subf %65, %66 : vector<1x4xf32>
    %cst_19 = arith.constant 0.000000e+00 : f32
    %68 = vector.broadcast %cst_19 : f32 to vector<1x4xf32>
    %69 = arith.maximumf %67, %68 : vector<1x4xf32>
    %70 = vector.broadcast %60 : vector<1x4xf32> to vector<256x4xf32>
    %71 = arith.subf %56, %70 : vector<256x4xf32>
    %cst_20 = arith.constant 9.99999974E-6 : f32
    %72 = vector.broadcast %cst_20 : f32 to vector<1x4xf32>
    %73 = arith.addf %69, %72 : vector<1x4xf32>
    %74 = math.rsqrt %73 : vector<1x4xf32>
    %75 = vector.broadcast %74 : vector<1x4xf32> to vector<256x4xf32>
    %76 = arith.mulf %71, %75 : vector<256x4xf32>
    %cst_21 = arith.constant 0.000000e+00 : f32
    %77 = vector.broadcast %cst_21 : f32 to vector<256x4xf32>
    %78 = arith.maximumf %76, %77 : vector<256x4xf32>
    %c1_i32_22 = arith.constant 1 : i32
    %79 = tpu.dynamic_rotate %78 by %c1_i32_22 dim 0 : vector<256x4xf32>, i32 -> vector<256x4xf32>
    %c255_i32_23 = arith.constant 255 : i32
    %80 = tpu.dynamic_rotate %78 by %c255_i32_23 dim 0 : vector<256x4xf32>, i32 -> vector<256x4xf32>
    %81 = vector.shape_cast %18 : vector<256x1xi1> to vector<256x1xi1>
    %82 = vector.broadcast %81 : vector<256x1xi1> to vector<256x4xi1>
    %83 = arith.select %82, %80, %79 : vector<256x4xi1>, vector<256x4xf32>
    %84 = vector.shape_cast %20 : vector<256x1xi1> to vector<256x1xi1>
    %85 = vector.broadcast %84 : vector<256x1xi1> to vector<256x4xi1>
    %86 = arith.select %85, %79, %80 : vector<256x4xi1>, vector<256x4xf32>
    %87 = arith.truncf %83 : vector<256x4xf32> to vector<256x4xbf16>
    %88 = arith.truncf %78 : vector<256x4xf32> to vector<256x4xbf16>
    %89 = arith.truncf %86 : vector<256x4xf32> to vector<256x4xbf16>
    %90 = tpu.concatenate %87, %88, %89 in 1 : vector<256x4xbf16>, vector<256x4xbf16>, vector<256x4xbf16> -> vector<256x12xbf16>
    %c0_24 = arith.constant 0 : index
    %c0_25 = arith.constant 0 : index
    %91 = vector.load %arg3[%c0_24, %c0_25] : memref<12x12xbf16, #tpu.memory_space<vmem>>, vector<12x12xbf16>
    %cst_26 = arith.constant dense<0.000000e+00> : vector<256x12xf32>
    %92 = tpu.matmul %90, %91, %cst_26 {dimension_numbers = #tpu.dot_dimension_numbers<[1], [0], [0], [1], [0, 0, 1, 1], [], []>} : vector<256x12xbf16>, vector<12x12xbf16>, vector<256x12xf32> -> vector<256x12xf32>
    %93 = vector.extract_strided_slice %92 {offsets = [0, 0], sizes = [256, 4], strides = [1, 1]} : vector<256x12xf32> to vector<256x4xf32>
    %94 = vector.extract_strided_slice %92 {offsets = [0, 4], sizes = [256, 4], strides = [1, 1]} : vector<256x12xf32> to vector<256x4xf32>
    %95 = vector.extract_strided_slice %92 {offsets = [0, 8], sizes = [256, 4], strides = [1, 1]} : vector<256x12xf32> to vector<256x4xf32>
    %c16_i32_27 = arith.constant 16 : i32
    %96 = tpu.dynamic_rotate %93 by %c16_i32_27 dim 0 : vector<256x4xf32>, i32 -> vector<256x4xf32>
    %c240_i32_28 = arith.constant 240 : i32
    %97 = tpu.dynamic_rotate %93 by %c240_i32_28 dim 0 : vector<256x4xf32>, i32 -> vector<256x4xf32>
    %c240_i32_29 = arith.constant 240 : i32
    %98 = tpu.dynamic_rotate %95 by %c240_i32_29 dim 0 : vector<256x4xf32>, i32 -> vector<256x4xf32>
    %c16_i32_30 = arith.constant 16 : i32
    %99 = tpu.dynamic_rotate %95 by %c16_i32_30 dim 0 : vector<256x4xf32>, i32 -> vector<256x4xf32>
    %100 = vector.shape_cast %22 : vector<256x1xi1> to vector<256x1xi1>
    %101 = vector.broadcast %100 : vector<256x1xi1> to vector<256x4xi1>
    %102 = arith.select %101, %97, %96 : vector<256x4xi1>, vector<256x4xf32>
    %103 = arith.addf %94, %102 : vector<256x4xf32>
    %104 = vector.shape_cast %24 : vector<256x1xi1> to vector<256x1xi1>
    %105 = vector.broadcast %104 : vector<256x1xi1> to vector<256x4xi1>
    %106 = arith.select %105, %99, %98 : vector<256x4xi1>, vector<256x4xf32>
    %107 = arith.addf %103, %106 : vector<256x4xf32>
    %cst_31 = arith.constant dense<0.000000e+00> : vector<4xf32>
    %108 = vector.multi_reduction <add>, %107, %cst_31 [0] : vector<256x4xf32> to vector<4xf32>
    %109 = vector.shape_cast %108 : vector<4xf32> to vector<1x4xf32>
    %cst_32 = arith.constant 3.906250e-03 : f32
    %110 = vector.broadcast %cst_32 : f32 to vector<1x4xf32>
    %111 = arith.mulf %109, %110 : vector<1x4xf32>
    %112 = arith.mulf %107, %107 : vector<256x4xf32>
    %cst_33 = arith.constant dense<0.000000e+00> : vector<4xf32>
    %113 = vector.multi_reduction <add>, %112, %cst_33 [0] : vector<256x4xf32> to vector<4xf32>
    %114 = vector.shape_cast %113 : vector<4xf32> to vector<1x4xf32>
    %cst_34 = arith.constant 3.906250e-03 : f32
    %115 = vector.broadcast %cst_34 : f32 to vector<1x4xf32>
    %116 = arith.mulf %114, %115 : vector<1x4xf32>
    %117 = arith.mulf %111, %111 : vector<1x4xf32>
    %118 = arith.subf %116, %117 : vector<1x4xf32>
    %cst_35 = arith.constant 0.000000e+00 : f32
    %119 = vector.broadcast %cst_35 : f32 to vector<1x4xf32>
    %120 = arith.maximumf %118, %119 : vector<1x4xf32>
    %121 = vector.broadcast %111 : vector<1x4xf32> to vector<256x4xf32>
    %122 = arith.subf %107, %121 : vector<256x4xf32>
    %cst_36 = arith.constant 9.99999974E-6 : f32
    %123 = vector.broadcast %cst_36 : f32 to vector<1x4xf32>
    %124 = arith.addf %120, %123 : vector<1x4xf32>
    %125 = math.rsqrt %124 : vector<1x4xf32>
    %126 = vector.broadcast %125 : vector<1x4xf32> to vector<256x4xf32>
    %127 = arith.mulf %122, %126 : vector<256x4xf32>
    %128 = arith.addf %127, %27 : vector<256x4xf32>
    %129 = vector.shape_cast %128 : vector<256x4xf32> to vector<16x16x4xf32>
    %c0_37 = arith.constant 0 : index
    %c0_38 = arith.constant 0 : index
    %c0_39 = arith.constant 0 : index
    %c0_40 = arith.constant 0 : index
    %130 = vector.load %arg4[%c0_37, %c0_38, %c0_39, %c0_40] : memref<1x16x16x4xf32, #tpu.memory_space<vmem>>, vector<1x16x16x4xf32>
    %131 = vector.shape_cast %130 : vector<1x16x16x4xf32> to vector<16x16x4xf32>
    %132 = vector.shape_cast %129 : vector<16x16x4xf32> to vector<1x16x16x4xf32>
    tpu.vector_store %arg4[%c0_37, %c0_38, %c0_39, %c0_40], %132 {strides = array<i32>} : memref<1x16x16x4xf32, #tpu.memory_space<vmem>>, vector<1x16x16x4xf32>,
    return
  }
  func.func @transform_0(%arg0: i32) -> (i32, i32, i32, i32) {
    %c0_i32 = arith.constant 0 : i32
    %c0_i32_0 = arith.constant 0 : i32
    %c0_i32_1 = arith.constant 0 : i32
    %c0_i32_2 = arith.constant 0 : i32
    return %arg0, %c0_i32, %c0_i32_0, %c0_i32_1 : i32, i32, i32, i32
  }
  func.func @transform_1(%arg0: i32) -> (i32, i32) {
    %c0_i32 = arith.constant 0 : i32
    %c0_i32_0 = arith.constant 0 : i32
    %c0_i32_1 = arith.constant 0 : i32
    return %c0_i32, %c0_i32_0 : i32, i32
  }
  func.func @transform_2(%arg0: i32) -> (i32, i32) {
    %c0_i32 = arith.constant 0 : i32
    %c0_i32_0 = arith.constant 0 : i32
    %c0_i32_1 = arith.constant 0 : i32
    return %c0_i32, %c0_i32_0 : i32, i32
  }
  func.func @transform_3(%arg0: i32) -> (i32, i32, i32, i32) {
    %c0_i32 = arith.constant 0 : i32
    %c0_i32_0 = arith.constant 0 : i32
    %c0_i32_1 = arith.constant 0 : i32
    %c0_i32_2 = arith.constant 0 : i32
    return %arg0, %c0_i32, %c0_i32_0, %c0_i32_1 : i32, i32, i32, i32
  }
}

</mosaic_0001>

<llo_original>
// kernel: tpu_custom_call.1
$region0: #{tpu_custom_call.1}
  #allocation0 [shape = 'u32[]', space=smem, size = 0x4, offset = 0x4, fixed_abs, tag = 'smem constant byte address 0x4 - core index']
  #allocation1 [shape = 'u32[72,128]{1,0:T(1,128)}', space=vmem, size = 0x9000, scoped, tag = 'internal scratch']
  %s0 = inlined_call_operand.vmem [shape: f32[2,16,16,4], index: 0, kind: input, shape index: {}]
  %s1 = inlined_call_operand.vmem [shape: bf16[12,12], index: 1, kind: input, shape index: {}]
  %s2 = inlined_call_operand.vmem [shape: bf16[12,12], index: 2, kind: input, shape index: {}]
  %s3 = inlined_call_operand.vmem [shape: f32[2,16,16,4], index: 3, kind: output, shape index: {}]
  %s4 = sld [smem:[#allocation0]]
  $region45: #{tpu_custom_call.1} parent=0
    _
  %s6 = ssub.s32 1, %s4
  %s7 = scalar_select 0, %s6, %s4
  loop: start=0, step=1, limit=4
  $region2: #{tpu_custom_call.1} parent=0 // loop_pre_header
    _
  $region3: #{tpu_custom_call.1} parent=0 // loop_header
    %s9 = sphi 0, %s13
    %p10 = scmp.ge.s32.totalorder %s9, 4
    %s19 = sphi 0, %s21
    %s22 = sphi 0, %s19
    %s23 = sphi 0, %s22
    %s39 = sphi 0, %s23
    %s43 = sphi 0, %s43
    %s45 = sphi 0, %s43
    %s46 = sphi 0, %s45
    %s60 = sphi 0, %s46
    %s64 = sphi 0, %s64
    %s66 = sphi 0, %s64
    %s67 = sphi 0, %s66
    %s81 = sphi 0, %s67
    %s87 = sphi 0, %s89
    %s90 = sphi 0, %s87
    %s91 = sphi 0, %s90
    %s107 = sphi 0, %s91
  $region4: #{tpu_custom_call.1} parent=0 // loop_header_branch
    %12 = sbr.rel (%p10) target = $region8
  $region5: #{tpu_custom_call.1} parent=0 // loop_body
    %s14 = ssub.s32 %s9, 1
    %s15 = ssub.s32 %s9, 2
    %s16 = sadd.s32 %s9, 1
    %s17 = ssub.s32 %s9, %s16
    %p18 = scmp.eq.s32.totalorder %s17, 0
    %s20 = sadd.s32 %s19, 1
    %s21 = scalar_select %p18, %s19, %s20
    %p24 = pneg %p18
    %p25 = scmp.eq.s32.totalorder %s9, 1
    %p26 = por %p24, %p25
    %p27 = scmp.ne.s32.totalorder %s19, %s22
    %p28 = scmp.eq.s32.totalorder %s9, 0
    %p29 = por %p27, %p28
    %p30 = scmp.ne.s32.totalorder %s19, %s22
    %p31 = scmp.eq.s32.totalorder %s14, 1
    %p32 = por %p30, %p31
    %p33 = scmp.ne.s32.totalorder %s22, %s23
    %p34 = scmp.eq.s32.totalorder %s14, 0
    %p35 = por %p33, %p34
    %p36 = scmp.ne.s32.totalorder %s22, %s23
    %p37 = scmp.eq.s32.totalorder %s15, 1
    %p38 = por %p36, %p37
    %p40 = scmp.ne.s32.totalorder %s23, %s39
    %p41 = scmp.eq.s32.totalorder %s15, 0
    %p42 = por %p40, %p41
    %s44 = sadd.s32 %s43, 1
    %p47 = scmp.eq.s32.totalorder %s9, 1
    %p48 = scmp.ne.s32.totalorder %s43, %s45
    %p49 = scmp.eq.s32.totalorder %s9, 0
    %p50 = por %p48, %p49
    %p51 = scmp.ne.s32.totalorder %s43, %s45
    %p52 = scmp.eq.s32.totalorder %s14, 1
    %p53 = por %p51, %p52
    %p54 = scmp.ne.s32.totalorder %s45, %s46
    %p55 = scmp.eq.s32.totalorder %s14, 0
    %p56 = por %p54, %p55
    %p57 = scmp.ne.s32.totalorder %s45, %s46
    %p58 = scmp.eq.s32.totalorder %s15, 1
    %p59 = por %p57, %p58
    %p61 = scmp.ne.s32.totalorder %s46, %s60
    %p62 = scmp.eq.s32.totalorder %s15, 0
    %p63 = por %p61, %p62
    %s65 = sadd.s32 %s64, 1
    %p68 = scmp.eq.s32.totalorder %s9, 1
    %p69 = scmp.ne.s32.totalorder %s64, %s66
    %p70 = scmp.eq.s32.totalorder %s9, 0
    %p71 = por %p69, %p70
    %p72 = scmp.ne.s32.totalorder %s64, %s66
    %p73 = scmp.eq.s32.totalorder %s14, 1
    %p74 = por %p72, %p73
    %p75 = scmp.ne.s32.totalorder %s66, %s67
    %p76 = scmp.eq.s32.totalorder %s14, 0
    %p77 = por %p75, %p76
    %p78 = scmp.ne.s32.totalorder %s66, %s67
    %p79 = scmp.eq.s32.totalorder %s15, 1
    %p80 = por %p78, %p79
    %p82 = scmp.ne.s32.totalorder %s67, %s81
    %p83 = scmp.eq.s32.totalorder %s15, 0
    %p84 = por %p82, %p83
    %s85 = ssub.s32 %s9, %s16
    %p86 = scmp.eq.s32.totalorder %s85, 0
    %s88 = sadd.s32 %s87, 1
    %s89 = scalar_select %p86, %s87, %s88
    %p92 = pneg %p86
    %p93 = scmp.eq.s32.totalorder %s9, 1
    %p94 = por %p92, %p93
    %p95 = scmp.ne.s32.totalorder %s87, %s90
    %p96 = scmp.eq.s32.totalorder %s9, 0
    %p97 = por %p95, %p96
    %p98 = scmp.ne.s32.totalorder %s87, %s90
    %p99 = scmp.eq.s32.totalorder %s14, 1
    %p100 = por %p98, %p99
    %p101 = scmp.ne.s32.totalorder %s90, %s91
    %p102 = scmp.eq.s32.totalorder %s14, 0
    %p103 = por %p101, %p102
    %p104 = scmp.ne.s32.totalorder %s90, %s91
    %p105 = scmp.eq.s32.totalorder %s15, 1
    %p106 = por %p104, %p105
    %p108 = scmp.ne.s32.totalorder %s91, %s107
    %p109 = scmp.eq.s32.totalorder %s15, 0
    %p110 = por %p108, %p109
    %p111 = scmp.le.s32.totalorder 1, %s9
    %p112 = scmp.lt.s32.totalorder %s9, 3
    %p113 = pnand %p111, %p112
    %p114 = pneg %p113
    // Predicated region
    $region9: #{tpu_custom_call.1} parent=5 // pred_check
      _
    $region10: #{tpu_custom_call.1} parent=5 // pred_check_branch
      %116 = sbr.rel (%p113) target = $region12
    $region11: #{tpu_custom_call.1} parent=5 // pred_region
      %s117 = ssub.s32 %s9, 1
      // Predicated region
      $region13: #{tpu_custom_call.1} parent=11 // pred_check
        %p118 = pneg %p56
      $region14: #{tpu_custom_call.1} parent=11 // pred_check_branch
        %120 = sbr.rel (%p118) target = $region16
      $region15: #{tpu_custom_call.1} parent=11 // pred_region
        _
      $region16: #{tpu_custom_call.1} parent=11 // pred_fallthru
        _
      // Predicated region
      $region17: #{tpu_custom_call.1} parent=11 // pred_check
        %p121 = pneg %p77
      $region18: #{tpu_custom_call.1} parent=11 // pred_check_branch
        %123 = sbr.rel (%p121) target = $region20
      $region19: #{tpu_custom_call.1} parent=11 // pred_region
        _
      $region20: #{tpu_custom_call.1} parent=11 // pred_fallthru
        _
    $region12: #{tpu_custom_call.1} parent=5 // pred_fallthru
      _
    %p124 = scmp.lt.s32.totalorder %s9, 2
    // Predicated region
    $region21: #{tpu_custom_call.1} parent=5 // pred_check
      %p125 = pneg %p124
    $region22: #{tpu_custom_call.1} parent=5 // pred_check_branch
      %127 = sbr.rel (%p125) target = $region24
    $region23: #{tpu_custom_call.1} parent=5 // pred_region
      // Predicated region
      $region25: #{tpu_custom_call.1} parent=23 // pred_check
        %p128 = pneg %p29
      $region26: #{tpu_custom_call.1} parent=23 // pred_check_branch
        %130 = sbr.rel (%p128) target = $region28
      $region27: #{tpu_custom_call.1} parent=23 // pred_region
        %p131 = scmp.lt.s32.totalorder %s9, 1
        %s132 = scalar_select %p131, %s9, 1
        %s133 = smul.addr %s132, 32
        %s134 = smul.addr %s133, 8
        %s135 = scalar_lea.vmem %s0, %s134
      $region28: #{tpu_custom_call.1} parent=23 // pred_fallthru
        _
    $region24: #{tpu_custom_call.1} parent=5 // pred_fallthru
      _
    %p136 = scmp.le.s32.totalorder 1, %s9
    %p137 = scmp.lt.s32.totalorder %s9, 3
    %p138 = pnand %p136, %p137
    %p139 = pneg %p138
    // Predicated region
    $region29: #{tpu_custom_call.1} parent=5 // pred_check
      _
    $region30: #{tpu_custom_call.1} parent=5 // pred_check_branch
      %141 = sbr.rel (%p138) target = $region32
    $region31: #{tpu_custom_call.1} parent=5 // pred_region
      %s142 = ssub.s32 %s9, 1
      %p143 = scmp.lt.s32.totalorder %s14, 1
      %s144 = scalar_select %p143, %s14, 1
      %s145 = smul.addr %s144, 32
      %s146 = smul.addr %s145, 8
      %s147 = scalar_lea.vmem %s0, %s146
      %p148 = pneg %p35
      %p149 = pneg %p32
      %p150 = pneg %p56
      %p151 = pneg %p53
      %p152 = pneg %p77
      %p153 = pneg %p74
      %p154 = pneg %p103
      %p155 = pneg %p100
      %p156 = scmp.lt.s32.totalorder %s14, 1
      %s157 = scalar_select %p156, %s14, 1
      %s158 = smul.addr %s157, 32
      %s159 = smul.addr %s158, 8
      %s160 = scalar_lea.vmem %s3, %s159
      %p161 = scmp.lt.s32.totalorder %s14, 1
      %s162 = scalar_select %p161, %s14, 1
      %s163 = smul.addr %s162, 32
      %s164 = smul.addr %s163, 8
      %s165 = scalar_lea.vmem %s0, %s164
      %p166 = scmp.lt.s32.totalorder %s14, 1
      %s167 = scalar_select %p166, %s14, 1
      %s168 = smul.addr %s167, 32
      %s169 = smul.addr %s168, 8
      %s170 = scalar_lea.vmem %s3, %s169
      %v172 = vlaneseq
      %v173 = vshrl.u32 %v172, 7
      %v174 = vadd.s32 %v173, 8
      %v175 = vadd.s32 %v173, 16
      %v176 = vadd.s32 %v173, 24
      %v177 = vadd.s32 %v173, 32
      %v178 = vadd.s32 %v173, 40
      %v179 = vadd.s32 %v173, 48
      %v180 = vadd.s32 %v173, 56
      %v181 = vadd.s32 %v173, 64
      %v182 = vadd.s32 %v173, 72
      %v183 = vadd.s32 %v173, 80
      %v184 = vadd.s32 %v173, 88
      %v185 = vadd.s32 %v173, 96
      %v186 = vadd.s32 %v173, 104
      %v187 = vadd.s32 %v173, 112
      %v188 = vadd.s32 %v173, 120
      %v189 = vadd.s32 %v173, 128
      %v190 = vadd.s32 %v173, 136
      %v191 = vadd.s32 %v173, 144
      %v192 = vadd.s32 %v173, 152
      %v193 = vadd.s32 %v173, 160
      %v194 = vadd.s32 %v173, 168
      %v195 = vadd.s32 %v173, 176
      %v196 = vadd.s32 %v173, 184
      %v197 = vadd.s32 %v173, 192
      %v198 = vadd.s32 %v173, 200
      %v199 = vadd.s32 %v173, 208
      %v200 = vadd.s32 %v173, 216
      %v201 = vadd.s32 %v173, 224
      %v202 = vadd.s32 %v173, 232
      %v203 = vadd.s32 %v173, 240
      %v204 = vadd.s32 %v173, 248
      %vm205 = vcmp.lt.s32.totalorder %v173, 0
      %v206 = vsub.s32 0, %v173
      %v207 = vsel %vm205, %v206, %v173
      %v208 = vshrl.u32 %v207, 4
      %v209 = vand.u32 %v207, 15
      %v210 = vsub.s32 0, %v209
      %v211 = vsel %vm205, %v210, %v209
      %vm212 = vcmp.lt.s32.totalorder %v174, 0
      %v213 = vsub.s32 0, %v174
      %v214 = vsel %vm212, %v213, %v174
      %v215 = vshrl.u32 %v214, 4
      %v216 = vand.u32 %v214, 15
      %v217 = vsub.s32 0, %v216
      %v218 = vsel %vm212, %v217, %v216
      %vm219 = vcmp.lt.s32.totalorder %v175, 0
      %v220 = vsub.s32 0, %v175
      %v221 = vsel %vm219, %v220, %v175
      %v222 = vshrl.u32 %v221, 4
      %v223 = vand.u32 %v221, 15
      %v224 = vsub.s32 0, %v223
      %v225 = vsel %vm219, %v224, %v223
      %vm226 = vcmp.lt.s32.totalorder %v176, 0
      %v227 = vsub.s32 0, %v176
      %v228 = vsel %vm226, %v227, %v176
      %v229 = vshrl.u32 %v228, 4
      %v230 = vand.u32 %v228, 15
      %v231 = vsub.s32 0, %v230
      %v232 = vsel %vm226, %v231, %v230
      %vm233 = vcmp.lt.s32.totalorder %v177, 0
      %v234 = vsub.s32 0, %v177
      %v235 = vsel %vm233, %v234, %v177
      %v236 = vshrl.u32 %v235, 4
      %v237 = vand.u32 %v235, 15
      %v238 = vsub.s32 0, %v237
      %v239 = vsel %vm233, %v238, %v237
      %vm240 = vcmp.lt.s32.totalorder %v178, 0
      %v241 = vsub.s32 0, %v178
      %v242 = vsel %vm240, %v241, %v178
      %v243 = vshrl.u32 %v242, 4
      %v244 = vand.u32 %v242, 15
      %v245 = vsub.s32 0, %v244
      %v246 = vsel %vm240, %v245, %v244
      %vm247 = vcmp.lt.s32.totalorder %v179, 0
      %v248 = vsub.s32 0, %v179
      %v249 = vsel %vm247, %v248, %v179
      %v250 = vshrl.u32 %v249, 4
      %v251 = vand.u32 %v249, 15
      %v252 = vsub.s32 0, %v251
      %v253 = vsel %vm247, %v252, %v251
      %vm254 = vcmp.lt.s32.totalorder %v180, 0
      %v255 = vsub.s32 0, %v180
      %v256 = vsel %vm254, %v255, %v180
      %v257 = vshrl.u32 %v256, 4
      %v258 = vand.u32 %v256, 15
      %v259 = vsub.s32 0, %v258
      %v260 = vsel %vm254, %v259, %v258
      %vm261 = vcmp.lt.s32.totalorder %v181, 0
      %v262 = vsub.s32 0, %v181
      %v263 = vsel %vm261, %v262, %v181
      %v264 = vshrl.u32 %v263, 4
      %v265 = vand.u32 %v263, 15
      %v266 = vsub.s32 0, %v265
      %v267 = vsel %vm261, %v266, %v265
      %vm268 = vcmp.lt.s32.totalorder %v182, 0
      %v269 = vsub.s32 0, %v182
      %v270 = vsel %vm268, %v269, %v182
      %v271 = vshrl.u32 %v270, 4
      %v272 = vand.u32 %v270, 15
      %v273 = vsub.s32 0, %v272
      %v274 = vsel %vm268, %v273, %v272
      %vm275 = vcmp.lt.s32.totalorder %v183, 0
      %v276 = vsub.s32 0, %v183
      %v277 = vsel %vm275, %v276, %v183
      %v278 = vshrl.u32 %v277, 4
      %v279 = vand.u32 %v277, 15
      %v280 = vsub.s32 0, %v279
      %v281 = vsel %vm275, %v280, %v279
      %vm282 = vcmp.lt.s32.totalorder %v184, 0
      %v283 = vsub.s32 0, %v184
      %v284 = vsel %vm282, %v283, %v184
      %v285 = vshrl.u32 %v284, 4
      %v286 = vand.u32 %v284, 15
      %v287 = vsub.s32 0, %v286
      %v288 = vsel %vm282, %v287, %v286
      %vm289 = vcmp.lt.s32.totalorder %v185, 0
      %v290 = vsub.s32 0, %v185
      %v291 = vsel %vm289, %v290, %v185
      %v292 = vshrl.u32 %v291, 4
      %v293 = vand.u32 %v291, 15
      %v294 = vsub.s32 0, %v293
      %v295 = vsel %vm289, %v294, %v293
      %vm296 = vcmp.lt.s32.totalorder %v186, 0
      %v297 = vsub.s32 0, %v186
      %v298 = vsel %vm296, %v297, %v186
      %v299 = vshrl.u32 %v298, 4
      %v300 = vand.u32 %v298, 15
      %v301 = vsub.s32 0, %v300
      %v302 = vsel %vm296, %v301, %v300
      %vm303 = vcmp.lt.s32.totalorder %v187, 0
      %v304 = vsub.s32 0, %v187
      %v305 = vsel %vm303, %v304, %v187
      %v306 = vshrl.u32 %v305, 4
      %v307 = vand.u32 %v305, 15
      %v308 = vsub.s32 0, %v307
      %v309 = vsel %vm303, %v308, %v307
      %vm310 = vcmp.lt.s32.totalorder %v188, 0
      %v311 = vsub.s32 0, %v188
      %v312 = vsel %vm310, %v311, %v188
      %v313 = vshrl.u32 %v312, 4
      %v314 = vand.u32 %v312, 15
      %v315 = vsub.s32 0, %v314
      %v316 = vsel %vm310, %v315, %v314
      %vm317 = vcmp.lt.s32.totalorder %v189, 0
      %v318 = vsub.s32 0, %v189
      %v319 = vsel %vm317, %v318, %v189
      %v320 = vshrl.u32 %v319, 4
      %v321 = vand.u32 %v319, 15
      %v322 = vsub.s32 0, %v321
      %v323 = vsel %vm317, %v322, %v321
      %vm324 = vcmp.lt.s32.totalorder %v190, 0
      %v325 = vsub.s32 0, %v190
      %v326 = vsel %vm324, %v325, %v190
      %v327 = vshrl.u32 %v326, 4
      %v328 = vand.u32 %v326, 15
      %v329 = vsub.s32 0, %v328
      %v330 = vsel %vm324, %v329, %v328
      %vm331 = vcmp.lt.s32.totalorder %v191, 0
      %v332 = vsub.s32 0, %v191
      %v333 = vsel %vm331, %v332, %v191
      %v334 = vshrl.u32 %v333, 4
      %v335 = vand.u32 %v333, 15
      %v336 = vsub.s32 0, %v335
      %v337 = vsel %vm331, %v336, %v335
      %vm338 = vcmp.lt.s32.totalorder %v192, 0
      %v339 = vsub.s32 0, %v192
      %v340 = vsel %vm338, %v339, %v192
      %v341 = vshrl.u32 %v340, 4
      %v342 = vand.u32 %v340, 15
      %v343 = vsub.s32 0, %v342
      %v344 = vsel %vm338, %v343, %v342
      %vm345 = vcmp.lt.s32.totalorder %v193, 0
      %v346 = vsub.s32 0, %v193
      %v347 = vsel %vm345, %v346, %v193
      %v348 = vshrl.u32 %v347, 4
      %v349 = vand.u32 %v347, 15
      %v350 = vsub.s32 0, %v349
      %v351 = vsel %vm345, %v350, %v349
      %vm352 = vcmp.lt.s32.totalorder %v194, 0
      %v353 = vsub.s32 0, %v194
      %v354 = vsel %vm352, %v353, %v194
      %v355 = vshrl.u32 %v354, 4
      %v356 = vand.u32 %v354, 15
      %v357 = vsub.s32 0, %v356
      %v358 = vsel %vm352, %v357, %v356
      %vm359 = vcmp.lt.s32.totalorder %v195, 0
      %v360 = vsub.s32 0, %v195
      %v361 = vsel %vm359, %v360, %v195
      %v362 = vshrl.u32 %v361, 4
      %v363 = vand.u32 %v361, 15
      %v364 = vsub.s32 0, %v363
      %v365 = vsel %vm359, %v364, %v363
      %vm366 = vcmp.lt.s32.totalorder %v196, 0
      %v367 = vsub.s32 0, %v196
      %v368 = vsel %vm366, %v367, %v196
      %v369 = vshrl.u32 %v368, 4
      %v370 = vand.u32 %v368, 15
      %v371 = vsub.s32 0, %v370
      %v372 = vsel %vm366, %v371, %v370
      %vm373 = vcmp.lt.s32.totalorder %v197, 0
      %v374 = vsub.s32 0, %v197
      %v375 = vsel %vm373, %v374, %v197
      %v376 = vshrl.u32 %v375, 4
      %v377 = vand.u32 %v375, 15
      %v378 = vsub.s32 0, %v377
      %v379 = vsel %vm373, %v378, %v377
      %vm380 = vcmp.lt.s32.totalorder %v198, 0
      %v381 = vsub.s32 0, %v198
      %v382 = vsel %vm380, %v381, %v198
      %v383 = vshrl.u32 %v382, 4
      %v384 = vand.u32 %v382, 15
      %v385 = vsub.s32 0, %v384
      %v386 = vsel %vm380, %v385, %v384
      %vm387 = vcmp.lt.s32.totalorder %v199, 0
      %v388 = vsub.s32 0, %v199
      %v389 = vsel %vm387, %v388, %v199
      %v390 = vshrl.u32 %v389, 4
      %v391 = vand.u32 %v389, 15
      %v392 = vsub.s32 0, %v391
      %v393 = vsel %vm387, %v392, %v391
      %vm394 = vcmp.lt.s32.totalorder %v200, 0
      %v395 = vsub.s32 0, %v200
      %v396 = vsel %vm394, %v395, %v200
      %v397 = vshrl.u32 %v396, 4
      %v398 = vand.u32 %v396, 15
      %v399 = vsub.s32 0, %v398
      %v400 = vsel %vm394, %v399, %v398
      %vm401 = vcmp.lt.s32.totalorder %v201, 0
      %v402 = vsub.s32 0, %v201
      %v403 = vsel %vm401, %v402, %v201
      %v404 = vshrl.u32 %v403, 4
      %v405 = vand.u32 %v403, 15
      %v406 = vsub.s32 0, %v405
      %v407 = vsel %vm401, %v406, %v405
      %vm408 = vcmp.lt.s32.totalorder %v202, 0
      %v409 = vsub.s32 0, %v202
      %v410 = vsel %vm408, %v409, %v202
      %v411 = vshrl.u32 %v410, 4
      %v412 = vand.u32 %v410, 15
      %v413 = vsub.s32 0, %v412
      %v414 = vsel %vm408, %v413, %v412
      %vm415 = vcmp.lt.s32.totalorder %v203, 0
      %v416 = vsub.s32 0, %v203
      %v417 = vsel %vm415, %v416, %v203
      %v418 = vshrl.u32 %v417, 4
      %v419 = vand.u32 %v417, 15
      %v420 = vsub.s32 0, %v419
      %v421 = vsel %vm415, %v420, %v419
      %vm422 = vcmp.lt.s32.totalorder %v204, 0
      %v423 = vsub.s32 0, %v204
      %v424 = vsel %vm422, %v423, %v204
      %v425 = vshrl.u32 %v424, 4
      %v426 = vand.u32 %v424, 15
      %v427 = vsub.s32 0, %v426
      %v428 = vsel %vm422, %v427, %v426
      %vm429 = vcmp.ne.s32.totalorder %v211, 0
      %vm430 = vcmp.ne.s32.totalorder %v218, 0
      %vm431 = vcmp.ne.s32.totalorder %v225, 0
      %vm432 = vcmp.ne.s32.totalorder %v232, 0
      %vm433 = vcmp.ne.s32.totalorder %v239, 0
      %vm434 = vcmp.ne.s32.totalorder %v246, 0
      %vm435 = vcmp.ne.s32.totalorder %v253, 0
      %vm436 = vcmp.ne.s32.totalorder %v260, 0
      %vm437 = vcmp.ne.s32.totalorder %v267, 0
      %vm438 = vcmp.ne.s32.totalorder %v274, 0
      %vm439 = vcmp.ne.s32.totalorder %v281, 0
      %vm440 = vcmp.ne.s32.totalorder %v288, 0
      %vm441 = vcmp.ne.s32.totalorder %v295, 0
      %vm442 = vcmp.ne.s32.totalorder %v302, 0
      %vm443 = vcmp.ne.s32.totalorder %v309, 0
      %vm444 = vcmp.ne.s32.totalorder %v316, 0
      %vm445 = vcmp.ne.s32.totalorder %v323, 0
      %vm446 = vcmp.ne.s32.totalorder %v330, 0
      %vm447 = vcmp.ne.s32.totalorder %v337, 0
      %vm448 = vcmp.ne.s32.totalorder %v344, 0
      %vm449 = vcmp.ne.s32.totalorder %v351, 0
      %vm450 = vcmp.ne.s32.totalorder %v358, 0
      %vm451 = vcmp.ne.s32.totalorder %v365, 0
      %vm452 = vcmp.ne.s32.totalorder %v372, 0
      %vm453 = vcmp.ne.s32.totalorder %v379, 0
      %vm454 = vcmp.ne.s32.totalorder %v386, 0
      %vm455 = vcmp.ne.s32.totalorder %v393, 0
      %vm456 = vcmp.ne.s32.totalorder %v400, 0
      %vm457 = vcmp.ne.s32.totalorder %v407, 0
      %vm458 = vcmp.ne.s32.totalorder %v414, 0
      %vm459 = vcmp.ne.s32.totalorder %v421, 0
      %vm460 = vcmp.ne.s32.totalorder %v428, 0
      %vm461 = vcmp.lt.s32.totalorder %v211, 0
      %vm462 = vcmp.lt.s32.totalorder %v218, 0
      %vm463 = vcmp.lt.s32.totalorder %v225, 0
      %vm464 = vcmp.lt.s32.totalorder %v232, 0
      %vm465 = vcmp.lt.s32.totalorder %v239, 0
      %vm466 = vcmp.lt.s32.totalorder %v246, 0
      %vm467 = vcmp.lt.s32.totalorder %v253, 0
      %vm468 = vcmp.lt.s32.totalorder %v260, 0
      %vm469 = vcmp.lt.s32.totalorder %v267, 0
      %vm470 = vcmp.lt.s32.totalorder %v274, 0
      %vm471 = vcmp.lt.s32.totalorder %v281, 0
      %vm472 = vcmp.lt.s32.totalorder %v288, 0
      %vm473 = vcmp.lt.s32.totalorder %v295, 0
      %vm474 = vcmp.lt.s32.totalorder %v302, 0
      %vm475 = vcmp.lt.s32.totalorder %v309, 0
      %vm476 = vcmp.lt.s32.totalorder %v316, 0
      %vm477 = vcmp.lt.s32.totalorder %v323, 0
      %vm478 = vcmp.lt.s32.totalorder %v330, 0
      %vm479 = vcmp.lt.s32.totalorder %v337, 0
      %vm480 = vcmp.lt.s32.totalorder %v344, 0
      %vm481 = vcmp.lt.s32.totalorder %v351, 0
      %vm482 = vcmp.lt.s32.totalorder %v358, 0
      %vm483 = vcmp.lt.s32.totalorder %v365, 0
      %vm484 = vcmp.lt.s32.totalorder %v372, 0
      %vm485 = vcmp.lt.s32.totalorder %v379, 0
      %vm486 = vcmp.lt.s32.totalorder %v386, 0
      %vm487 = vcmp.lt.s32.totalorder %v393, 0
      %vm488 = vcmp.lt.s32.totalorder %v400, 0
      %vm489 = vcmp.lt.s32.totalorder %v407, 0
      %vm490 = vcmp.lt.s32.totalorder %v414, 0
      %vm491 = vcmp.lt.s32.totalorder %v421, 0
      %vm492 = vcmp.lt.s32.totalorder %v428, 0
      %vm493 = vmand %vm461, %vm429
      %vm494 = vmand %vm462, %vm430
      %vm495 = vmand %vm463, %vm431
      %vm496 = vmand %vm464, %vm432
      %vm497 = vmand %vm465, %vm433
      %vm498 = vmand %vm466, %vm434
      %vm499 = vmand %vm467, %vm435
      %vm500 = vmand %vm468, %vm436
      %vm501 = vmand %vm469, %vm437
      %vm502 = vmand %vm470, %vm438
      %vm503 = vmand %vm471, %vm439
      %vm504 = vmand %vm472, %vm440
      %vm505 = vmand %vm473, %vm441
      %vm506 = vmand %vm474, %vm442
      %vm507 = vmand %vm475, %vm443
      %vm508 = vmand %vm476, %vm444
      %vm509 = vmand %vm477, %vm445
      %vm510 = vmand %vm478, %vm446
      %vm511 = vmand %vm479, %vm447
      %vm512 = vmand %vm480, %vm448
      %vm513 = vmand %vm481, %vm449
      %vm514 = vmand %vm482, %vm450
      %vm515 = vmand %vm483, %vm451
      %vm516 = vmand %vm484, %vm452
      %vm517 = vmand %vm485, %vm453
      %vm518 = vmand %vm486, %vm454
      %vm519 = vmand %vm487, %vm455
      %vm520 = vmand %vm488, %vm456
      %vm521 = vmand %vm489, %vm457
      %vm522 = vmand %vm490, %vm458
      %vm523 = vmand %vm491, %vm459
      %vm524 = vmand %vm492, %vm460
      %v525 = vadd.s32 %v211, 16
      %v526 = vadd.s32 %v218, 16
      %v527 = vadd.s32 %v225, 16
      %v528 = vadd.s32 %v232, 16
      %v529 = vadd.s32 %v239, 16
      %v530 = vadd.s32 %v246, 16
      %v531 = vadd.s32 %v253, 16
      %v532 = vadd.s32 %v260, 16
      %v533 = vadd.s32 %v267, 16
      %v534 = vadd.s32 %v274, 16
      %v535 = vadd.s32 %v281, 16
      %v536 = vadd.s32 %v288, 16
      %v537 = vadd.s32 %v295, 16
      %v538 = vadd.s32 %v302, 16
      %v539 = vadd.s32 %v309, 16
      %v540 = vadd.s32 %v316, 16
      %v541 = vadd.s32 %v323, 16
      %v542 = vadd.s32 %v330, 16
      %v543 = vadd.s32 %v337, 16
      %v544 = vadd.s32 %v344, 16
      %v545 = vadd.s32 %v351, 16
      %v546 = vadd.s32 %v358, 16
      %v547 = vadd.s32 %v365, 16
      %v548 = vadd.s32 %v372, 16
      %v549 = vadd.s32 %v379, 16
      %v550 = vadd.s32 %v386, 16
      %v551 = vadd.s32 %v393, 16
      %v552 = vadd.s32 %v400, 16
      %v553 = vadd.s32 %v407, 16
      %v554 = vadd.s32 %v414, 16
      %v555 = vadd.s32 %v421, 16
      %v556 = vadd.s32 %v428, 16
      %v557 = vsel %vm493, %v525, %v211
      %v558 = vsel %vm494, %v526, %v218
      %v559 = vsel %vm495, %v527, %v225
      %v560 = vsel %vm496, %v528, %v232
      %v561 = vsel %vm497, %v529, %v239
      %v562 = vsel %vm498, %v530, %v246
      %v563 = vsel %vm499, %v531, %v253
      %v564 = vsel %vm500, %v532, %v260
      %v565 = vsel %vm501, %v533, %v267
      %v566 = vsel %vm502, %v534, %v274
      %v567 = vsel %vm503, %v535, %v281
      %v568 = vsel %vm504, %v536, %v288
      %v569 = vsel %vm505, %v537, %v295
      %v570 = vsel %vm506, %v538, %v302
      %v571 = vsel %vm507, %v539, %v309
      %v572 = vsel %vm508, %v540, %v316
      %v573 = vsel %vm509, %v541, %v323
      %v574 = vsel %vm510, %v542, %v330
      %v575 = vsel %vm511, %v543, %v337
      %v576 = vsel %vm512, %v544, %v344
      %v577 = vsel %vm513, %v545, %v351
      %v578 = vsel %vm514, %v546, %v358
      %v579 = vsel %vm515, %v547, %v365
      %v580 = vsel %vm516, %v548, %v372
      %v581 = vsel %vm517, %v549, %v379
      %v582 = vsel %vm518, %v550, %v386
      %v583 = vsel %vm519, %v551, %v393
      %v584 = vsel %vm520, %v552, %v400
      %v585 = vsel %vm521, %v553, %v407
      %v586 = vsel %vm522, %v554, %v414
      %v587 = vsel %vm523, %v555, %v421
      %v588 = vsel %vm524, %v556, %v428
      %vm589 = vcmp.eq.s32.totalorder %v557, 0
      %vm590 = vcmp.eq.s32.totalorder %v558, 0
      %vm591 = vcmp.eq.s32.totalorder %v559, 0
      %vm592 = vcmp.eq.s32.totalorder %v560, 0
      %vm593 = vcmp.eq.s32.totalorder %v561, 0
      %vm594 = vcmp.eq.s32.totalorder %v562, 0
      %vm595 = vcmp.eq.s32.totalorder %v563, 0
      %vm596 = vcmp.eq.s32.totalorder %v564, 0
      %vm597 = vcmp.eq.s32.totalorder %v565, 0
      %vm598 = vcmp.eq.s32.totalorder %v566, 0
      %vm599 = vcmp.eq.s32.totalorder %v567, 0
      %vm600 = vcmp.eq.s32.totalorder %v568, 0
      %vm601 = vcmp.eq.s32.totalorder %v569, 0
      %vm602 = vcmp.eq.s32.totalorder %v570, 0
      %vm603 = vcmp.eq.s32.totalorder %v571, 0
      %vm604 = vcmp.eq.s32.totalorder %v572, 0
      %vm605 = vcmp.eq.s32.totalorder %v573, 0
      %vm606 = vcmp.eq.s32.totalorder %v574, 0
      %vm607 = vcmp.eq.s32.totalorder %v575, 0
      %vm608 = vcmp.eq.s32.totalorder %v576, 0
      %vm609 = vcmp.eq.s32.totalorder %v577, 0
      %vm610 = vcmp.eq.s32.totalorder %v578, 0
      %vm611 = vcmp.eq.s32.totalorder %v579, 0
      %vm612 = vcmp.eq.s32.totalorder %v580, 0
      %vm613 = vcmp.eq.s32.totalorder %v581, 0
      %vm614 = vcmp.eq.s32.totalorder %v582, 0
      %vm615 = vcmp.eq.s32.totalorder %v583, 0
      %vm616 = vcmp.eq.s32.totalorder %v584, 0
      %vm617 = vcmp.eq.s32.totalorder %v585, 0
      %vm618 = vcmp.eq.s32.totalorder %v586, 0
      %vm619 = vcmp.eq.s32.totalorder %v587, 0
      %vm620 = vcmp.eq.s32.totalorder %v588, 0
      %vm621 = vcmp.eq.s32.totalorder %v557, 15
      %vm622 = vcmp.eq.s32.totalorder %v558, 15
      %vm623 = vcmp.eq.s32.totalorder %v559, 15
      %vm624 = vcmp.eq.s32.totalorder %v560, 15
      %vm625 = vcmp.eq.s32.totalorder %v561, 15
      %vm626 = vcmp.eq.s32.totalorder %v562, 15
      %vm627 = vcmp.eq.s32.totalorder %v563, 15
      %vm628 = vcmp.eq.s32.totalorder %v564, 15
      %vm629 = vcmp.eq.s32.totalorder %v565, 15
      %vm630 = vcmp.eq.s32.totalorder %v566, 15
      %vm631 = vcmp.eq.s32.totalorder %v567, 15
      %vm632 = vcmp.eq.s32.totalorder %v568, 15
      %vm633 = vcmp.eq.s32.totalorder %v569, 15
      %vm634 = vcmp.eq.s32.totalorder %v570, 15
      %vm635 = vcmp.eq.s32.totalorder %v571, 15
      %vm636 = vcmp.eq.s32.totalorder %v572, 15
      %vm637 = vcmp.eq.s32.totalorder %v573, 15
      %vm638 = vcmp.eq.s32.totalorder %v574, 15
      %vm639 = vcmp.eq.s32.totalorder %v575, 15
      %vm640 = vcmp.eq.s32.totalorder %v576, 15
      %vm641 = vcmp.eq.s32.totalorder %v577, 15
      %vm642 = vcmp.eq.s32.totalorder %v578, 15
      %vm643 = vcmp.eq.s32.totalorder %v579, 15
      %vm644 = vcmp.eq.s32.totalorder %v580, 15
      %vm645 = vcmp.eq.s32.totalorder %v581, 15
      %vm646 = vcmp.eq.s32.totalorder %v582, 15
      %vm647 = vcmp.eq.s32.totalorder %v583, 15
      %vm648 = vcmp.eq.s32.totalorder %v584, 15
      %vm649 = vcmp.eq.s32.totalorder %v585, 15
      %vm650 = vcmp.eq.s32.totalorder %v586, 15
      %vm651 = vcmp.eq.s32.totalorder %v587, 15
      %vm652 = vcmp.eq.s32.totalorder %v588, 15
      %vm653 = vcmp.lt.s32.totalorder %v173, 16
      %vm654 = vcmp.lt.s32.totalorder %v174, 16
      %vm655 = vcmp.lt.s32.totalorder %v175, 16
      %vm656 = vcmp.lt.s32.totalorder %v176, 16
      %vm657 = vcmp.lt.s32.totalorder %v177, 16
      %vm658 = vcmp.lt.s32.totalorder %v178, 16
      %vm659 = vcmp.lt.s32.totalorder %v179, 16
      %vm660 = vcmp.lt.s32.totalorder %v180, 16
      %vm661 = vcmp.lt.s32.totalorder %v181, 16
      %vm662 = vcmp.lt.s32.totalorder %v182, 16
      %vm663 = vcmp.lt.s32.totalorder %v183, 16
      %vm664 = vcmp.lt.s32.totalorder %v184, 16
      %vm665 = vcmp.lt.s32.totalorder %v185, 16
      %vm666 = vcmp.lt.s32.totalorder %v186, 16
      %vm667 = vcmp.lt.s32.totalorder %v187, 16
      %vm668 = vcmp.lt.s32.totalorder %v188, 16
      %vm669 = vcmp.lt.s32.totalorder %v189, 16
      %vm670 = vcmp.lt.s32.totalorder %v190, 16
      %vm671 = vcmp.lt.s32.totalorder %v191, 16
      %vm672 = vcmp.lt.s32.totalorder %v192, 16
      %vm673 = vcmp.lt.s32.totalorder %v193, 16
      %vm674 = vcmp.lt.s32.totalorder %v194, 16
      %vm675 = vcmp.lt.s32.totalorder %v195, 16
      %vm676 = vcmp.lt.s32.totalorder %v196, 16
      %vm677 = vcmp.lt.s32.totalorder %v197, 16
      %vm678 = vcmp.lt.s32.totalorder %v198, 16
      %vm679 = vcmp.lt.s32.totalorder %v199, 16
      %vm680 = vcmp.lt.s32.totalorder %v200, 16
      %vm681 = vcmp.lt.s32.totalorder %v201, 16
      %vm682 = vcmp.lt.s32.totalorder %v202, 16
      %vm683 = vcmp.lt.s32.totalorder %v203, 16
      %vm684 = vcmp.lt.s32.totalorder %v204, 16
      %vm685 = vcmp.ge.s32.totalorder %v173, 240
      %vm686 = vcmp.ge.s32.totalorder %v174, 240
      %vm687 = vcmp.ge.s32.totalorder %v175, 240
      %vm688 = vcmp.ge.s32.totalorder %v176, 240
      %vm689 = vcmp.ge.s32.totalorder %v177, 240
      %vm690 = vcmp.ge.s32.totalorder %v178, 240
      %vm691 = vcmp.ge.s32.totalorder %v179, 240
      %vm692 = vcmp.ge.s32.totalorder %v180, 240
      %vm693 = vcmp.ge.s32.totalorder %v181, 240
      %vm694 = vcmp.ge.s32.totalorder %v182, 240
      %vm695 = vcmp.ge.s32.totalorder %v183, 240
      %vm696 = vcmp.ge.s32.totalorder %v184, 240
      %vm697 = vcmp.ge.s32.totalorder %v185, 240
      %vm698 = vcmp.ge.s32.totalorder %v186, 240
      %vm699 = vcmp.ge.s32.totalorder %v187, 240
      %vm700 = vcmp.ge.s32.totalorder %v188, 240
      %vm701 = vcmp.ge.s32.totalorder %v189, 240
      %vm702 = vcmp.ge.s32.totalorder %v190, 240
      %vm703 = vcmp.ge.s32.totalorder %v191, 240
      %vm704 = vcmp.ge.s32.totalorder %v192, 240
      %vm705 = vcmp.ge.s32.totalorder %v193, 240
      %vm706 = vcmp.ge.s32.totalorder %v194, 240
      %vm707 = vcmp.ge.s32.totalorder %v195, 240
      %vm708 = vcmp.ge.s32.totalorder %v196, 240
      %vm709 = vcmp.ge.s32.totalorder %v197, 240
      %vm710 = vcmp.ge.s32.totalorder %v198, 240
      %vm711 = vcmp.ge.s32.totalorder %v199, 240
      %vm712 = vcmp.ge.s32.totalorder %v200, 240
      %vm713 = vcmp.ge.s32.totalorder %v201, 240
      %vm714 = vcmp.ge.s32.totalorder %v202, 240
      %vm715 = vcmp.ge.s32.totalorder %v203, 240
      %vm716 = vcmp.ge.s32.totalorder %v204, 240
      %v717 = vld [vmem:[%s165] sm:$0xff]
      %v718 = vld [vmem:[%s165 + $0x8] sm:$0xff]
      %v719 = vld [vmem:[%s165 + $0x10] sm:$0xff]
      %v720 = vld [vmem:[%s165 + $0x18] sm:$0xff]
      %v721 = vld [vmem:[%s165 + $0x20] sm:$0xff]
      %v722 = vld [vmem:[%s165 + $0x28] sm:$0xff]
      %v723 = vld [vmem:[%s165 + $0x30] sm:$0xff]
      %v724 = vld [vmem:[%s165 + $0x38] sm:$0xff]
      %v725 = vld [vmem:[%s165 + $0x40] sm:$0xff]
      %v726 = vld [vmem:[%s165 + $0x48] sm:$0xff]
      %v727 = vld [vmem:[%s165 + $0x50] sm:$0xff]
      %v728 = vld [vmem:[%s165 + $0x58] sm:$0xff]
      %v729 = vld [vmem:[%s165 + $0x60] sm:$0xff]
      %v730 = vld [vmem:[%s165 + $0x68] sm:$0xff]
      %v731 = vld [vmem:[%s165 + $0x70] sm:$0xff]
      %v732 = vld [vmem:[%s165 + $0x78] sm:$0xff]
      %v733 = vld [vmem:[%s165 + $0x80] sm:$0xff]
      %v734 = vld [vmem:[%s165 + $0x88] sm:$0xff]
      %v735 = vld [vmem:[%s165 + $0x90] sm:$0xff]
      %v736 = vld [vmem:[%s165 + $0x98] sm:$0xff]
      %v737 = vld [vmem:[%s165 + $0xa0] sm:$0xff]
      %v738 = vld [vmem:[%s165 + $0xa8] sm:$0xff]
      %v739 = vld [vmem:[%s165 + $0xb0] sm:$0xff]
      %v740 = vld [vmem:[%s165 + $0xb8] sm:$0xff]
      %v741 = vld [vmem:[%s165 + $0xc0] sm:$0xff]
      %v742 = vld [vmem:[%s165 + $0xc8] sm:$0xff]
      %v743 = vld [vmem:[%s165 + $0xd0] sm:$0xff]
      %v744 = vld [vmem:[%s165 + $0xd8] sm:$0xff]
      %v745 = vld [vmem:[%s165 + $0xe0] sm:$0xff]
      %v746 = vld [vmem:[%s165 + $0xe8] sm:$0xff]
      %v747 = vld [vmem:[%s165 + $0xf0] sm:$0xff]
      %v748 = vld [vmem:[%s165 + $0xf8] sm:$0xff]
      %v749 = vrot.slane %v717, 7
      %v750 = vrot.slane %v718, 7
      %v751 = vrot.slane %v719, 7
      %v752 = vrot.slane %v720, 7
      %v753 = vrot.slane %v721, 7
      %v754 = vrot.slane %v722, 7
      %v755 = vrot.slane %v723, 7
      %v756 = vrot.slane %v724, 7
      %v757 = vrot.slane %v725, 7
      %v758 = vrot.slane %v726, 7
      %v759 = vrot.slane %v727, 7
      %v760 = vrot.slane %v728, 7
      %v761 = vrot.slane %v729, 7
      %v762 = vrot.slane %v730, 7
      %v763 = vrot.slane %v731, 7
      %v764 = vrot.slane %v732, 7
      %v765 = vrot.slane %v733, 7
      %v766 = vrot.slane %v734, 7
      %v767 = vrot.slane %v735, 7
      %v768 = vrot.slane %v736, 7
      %v769 = vrot.slane %v737, 7
      %v770 = vrot.slane %v738, 7
      %v771 = vrot.slane %v739, 7
      %v772 = vrot.slane %v740, 7
      %v773 = vrot.slane %v741, 7
      %v774 = vrot.slane %v742, 7
      %v775 = vrot.slane %v743, 7
      %v776 = vrot.slane %v744, 7
      %v777 = vrot.slane %v745, 7
      %v778 = vrot.slane %v746, 7
      %v779 = vrot.slane %v747, 7
      %v780 = vrot.slane %v748, 7
      %vm781 = vcmp.lt.s32.totalorder %v173, 1
      %v782 = vsel %vm781, %v779, %v780
      %v783 = vsel %vm781, %v778, %v779
      %v784 = vsel %vm781, %v777, %v778
      %v785 = vsel %vm781, %v776, %v777
      %v786 = vsel %vm781, %v775, %v776
      %v787 = vsel %vm781, %v774, %v775
      %v788 = vsel %vm781, %v773, %v774
      %v789 = vsel %vm781, %v772, %v773
      %v790 = vsel %vm781, %v771, %v772
      %v791 = vsel %vm781, %v770, %v771
      %v792 = vsel %vm781, %v769, %v770
      %v793 = vsel %vm781, %v768, %v769
      %v794 = vsel %vm781, %v767, %v768
      %v795 = vsel %vm781, %v766, %v767
      %v796 = vsel %vm781, %v765, %v766
      %v797 = vsel %vm781, %v764, %v765
      %v798 = vsel %vm781, %v763, %v764
      %v799 = vsel %vm781, %v762, %v763
      %v800 = vsel %vm781, %v761, %v762
      %v801 = vsel %vm781, %v760, %v761
      %v802 = vsel %vm781, %v759, %v760
      %v803 = vsel %vm781, %v758, %v759
      %v804 = vsel %vm781, %v757, %v758
      %v805 = vsel %vm781, %v756, %v757
      %v806 = vsel %vm781, %v755, %v756
      %v807 = vsel %vm781, %v754, %v755
      %v808 = vsel %vm781, %v753, %v754
      %v809 = vsel %vm781, %v752, %v753
      %v810 = vsel %vm781, %v751, %v752
      %v811 = vsel %vm781, %v750, %v751
      %v812 = vsel %vm781, %v749, %v750
      %v813 = vsel %vm781, %v780, %v749
      %v814 = vrot.slane %v717, 1
      %v815 = vrot.slane %v718, 1
      %v816 = vrot.slane %v719, 1
      %v817 = vrot.slane %v720, 1
      %v818 = vrot.slane %v721, 1
      %v819 = vrot.slane %v722, 1
      %v820 = vrot.slane %v723, 1
      %v821 = vrot.slane %v724, 1
      %v822 = vrot.slane %v725, 1
      %v823 = vrot.slane %v726, 1
      %v824 = vrot.slane %v727, 1
      %v825 = vrot.slane %v728, 1
      %v826 = vrot.slane %v729, 1
      %v827 = vrot.slane %v730, 1
      %v828 = vrot.slane %v731, 1
      %v829 = vrot.slane %v732, 1
      %v830 = vrot.slane %v733, 1
      %v831 = vrot.slane %v734, 1
      %v832 = vrot.slane %v735, 1
      %v833 = vrot.slane %v736, 1
      %v834 = vrot.slane %v737, 1
      %v835 = vrot.slane %v738, 1
      %v836 = vrot.slane %v739, 1
      %v837 = vrot.slane %v740, 1
      %v838 = vrot.slane %v741, 1
      %v839 = vrot.slane %v742, 1
      %v840 = vrot.slane %v743, 1
      %v841 = vrot.slane %v744, 1
      %v842 = vrot.slane %v745, 1
      %v843 = vrot.slane %v746, 1
      %v844 = vrot.slane %v747, 1
      %v845 = vrot.slane %v748, 1
      %vm846 = vcmp.lt.s32.totalorder %v173, 7
      %v847 = vsel %vm846, %v844, %v845
      %v848 = vsel %vm846, %v843, %v844
      %v849 = vsel %vm846, %v842, %v843
      %v850 = vsel %vm846, %v841, %v842
      %v851 = vsel %vm846, %v840, %v841
      %v852 = vsel %vm846, %v839, %v840
      %v853 = vsel %vm846, %v838, %v839
      %v854 = vsel %vm846, %v837, %v838
      %v855 = vsel %vm846, %v836, %v837
      %v856 = vsel %vm846, %v835, %v836
      %v857 = vsel %vm846, %v834, %v835
      %v858 = vsel %vm846, %v833, %v834
      %v859 = vsel %vm846, %v832, %v833
      %v860 = vsel %vm846, %v831, %v832
      %v861 = vsel %vm846, %v830, %v831
      %v862 = vsel %vm846, %v829, %v830
      %v863 = vsel %vm846, %v828, %v829
      %v864 = vsel %vm846, %v827, %v828
      %v865 = vsel %vm846, %v826, %v827
      %v866 = vsel %vm846, %v825, %v826
      %v867 = vsel %vm846, %v824, %v825
      %v868 = vsel %vm846, %v823, %v824
      %v869 = vsel %vm846, %v822, %v823
      %v870 = vsel %vm846, %v821, %v822
      %v871 = vsel %vm846, %v820, %v821
      %v872 = vsel %vm846, %v819, %v820
      %v873 = vsel %vm846, %v818, %v819
      %v874 = vsel %vm846, %v817, %v818
      %v875 = vsel %vm846, %v816, %v817
      %v876 = vsel %vm846, %v815, %v816
      %v877 = vsel %vm846, %v814, %v815
      %v878 = vsel %vm846, %v845, %v814
      %v879 = vsel %vm589, 1, 0
      %v880 = vsel %vm590, 1, 0
      %v881 = vsel %vm591, 1, 0
      %v882 = vsel %vm592, 1, 0
      %v883 = vsel %vm593, 1, 0
      %v884 = vsel %vm594, 1, 0
      %v885 = vsel %vm595, 1, 0
      %v886 = vsel %vm596, 1, 0
      %v887 = vsel %vm597, 1, 0
      %v888 = vsel %vm598, 1, 0
      %v889 = vsel %vm599, 1, 0
      %v890 = vsel %vm600, 1, 0
      %v891 = vsel %vm601, 1, 0
      %v892 = vsel %vm602, 1, 0
      %v893 = vsel %vm603, 1, 0
      %v894 = vsel %vm604, 1, 0
      %v895 = vsel %vm605, 1, 0
      %v896 = vsel %vm606, 1, 0
      %v897 = vsel %vm607, 1, 0
      %v898 = vsel %vm608, 1, 0
      %v899 = vsel %vm609, 1, 0
      %v900 = vsel %vm610, 1, 0
      %v901 = vsel %vm611, 1, 0
      %v902 = vsel %vm612, 1, 0
      %v903 = vsel %vm613, 1, 0
      %v904 = vsel %vm614, 1, 0
      %v905 = vsel %vm615, 1, 0
      %v906 = vsel %vm616, 1, 0
      %v907 = vsel %vm617, 1, 0
      %v908 = vsel %vm618, 1, 0
      %v909 = vsel %vm619, 1, 0
      %v910 = vsel %vm620, 1, 0
      %vm911 = vcmp.eq.s32.totalorder %v879, 1
      %vm912 = vcmp.eq.s32.totalorder %v880, 1
      %vm913 = vcmp.eq.s32.totalorder %v881, 1
      %vm914 = vcmp.eq.s32.totalorder %v882, 1
      %vm915 = vcmp.eq.s32.totalorder %v883, 1
      %vm916 = vcmp.eq.s32.totalorder %v884, 1
      %vm917 = vcmp.eq.s32.totalorder %v885, 1
      %vm918 = vcmp.eq.s32.totalorder %v886, 1
      %vm919 = vcmp.eq.s32.totalorder %v887, 1
      %vm920 = vcmp.eq.s32.totalorder %v888, 1
      %vm921 = vcmp.eq.s32.totalorder %v889, 1
      %vm922 = vcmp.eq.s32.totalorder %v890, 1
      %vm923 = vcmp.eq.s32.totalorder %v891, 1
      %vm924 = vcmp.eq.s32.totalorder %v892, 1
      %vm925 = vcmp.eq.s32.totalorder %v893, 1
      %vm926 = vcmp.eq.s32.totalorder %v894, 1
      %vm927 = vcmp.eq.s32.totalorder %v895, 1
      %vm928 = vcmp.eq.s32.totalorder %v896, 1
      %vm929 = vcmp.eq.s32.totalorder %v897, 1
      %vm930 = vcmp.eq.s32.totalorder %v898, 1
      %vm931 = vcmp.eq.s32.totalorder %v899, 1
      %vm932 = vcmp.eq.s32.totalorder %v900, 1
      %vm933 = vcmp.eq.s32.totalorder %v901, 1
      %vm934 = vcmp.eq.s32.totalorder %v902, 1
      %vm935 = vcmp.eq.s32.totalorder %v903, 1
      %vm936 = vcmp.eq.s32.totalorder %v904, 1
      %vm937 = vcmp.eq.s32.totalorder %v905, 1
      %vm938 = vcmp.eq.s32.totalorder %v906, 1
      %vm939 = vcmp.eq.s32.totalorder %v907, 1
      %vm940 = vcmp.eq.s32.totalorder %v908, 1
      %vm941 = vcmp.eq.s32.totalorder %v909, 1
      %vm942 = vcmp.eq.s32.totalorder %v910, 1
      %v943 = vsel %vm911, %v877, %v813
      %v944 = vsel %vm912, %v876, %v812
      %v945 = vsel %vm913, %v875, %v811
      %v946 = vsel %vm914, %v874, %v810
      %v947 = vsel %vm915, %v873, %v809
      %v948 = vsel %vm916, %v872, %v808
      %v949 = vsel %vm917, %v871, %v807
      %v950 = vsel %vm918, %v870, %v806
      %v951 = vsel %vm919, %v869, %v805
      %v952 = vsel %vm920, %v868, %v804
      %v953 = vsel %vm921, %v867, %v803
      %v954 = vsel %vm922, %v866, %v802
      %v955 = vsel %vm923, %v865, %v801
      %v956 = vsel %vm924, %v864, %v800
      %v957 = vsel %vm925, %v863, %v799
      %v958 = vsel %vm926, %v862, %v798
      %v959 = vsel %vm927, %v861, %v797
      %v960 = vsel %vm928, %v860, %v796
      %v961 = vsel %vm929, %v859, %v795
      %v962 = vsel %vm930, %v858, %v794
      %v963 = vsel %vm931, %v857, %v793
      %v964 = vsel %vm932, %v856, %v792
      %v965 = vsel %vm933, %v855, %v791
      %v966 = vsel %vm934, %v854, %v790
      %v967 = vsel %vm935, %v853, %v789
      %v968 = vsel %vm936, %v852, %v788
      %v969 = vsel %vm937, %v851, %v787
      %v970 = vsel %vm938, %v850, %v786
      %v971 = vsel %vm939, %v849, %v785
      %v972 = vsel %vm940, %v848, %v784
      %v973 = vsel %vm941, %v847, %v783
      %v974 = vsel %vm942, %v878, %v782
      %v975 = vsel %vm621, 1, 0
      %v976 = vsel %vm622, 1, 0
      %v977 = vsel %vm623, 1, 0
      %v978 = vsel %vm624, 1, 0
      %v979 = vsel %vm625, 1, 0
      %v980 = vsel %vm626, 1, 0
      %v981 = vsel %vm627, 1, 0
      %v982 = vsel %vm628, 1, 0
      %v983 = vsel %vm629, 1, 0
      %v984 = vsel %vm630, 1, 0
      %v985 = vsel %vm631, 1, 0
      %v986 = vsel %vm632, 1, 0
      %v987 = vsel %vm633, 1, 0
      %v988 = vsel %vm634, 1, 0
      %v989 = vsel %vm635, 1, 0
      %v990 = vsel %vm636, 1, 0
      %v991 = vsel %vm637, 1, 0
      %v992 = vsel %vm638, 1, 0
      %v993 = vsel %vm639, 1, 0
      %v994 = vsel %vm640, 1, 0
      %v995 = vsel %vm641, 1, 0
      %v996 = vsel %vm642, 1, 0
      %v997 = vsel %vm643, 1, 0
      %v998 = vsel %vm644, 1, 0
      %v999 = vsel %vm645, 1, 0
      %v1000 = vsel %vm646, 1, 0
      %v1001 = vsel %vm647, 1, 0
      %v1002 = vsel %vm648, 1, 0
      %v1003 = vsel %vm649, 1, 0
      %v1004 = vsel %vm650, 1, 0
      %v1005 = vsel %vm651, 1, 0
      %v1006 = vsel %vm652, 1, 0
      %vm1007 = vcmp.eq.s32.totalorder %v975, 1
      %vm1008 = vcmp.eq.s32.totalorder %v976, 1
      %vm1009 = vcmp.eq.s32.totalorder %v977, 1
      %vm1010 = vcmp.eq.s32.totalorder %v978, 1
      %vm1011 = vcmp.eq.s32.totalorder %v979, 1
      %vm1012 = vcmp.eq.s32.totalorder %v980, 1
      %vm1013 = vcmp.eq.s32.totalorder %v981, 1
      %vm1014 = vcmp.eq.s32.totalorder %v982, 1
      %vm1015 = vcmp.eq.s32.totalorder %v983, 1
      %vm1016 = vcmp.eq.s32.totalorder %v984, 1
      %vm1017 = vcmp.eq.s32.totalorder %v985, 1
      %vm1018 = vcmp.eq.s32.totalorder %v986, 1
      %vm1019 = vcmp.eq.s32.totalorder %v987, 1
      %vm1020 = vcmp.eq.s32.totalorder %v988, 1
      %vm1021 = vcmp.eq.s32.totalorder %v989, 1
      %vm1022 = vcmp.eq.s32.totalorder %v990, 1
      %vm1023 = vcmp.eq.s32.totalorder %v991, 1
      %vm1024 = vcmp.eq.s32.totalorder %v992, 1
      %vm1025 = vcmp.eq.s32.totalorder %v993, 1
      %vm1026 = vcmp.eq.s32.totalorder %v994, 1
      %vm1027 = vcmp.eq.s32.totalorder %v995, 1
      %vm1028 = vcmp.eq.s32.totalorder %v996, 1
      %vm1029 = vcmp.eq.s32.totalorder %v997, 1
      %vm1030 = vcmp.eq.s32.totalorder %v998, 1
      %vm1031 = vcmp.eq.s32.totalorder %v999, 1
      %vm1032 = vcmp.eq.s32.totalorder %v1000, 1
      %vm1033 = vcmp.eq.s32.totalorder %v1001, 1
      %vm1034 = vcmp.eq.s32.totalorder %v1002, 1
      %vm1035 = vcmp.eq.s32.totalorder %v1003, 1
      %vm1036 = vcmp.eq.s32.totalorder %v1004, 1
      %vm1037 = vcmp.eq.s32.totalorder %v1005, 1
      %vm1038 = vcmp.eq.s32.totalorder %v1006, 1
      %v1039 = vsel %vm1007, %v813, %v877
      %v1040 = vsel %vm1008, %v812, %v876
      %v1041 = vsel %vm1009, %v811, %v875
      %v1042 = vsel %vm1010, %v810, %v874
      %v1043 = vsel %vm1011, %v809, %v873
      %v1044 = vsel %vm1012, %v808, %v872
      %v1045 = vsel %vm1013, %v807, %v871
      %v1046 = vsel %vm1014, %v806, %v870
      %v1047 = vsel %vm1015, %v805, %v869
      %v1048 = vsel %vm1016, %v804, %v868
      %v1049 = vsel %vm1017, %v803, %v867
      %v1050 = vsel %vm1018, %v802, %v866
      %v1051 = vsel %vm1019, %v801, %v865
      %v1052 = vsel %vm1020, %v800, %v864
      %v1053 = vsel %vm1021, %v799, %v863
      %v1054 = vsel %vm1022, %v798, %v862
      %v1055 = vsel %vm1023, %v797, %v861
      %v1056 = vsel %vm1024, %v796, %v860
      %v1057 = vsel %vm1025, %v795, %v859
      %v1058 = vsel %vm1026, %v794, %v858
      %v1059 = vsel %vm1027, %v793, %v857
      %v1060 = vsel %vm1028, %v792, %v856
      %v1061 = vsel %vm1029, %v791, %v855
      %v1062 = vsel %vm1030, %v790, %v854
      %v1063 = vsel %vm1031, %v789, %v853
      %v1064 = vsel %vm1032, %v788, %v852
      %v1065 = vsel %vm1033, %v787, %v851
      %v1066 = vsel %vm1034, %v786, %v850
      %v1067 = vsel %vm1035, %v785, %v849
      %v1068 = vsel %vm1036, %v784, %v848
      %v1069 = vsel %vm1037, %v783, %v847
      %v1070 = vsel %vm1038, %v782, %v878
      %v1071 = vpack.c.bf16 %v943, %v943
      %v1072 = vpack.c.bf16 %v944, %v944
      %v1073 = vpack.c.bf16 %v945, %v945
      %v1074 = vpack.c.bf16 %v946, %v946
      %v1075 = vpack.c.bf16 %v947, %v947
      %v1076 = vpack.c.bf16 %v948, %v948
      %v1077 = vpack.c.bf16 %v949, %v949
      %v1078 = vpack.c.bf16 %v950, %v950
      %v1079 = vpack.c.bf16 %v951, %v951
      %v1080 = vpack.c.bf16 %v952, %v952
      %v1081 = vpack.c.bf16 %v953, %v953
      %v1082 = vpack.c.bf16 %v954, %v954
      %v1083 = vpack.c.bf16 %v955, %v955
      %v1084 = vpack.c.bf16 %v956, %v956
      %v1085 = vpack.c.bf16 %v957, %v957
      %v1086 = vpack.c.bf16 %v958, %v958
      %v1087 = vpack.c.bf16 %v959, %v959
      %v1088 = vpack.c.bf16 %v960, %v960
      %v1089 = vpack.c.bf16 %v961, %v961
      %v1090 = vpack.c.bf16 %v962, %v962
      %v1091 = vpack.c.bf16 %v963, %v963
      %v1092 = vpack.c.bf16 %v964, %v964
      %v1093 = vpack.c.bf16 %v965, %v965
      %v1094 = vpack.c.bf16 %v966, %v966
      %v1095 = vpack.c.bf16 %v967, %v967
      %v1096 = vpack.c.bf16 %v968, %v968
      %v1097 = vpack.c.bf16 %v969, %v969
      %v1098 = vpack.c.bf16 %v970, %v970
      %v1099 = vpack.c.bf16 %v971, %v971
      %v1100 = vpack.c.bf16 %v972, %v972
      %v1101 = vpack.c.bf16 %v973, %v973
      %v1102 = vpack.c.bf16 %v974, %v974
      %v1103 = vpack.c.bf16 %v717, %v717
      %v1104 = vpack.c.bf16 %v718, %v718
      %v1105 = vpack.c.bf16 %v719, %v719
      %v1106 = vpack.c.bf16 %v720, %v720
      %v1107 = vpack.c.bf16 %v721, %v721
      %v1108 = vpack.c.bf16 %v722, %v722
      %v1109 = vpack.c.bf16 %v723, %v723
      %v1110 = vpack.c.bf16 %v724, %v724
      %v1111 = vpack.c.bf16 %v725, %v725
      %v1112 = vpack.c.bf16 %v726, %v726
      %v1113 = vpack.c.bf16 %v727, %v727
      %v1114 = vpack.c.bf16 %v728, %v728
      %v1115 = vpack.c.bf16 %v729, %v729
      %v1116 = vpack.c.bf16 %v730, %v730
      %v1117 = vpack.c.bf16 %v731, %v731
      %v1118 = vpack.c.bf16 %v732, %v732
      %v1119 = vpack.c.bf16 %v733, %v733
      %v1120 = vpack.c.bf16 %v734, %v734
      %v1121 = vpack.c.bf16 %v735, %v735
      %v1122 = vpack.c.bf16 %v736, %v736
      %v1123 = vpack.c.bf16 %v737, %v737
      %v1124 = vpack.c.bf16 %v738, %v738
      %v1125 = vpack.c.bf16 %v739, %v739
      %v1126 = vpack.c.bf16 %v740, %v740
      %v1127 = vpack.c.bf16 %v741, %v741
      %v1128 = vpack.c.bf16 %v742, %v742
      %v1129 = vpack.c.bf16 %v743, %v743
      %v1130 = vpack.c.bf16 %v744, %v744
      %v1131 = vpack.c.bf16 %v745, %v745
      %v1132 = vpack.c.bf16 %v746, %v746
      %v1133 = vpack.c.bf16 %v747, %v747
      %v1134 = vpack.c.bf16 %v748, %v748
      %v1135 = vpack.c.bf16 %v1039, %v1039
      %v1136 = vpack.c.bf16 %v1040, %v1040
      %v1137 = vpack.c.bf16 %v1041, %v1041
      %v1138 = vpack.c.bf16 %v1042, %v1042
      %v1139 = vpack.c.bf16 %v1043, %v1043
      %v1140 = vpack.c.bf16 %v1044, %v1044
      %v1141 = vpack.c.bf16 %v1045, %v1045
      %v1142 = vpack.c.bf16 %v1046, %v1046
      %v1143 = vpack.c.bf16 %v1047, %v1047
      %v1144 = vpack.c.bf16 %v1048, %v1048
      %v1145 = vpack.c.bf16 %v1049, %v1049
      %v1146 = vpack.c.bf16 %v1050, %v1050
      %v1147 = vpack.c.bf16 %v1051, %v1051
      %v1148 = vpack.c.bf16 %v1052, %v1052
      %v1149 = vpack.c.bf16 %v1053, %v1053
      %v1150 = vpack.c.bf16 %v1054, %v1054
      %v1151 = vpack.c.bf16 %v1055, %v1055
      %v1152 = vpack.c.bf16 %v1056, %v1056
      %v1153 = vpack.c.bf16 %v1057, %v1057
      %v1154 = vpack.c.bf16 %v1058, %v1058
      %v1155 = vpack.c.bf16 %v1059, %v1059
      %v1156 = vpack.c.bf16 %v1060, %v1060
      %v1157 = vpack.c.bf16 %v1061, %v1061
      %v1158 = vpack.c.bf16 %v1062, %v1062
      %v1159 = vpack.c.bf16 %v1063, %v1063
      %v1160 = vpack.c.bf16 %v1064, %v1064
      %v1161 = vpack.c.bf16 %v1065, %v1065
      %v1162 = vpack.c.bf16 %v1066, %v1066
      %v1163 = vpack.c.bf16 %v1067, %v1067
      %v1164 = vpack.c.bf16 %v1068, %v1068
      %v1165 = vpack.c.bf16 %v1069, %v1069
      %v1166 = vpack.c.bf16 %v1070, %v1070
      %v1199 = vunpack.c.l.b16 %v1071
      %v1200 = vunpack.c.l.b16 %v1072
      %v1201 = vunpack.c.l.b16 %v1073
      %v1202 = vunpack.c.l.b16 %v1074
      %v1203 = vunpack.c.l.b16 %v1075
      %v1204 = vunpack.c.l.b16 %v1076
      %v1205 = vunpack.c.l.b16 %v1077
      %v1206 = vunpack.c.l.b16 %v1078
      %v1207 = vunpack.c.l.b16 %v1079
      %v1208 = vunpack.c.l.b16 %v1080
      %v1209 = vunpack.c.l.b16 %v1081
      %v1210 = vunpack.c.l.b16 %v1082
      %v1211 = vunpack.c.l.b16 %v1083
      %v1212 = vunpack.c.l.b16 %v1084
      %v1213 = vunpack.c.l.b16 %v1085
      %v1214 = vunpack.c.l.b16 %v1086
      %v1215 = vunpack.c.l.b16 %v1087
      %v1216 = vunpack.c.l.b16 %v1088
      %v1217 = vunpack.c.l.b16 %v1089
      %v1218 = vunpack.c.l.b16 %v1090
      %v1219 = vunpack.c.l.b16 %v1091
      %v1220 = vunpack.c.l.b16 %v1092
      %v1221 = vunpack.c.l.b16 %v1093
      %v1222 = vunpack.c.l.b16 %v1094
      %v1223 = vunpack.c.l.b16 %v1095
      %v1224 = vunpack.c.l.b16 %v1096
      %v1225 = vunpack.c.l.b16 %v1097
      %v1226 = vunpack.c.l.b16 %v1098
      %v1227 = vunpack.c.l.b16 %v1099
      %v1228 = vunpack.c.l.b16 %v1100
      %v1229 = vunpack.c.l.b16 %v1101
      %v1230 = vunpack.c.l.b16 %v1102
      %v1231 = vpack.c.b16 %v1200, %v1199
      %v1232 = vpack.c.b16 %v1202, %v1201
      %v1233 = vpack.c.b16 %v1204, %v1203
      %v1234 = vpack.c.b16 %v1206, %v1205
      %v1235 = vpack.c.b16 %v1208, %v1207
      %v1236 = vpack.c.b16 %v1210, %v1209
      %v1237 = vpack.c.b16 %v1212, %v1211
      %v1238 = vpack.c.b16 %v1214, %v1213
      %v1239 = vpack.c.b16 %v1216, %v1215
      %v1240 = vpack.c.b16 %v1218, %v1217
      %v1241 = vpack.c.b16 %v1220, %v1219
      %v1242 = vpack.c.b16 %v1222, %v1221
      %v1243 = vpack.c.b16 %v1224, %v1223
      %v1244 = vpack.c.b16 %v1226, %v1225
      %v1245 = vpack.c.b16 %v1228, %v1227
      %v1246 = vpack.c.b16 %v1230, %v1229
      %v1279 = vunpack.c.l.b16 %v1103
      %v1280 = vunpack.c.l.b16 %v1104
      %v1281 = vunpack.c.l.b16 %v1105
      %v1282 = vunpack.c.l.b16 %v1106
      %v1283 = vunpack.c.l.b16 %v1107
      %v1284 = vunpack.c.l.b16 %v1108
      %v1285 = vunpack.c.l.b16 %v1109
      %v1286 = vunpack.c.l.b16 %v1110
      %v1287 = vunpack.c.l.b16 %v1111
      %v1288 = vunpack.c.l.b16 %v1112
      %v1289 = vunpack.c.l.b16 %v1113
      %v1290 = vunpack.c.l.b16 %v1114
      %v1291 = vunpack.c.l.b16 %v1115
      %v1292 = vunpack.c.l.b16 %v1116
      %v1293 = vunpack.c.l.b16 %v1117
      %v1294 = vunpack.c.l.b16 %v1118
      %v1295 = vunpack.c.l.b16 %v1119
      %v1296 = vunpack.c.l.b16 %v1120
      %v1297 = vunpack.c.l.b16 %v1121
      %v1298 = vunpack.c.l.b16 %v1122
      %v1299 = vunpack.c.l.b16 %v1123
      %v1300 = vunpack.c.l.b16 %v1124
      %v1301 = vunpack.c.l.b16 %v1125
      %v1302 = vunpack.c.l.b16 %v1126
      %v1303 = vunpack.c.l.b16 %v1127
      %v1304 = vunpack.c.l.b16 %v1128
      %v1305 = vunpack.c.l.b16 %v1129
      %v1306 = vunpack.c.l.b16 %v1130
      %v1307 = vunpack.c.l.b16 %v1131
      %v1308 = vunpack.c.l.b16 %v1132
      %v1309 = vunpack.c.l.b16 %v1133
      %v1310 = vunpack.c.l.b16 %v1134
      %v1311 = vpack.c.b16 %v1280, %v1279
      %v1312 = vpack.c.b16 %v1282, %v1281
      %v1313 = vpack.c.b16 %v1284, %v1283
      %v1314 = vpack.c.b16 %v1286, %v1285
      %v1315 = vpack.c.b16 %v1288, %v1287
      %v1316 = vpack.c.b16 %v1290, %v1289
      %v1317 = vpack.c.b16 %v1292, %v1291
      %v1318 = vpack.c.b16 %v1294, %v1293
      %v1319 = vpack.c.b16 %v1296, %v1295
      %v1320 = vpack.c.b16 %v1298, %v1297
      %v1321 = vpack.c.b16 %v1300, %v1299
      %v1322 = vpack.c.b16 %v1302, %v1301
      %v1323 = vpack.c.b16 %v1304, %v1303
      %v1324 = vpack.c.b16 %v1306, %v1305
      %v1325 = vpack.c.b16 %v1308, %v1307
      %v1326 = vpack.c.b16 %v1310, %v1309
      %1327 = vrot.lane.b32.xlu0 %v1311, 4
      %v1328 = vpop.permute.xlu0 %1327
      %1329 = vrot.lane.b32.xlu0 %v1312, 4
      %v1330 = vpop.permute.xlu0 %1329
      %1331 = vrot.lane.b32.xlu0 %v1313, 4
      %v1332 = vpop.permute.xlu0 %1331
      %1333 = vrot.lane.b32.xlu0 %v1314, 4
      %v1334 = vpop.permute.xlu0 %1333
      %1335 = vrot.lane.b32.xlu0 %v1315, 4
      %v1336 = vpop.permute.xlu0 %1335
      %1337 = vrot.lane.b32.xlu0 %v1316, 4
      %v1338 = vpop.permute.xlu0 %1337
      %1339 = vrot.lane.b32.xlu0 %v1317, 4
      %v1340 = vpop.permute.xlu0 %1339
      %1341 = vrot.lane.b32.xlu0 %v1318, 4
      %v1342 = vpop.permute.xlu0 %1341
      %1343 = vrot.lane.b32.xlu0 %v1319, 4
      %v1344 = vpop.permute.xlu0 %1343
      %1345 = vrot.lane.b32.xlu0 %v1320, 4
      %v1346 = vpop.permute.xlu0 %1345
      %1347 = vrot.lane.b32.xlu0 %v1321, 4
      %v1348 = vpop.permute.xlu0 %1347
      %1349 = vrot.lane.b32.xlu0 %v1322, 4
      %v1350 = vpop.permute.xlu0 %1349
      %1351 = vrot.lane.b32.xlu0 %v1323, 4
      %v1352 = vpop.permute.xlu0 %1351
      %1353 = vrot.lane.b32.xlu0 %v1324, 4
      %v1354 = vpop.permute.xlu0 %1353
      %1355 = vrot.lane.b32.xlu0 %v1325, 4
      %v1356 = vpop.permute.xlu0 %1355
      %1357 = vrot.lane.b32.xlu0 %v1326, 4
      %v1358 = vpop.permute.xlu0 %1357
      %v1391 = vunpack.c.l.b16 %v1135
      %v1392 = vunpack.c.l.b16 %v1136
      %v1393 = vunpack.c.l.b16 %v1137
      %v1394 = vunpack.c.l.b16 %v1138
      %v1395 = vunpack.c.l.b16 %v1139
      %v1396 = vunpack.c.l.b16 %v1140
      %v1397 = vunpack.c.l.b16 %v1141
      %v1398 = vunpack.c.l.b16 %v1142
      %v1399 = vunpack.c.l.b16 %v1143
      %v1400 = vunpack.c.l.b16 %v1144
      %v1401 = vunpack.c.l.b16 %v1145
      %v1402 = vunpack.c.l.b16 %v1146
      %v1403 = vunpack.c.l.b16 %v1147
      %v1404 = vunpack.c.l.b16 %v1148
      %v1405 = vunpack.c.l.b16 %v1149
      %v1406 = vunpack.c.l.b16 %v1150
      %v1407 = vunpack.c.l.b16 %v1151
      %v1408 = vunpack.c.l.b16 %v1152
      %v1409 = vunpack.c.l.b16 %v1153
      %v1410 = vunpack.c.l.b16 %v1154
      %v1411 = vunpack.c.l.b16 %v1155
      %v1412 = vunpack.c.l.b16 %v1156
      %v1413 = vunpack.c.l.b16 %v1157
      %v1414 = vunpack.c.l.b16 %v1158
      %v1415 = vunpack.c.l.b16 %v1159
      %v1416 = vunpack.c.l.b16 %v1160
      %v1417 = vunpack.c.l.b16 %v1161
      %v1418 = vunpack.c.l.b16 %v1162
      %v1419 = vunpack.c.l.b16 %v1163
      %v1420 = vunpack.c.l.b16 %v1164
      %v1421 = vunpack.c.l.b16 %v1165
      %v1422 = vunpack.c.l.b16 %v1166
      %v1423 = vpack.c.b16 %v1392, %v1391
      %v1424 = vpack.c.b16 %v1394, %v1393
      %v1425 = vpack.c.b16 %v1396, %v1395
      %v1426 = vpack.c.b16 %v1398, %v1397
      %v1427 = vpack.c.b16 %v1400, %v1399
      %v1428 = vpack.c.b16 %v1402, %v1401
      %v1429 = vpack.c.b16 %v1404, %v1403
      %v1430 = vpack.c.b16 %v1406, %v1405
      %v1431 = vpack.c.b16 %v1408, %v1407
      %v1432 = vpack.c.b16 %v1410, %v1409
      %v1433 = vpack.c.b16 %v1412, %v1411
      %v1434 = vpack.c.b16 %v1414, %v1413
      %v1435 = vpack.c.b16 %v1416, %v1415
      %v1436 = vpack.c.b16 %v1418, %v1417
      %v1437 = vpack.c.b16 %v1420, %v1419
      %v1438 = vpack.c.b16 %v1422, %v1421
      %1439 = vrot.lane.b32.xlu0 %v1423, 8
      %v1440 = vpop.permute.xlu0 %1439
      %1441 = vrot.lane.b32.xlu0 %v1424, 8
      %v1442 = vpop.permute.xlu0 %1441
      %1443 = vrot.lane.b32.xlu0 %v1425, 8
      %v1444 = vpop.permute.xlu0 %1443
      %1445 = vrot.lane.b32.xlu0 %v1426, 8
      %v1446 = vpop.permute.xlu0 %1445
      %1447 = vrot.lane.b32.xlu0 %v1427, 8
      %v1448 = vpop.permute.xlu0 %1447
      %1449 = vrot.lane.b32.xlu0 %v1428, 8
      %v1450 = vpop.permute.xlu0 %1449
      %1451 = vrot.lane.b32.xlu0 %v1429, 8
      %v1452 = vpop.permute.xlu0 %1451
      %1453 = vrot.lane.b32.xlu0 %v1430, 8
      %v1454 = vpop.permute.xlu0 %1453
      %1455 = vrot.lane.b32.xlu0 %v1431, 8
      %v1456 = vpop.permute.xlu0 %1455
      %1457 = vrot.lane.b32.xlu0 %v1432, 8
      %v1458 = vpop.permute.xlu0 %1457
      %1459 = vrot.lane.b32.xlu0 %v1433, 8
      %v1460 = vpop.permute.xlu0 %1459
      %1461 = vrot.lane.b32.xlu0 %v1434, 8
      %v1462 = vpop.permute.xlu0 %1461
      %1463 = vrot.lane.b32.xlu0 %v1435, 8
      %v1464 = vpop.permute.xlu0 %1463
      %1465 = vrot.lane.b32.xlu0 %v1436, 8
      %v1466 = vpop.permute.xlu0 %1465
      %1467 = vrot.lane.b32.xlu0 %v1437, 8
      %v1468 = vpop.permute.xlu0 %1467
      %1469 = vrot.lane.b32.xlu0 %v1438, 8
      %v1470 = vpop.permute.xlu0 %1469
      %vm1471 = vcmask 31744
      %v1474 = vsel %vm1471, %v1231, %v1328
      %v1477 = vsel %vm1471, %v1232, %v1330
      %v1480 = vsel %vm1471, %v1233, %v1332
      %v1483 = vsel %vm1471, %v1234, %v1334
      %v1486 = vsel %vm1471, %v1235, %v1336
      %v1489 = vsel %vm1471, %v1236, %v1338
      %v1492 = vsel %vm1471, %v1237, %v1340
      %v1495 = vsel %vm1471, %v1238, %v1342
      %v1498 = vsel %vm1471, %v1239, %v1344
      %v1501 = vsel %vm1471, %v1240, %v1346
      %v1504 = vsel %vm1471, %v1241, %v1348
      %v1507 = vsel %vm1471, %v1242, %v1350
      %v1510 = vsel %vm1471, %v1243, %v1352
      %v1513 = vsel %vm1471, %v1244, %v1354
      %v1516 = vsel %vm1471, %v1245, %v1356
      %v1519 = vsel %vm1471, %v1246, %v1358
      %vm1520 = vcmask 64512
      %v1522 = vsel %vm1520, %v1474, %v1440
      %v1524 = vsel %vm1520, %v1477, %v1442
      %v1526 = vsel %vm1520, %v1480, %v1444
      %v1528 = vsel %vm1520, %v1483, %v1446
      %v1530 = vsel %vm1520, %v1486, %v1448
      %v1532 = vsel %vm1520, %v1489, %v1450
      %v1534 = vsel %vm1520, %v1492, %v1452
      %v1536 = vsel %vm1520, %v1495, %v1454
      %v1538 = vsel %vm1520, %v1498, %v1456
      %v1540 = vsel %vm1520, %v1501, %v1458
      %v1542 = vsel %vm1520, %v1504, %v1460
      %v1544 = vsel %vm1520, %v1507, %v1462
      %v1546 = vsel %vm1520, %v1510, %v1464
      %v1548 = vsel %vm1520, %v1513, %v1466
      %v1550 = vsel %vm1520, %v1516, %v1468
      %v1552 = vsel %vm1520, %v1519, %v1470
      %v1553 = vld [vmem:[%s1] sm:$0xf]
      %v1554 = vld [vmem:[%s1 + $0x4] sm:$0x3]
      %v1557 = vunpack.c.l.b16 %v1553
      %v1558 = vunpack.c.l.b16 %v1554
      %v1559 = vpack.c.b16 %v1558, %v1557
      %vm1560 = vcmask 97280
      %v1561 = vsel %vm1560, %v1522, 0
      %v1563 = vsel %vm1560, %v1524, 0
      %v1565 = vsel %vm1560, %v1526, 0
      %v1567 = vsel %vm1560, %v1528, 0
      %v1569 = vsel %vm1560, %v1530, 0
      %v1571 = vsel %vm1560, %v1532, 0
      %v1573 = vsel %vm1560, %v1534, 0
      %v1575 = vsel %vm1560, %v1536, 0
      %v1577 = vsel %vm1560, %v1538, 0
      %v1579 = vsel %vm1560, %v1540, 0
      %v1581 = vsel %vm1560, %v1542, 0
      %v1583 = vsel %vm1560, %v1544, 0
      %v1585 = vsel %vm1560, %v1546, 0
      %v1587 = vsel %vm1560, %v1548, 0
      %v1589 = vsel %vm1560, %v1550, 0
      %v1591 = vsel %vm1560, %v1552, 0
      %vm1593 = vcmask 1045504
      %v1595 = vsel %vm1593, %v1559, 0
      %1597 = vmatpush.bf16.msra.mxu0 0
      %1598 = vmatpush.bf16.msra.mxu0 0
      %1599 = vmatpush.bf16.msra.mxu0 0
      %1600 = vmatpush.bf16.msra.mxu0 0
      %1601 = vmatpush.bf16.msra.mxu0 0
      %1602 = vmatpush.bf16.msra.mxu0 0
      %1603 = vmatpush.bf16.msra.mxu0 0
      %1604 = vmatpush.bf16.msra.mxu0 %v1595
      %1605 = vmatmul.bf16.gmra.mxu0 %v1561
      %v1606 = vpop.f32.mrf.mxu0
      %v1607 = vadd.f32 0.0, %v1606
      %v1608 = vpop.f32.mrf.mxu0
      %v1609 = vadd.f32 0.0, %v1608
      %1610 = vmatmul.bf16.gmra.mxu0 %v1563
      %v1611 = vpop.f32.mrf.mxu0
      %v1612 = vadd.f32 0.0, %v1611
      %v1613 = vpop.f32.mrf.mxu0
      %v1614 = vadd.f32 0.0, %v1613
      %1615 = vmatmul.bf16.gmra.mxu0 %v1565
      %v1616 = vpop.f32.mrf.mxu0
      %v1617 = vadd.f32 0.0, %v1616
      %v1618 = vpop.f32.mrf.mxu0
      %v1619 = vadd.f32 0.0, %v1618
      %1620 = vmatmul.bf16.gmra.mxu0 %v1567
      %v1621 = vpop.f32.mrf.mxu0
      %v1622 = vadd.f32 0.0, %v1621
      %v1623 = vpop.f32.mrf.mxu0
      %v1624 = vadd.f32 0.0, %v1623
      %1625 = vmatmul.bf16.gmra.mxu0 %v1569
      %v1626 = vpop.f32.mrf.mxu0
      %v1627 = vadd.f32 0.0, %v1626
      %v1628 = vpop.f32.mrf.mxu0
      %v1629 = vadd.f32 0.0, %v1628
      %1630 = vmatmul.bf16.gmra.mxu0 %v1571
      %v1631 = vpop.f32.mrf.mxu0
      %v1632 = vadd.f32 0.0, %v1631
      %v1633 = vpop.f32.mrf.mxu0
      %v1634 = vadd.f32 0.0, %v1633
      %1635 = vmatmul.bf16.gmra.mxu0 %v1573
      %v1636 = vpop.f32.mrf.mxu0
      %v1637 = vadd.f32 0.0, %v1636
      %v1638 = vpop.f32.mrf.mxu0
      %v1639 = vadd.f32 0.0, %v1638
      %1640 = vmatmul.bf16.gmra.mxu0 %v1575
      %v1641 = vpop.f32.mrf.mxu0
      %v1642 = vadd.f32 0.0, %v1641
      %v1643 = vpop.f32.mrf.mxu0
      %v1644 = vadd.f32 0.0, %v1643
      %1645 = vmatmul.bf16.gmra.mxu0 %v1577
      %v1646 = vpop.f32.mrf.mxu0
      %v1647 = vadd.f32 0.0, %v1646
      %v1648 = vpop.f32.mrf.mxu0
      %v1649 = vadd.f32 0.0, %v1648
      %1650 = vmatmul.bf16.gmra.mxu0 %v1579
      %v1651 = vpop.f32.mrf.mxu0
      %v1652 = vadd.f32 0.0, %v1651
      %v1653 = vpop.f32.mrf.mxu0
      %v1654 = vadd.f32 0.0, %v1653
      %1655 = vmatmul.bf16.gmra.mxu0 %v1581
      %v1656 = vpop.f32.mrf.mxu0
      %v1657 = vadd.f32 0.0, %v1656
      %v1658 = vpop.f32.mrf.mxu0
      %v1659 = vadd.f32 0.0, %v1658
      %1660 = vmatmul.bf16.gmra.mxu0 %v1583
      %v1661 = vpop.f32.mrf.mxu0
      %v1662 = vadd.f32 0.0, %v1661
      %v1663 = vpop.f32.mrf.mxu0
      %v1664 = vadd.f32 0.0, %v1663
      %1665 = vmatmul.bf16.gmra.mxu0 %v1585
      %v1666 = vpop.f32.mrf.mxu0
      %v1667 = vadd.f32 0.0, %v1666
      %v1668 = vpop.f32.mrf.mxu0
      %v1669 = vadd.f32 0.0, %v1668
      %1670 = vmatmul.bf16.gmra.mxu0 %v1587
      %v1671 = vpop.f32.mrf.mxu0
      %v1672 = vadd.f32 0.0, %v1671
      %v1673 = vpop.f32.mrf.mxu0
      %v1674 = vadd.f32 0.0, %v1673
      %1675 = vmatmul.bf16.gmra.mxu0 %v1589
      %v1676 = vpop.f32.mrf.mxu0
      %v1677 = vadd.f32 0.0, %v1676
      %v1678 = vpop.f32.mrf.mxu0
      %v1679 = vadd.f32 0.0, %v1678
      %1680 = vmatmul.bf16.gmra.mxu0 %v1591
      %v1681 = vpop.f32.mrf.mxu0
      %v1682 = vadd.f32 0.0, %v1681
      %v1683 = vpop.f32.mrf.mxu0
      %v1684 = vadd.f32 0.0, %v1683
      %1685 = vdwg.mxu0
      %1718 = vrot.lane.b32.xlu0 %v1607, 120
      %v1719 = vpop.permute.xlu0 %1718
      %1720 = vrot.lane.b32.xlu0 %v1609, 120
      %v1721 = vpop.permute.xlu0 %1720
      %1722 = vrot.lane.b32.xlu0 %v1612, 120
      %v1723 = vpop.permute.xlu0 %1722
      %1724 = vrot.lane.b32.xlu0 %v1614, 120
      %v1725 = vpop.permute.xlu0 %1724
      %1726 = vrot.lane.b32.xlu0 %v1617, 120
      %v1727 = vpop.permute.xlu0 %1726
      %1728 = vrot.lane.b32.xlu0 %v1619, 120
      %v1729 = vpop.permute.xlu0 %1728
      %1730 = vrot.lane.b32.xlu0 %v1622, 120
      %v1731 = vpop.permute.xlu0 %1730
      %1732 = vrot.lane.b32.xlu0 %v1624, 120
      %v1733 = vpop.permute.xlu0 %1732
      %1734 = vrot.lane.b32.xlu0 %v1627, 120
      %v1735 = vpop.permute.xlu0 %1734
      %1736 = vrot.lane.b32.xlu0 %v1629, 120
      %v1737 = vpop.permute.xlu0 %1736
      %1738 = vrot.lane.b32.xlu0 %v1632, 120
      %v1739 = vpop.permute.xlu0 %1738
      %1740 = vrot.lane.b32.xlu0 %v1634, 120
      %v1741 = vpop.permute.xlu0 %1740
      %1742 = vrot.lane.b32.xlu0 %v1637, 120
      %v1743 = vpop.permute.xlu0 %1742
      %1744 = vrot.lane.b32.xlu0 %v1639, 120
      %v1745 = vpop.permute.xlu0 %1744
      %1746 = vrot.lane.b32.xlu0 %v1642, 120
      %v1747 = vpop.permute.xlu0 %1746
      %1748 = vrot.lane.b32.xlu0 %v1644, 120
      %v1749 = vpop.permute.xlu0 %1748
      %1750 = vrot.lane.b32.xlu0 %v1647, 120
      %v1751 = vpop.permute.xlu0 %1750
      %1752 = vrot.lane.b32.xlu0 %v1649, 120
      %v1753 = vpop.permute.xlu0 %1752
      %1754 = vrot.lane.b32.xlu0 %v1652, 120
      %v1755 = vpop.permute.xlu0 %1754
      %1756 = vrot.lane.b32.xlu0 %v1654, 120
      %v1757 = vpop.permute.xlu0 %1756
      %1758 = vrot.lane.b32.xlu0 %v1657, 120
      %v1759 = vpop.permute.xlu0 %1758
      %1760 = vrot.lane.b32.xlu0 %v1659, 120
      %v1761 = vpop.permute.xlu0 %1760
      %1762 = vrot.lane.b32.xlu0 %v1662, 120
      %v1763 = vpop.permute.xlu0 %1762
      %1764 = vrot.lane.b32.xlu0 %v1664, 120
      %v1765 = vpop.permute.xlu0 %1764
      %1766 = vrot.lane.b32.xlu0 %v1667, 120
      %v1767 = vpop.permute.xlu0 %1766
      %1768 = vrot.lane.b32.xlu0 %v1669, 120
      %v1769 = vpop.permute.xlu0 %1768
      %1770 = vrot.lane.b32.xlu0 %v1672, 120
      %v1771 = vpop.permute.xlu0 %1770
      %1772 = vrot.lane.b32.xlu0 %v1674, 120
      %v1773 = vpop.permute.xlu0 %1772
      %1774 = vrot.lane.b32.xlu0 %v1677, 120
      %v1775 = vpop.permute.xlu0 %1774
      %1776 = vrot.lane.b32.xlu0 %v1679, 120
      %v1777 = vpop.permute.xlu0 %1776
      %1778 = vrot.lane.b32.xlu0 %v1682, 120
      %v1779 = vpop.permute.xlu0 %1778
      %1780 = vrot.lane.b32.xlu0 %v1684, 120
      %v1781 = vpop.permute.xlu0 %1780
      %v1814 = vsel %vm653, 1, 0
      %v1815 = vsel %vm654, 1, 0
      %v1816 = vsel %vm655, 1, 0
      %v1817 = vsel %vm656, 1, 0
      %v1818 = vsel %vm657, 1, 0
      %v1819 = vsel %vm658, 1, 0
      %v1820 = vsel %vm659, 1, 0
      %v1821 = vsel %vm660, 1, 0
      %v1822 = vsel %vm661, 1, 0
      %v1823 = vsel %vm662, 1, 0
      %v1824 = vsel %vm663, 1, 0
      %v1825 = vsel %vm664, 1, 0
      %v1826 = vsel %vm665, 1, 0
      %v1827 = vsel %vm666, 1, 0
      %v1828 = vsel %vm667, 1, 0
      %v1829 = vsel %vm668, 1, 0
      %v1830 = vsel %vm669, 1, 0
      %v1831 = vsel %vm670, 1, 0
      %v1832 = vsel %vm671, 1, 0
      %v1833 = vsel %vm672, 1, 0
      %v1834 = vsel %vm673, 1, 0
      %v1835 = vsel %vm674, 1, 0
      %v1836 = vsel %vm675, 1, 0
      %v1837 = vsel %vm676, 1, 0
      %v1838 = vsel %vm677, 1, 0
      %v1839 = vsel %vm678, 1, 0
      %v1840 = vsel %vm679, 1, 0
      %v1841 = vsel %vm680, 1, 0
      %v1842 = vsel %vm681, 1, 0
      %v1843 = vsel %vm682, 1, 0
      %v1844 = vsel %vm683, 1, 0
      %v1845 = vsel %vm684, 1, 0
      %vm1846 = vcmp.eq.s32.totalorder %v1814, 1
      %vm1847 = vcmp.eq.s32.totalorder %v1815, 1
      %vm1848 = vcmp.eq.s32.totalorder %v1816, 1
      %vm1849 = vcmp.eq.s32.totalorder %v1817, 1
      %vm1850 = vcmp.eq.s32.totalorder %v1818, 1
      %vm1851 = vcmp.eq.s32.totalorder %v1819, 1
      %vm1852 = vcmp.eq.s32.totalorder %v1820, 1
      %vm1853 = vcmp.eq.s32.totalorder %v1821, 1
      %vm1854 = vcmp.eq.s32.totalorder %v1822, 1
      %vm1855 = vcmp.eq.s32.totalorder %v1823, 1
      %vm1856 = vcmp.eq.s32.totalorder %v1824, 1
      %vm1857 = vcmp.eq.s32.totalorder %v1825, 1
      %vm1858 = vcmp.eq.s32.totalorder %v1826, 1
      %vm1859 = vcmp.eq.s32.totalorder %v1827, 1
      %vm1860 = vcmp.eq.s32.totalorder %v1828, 1
      %vm1861 = vcmp.eq.s32.totalorder %v1829, 1
      %vm1862 = vcmp.eq.s32.totalorder %v1830, 1
      %vm1863 = vcmp.eq.s32.totalorder %v1831, 1
      %vm1864 = vcmp.eq.s32.totalorder %v1832, 1
      %vm1865 = vcmp.eq.s32.totalorder %v1833, 1
      %vm1866 = vcmp.eq.s32.totalorder %v1834, 1
      %vm1867 = vcmp.eq.s32.totalorder %v1835, 1
      %vm1868 = vcmp.eq.s32.totalorder %v1836, 1
      %vm1869 = vcmp.eq.s32.totalorder %v1837, 1
      %vm1870 = vcmp.eq.s32.totalorder %v1838, 1
      %vm1871 = vcmp.eq.s32.totalorder %v1839, 1
      %vm1872 = vcmp.eq.s32.totalorder %v1840, 1
      %vm1873 = vcmp.eq.s32.totalorder %v1841, 1
      %vm1874 = vcmp.eq.s32.totalorder %v1842, 1
      %vm1875 = vcmp.eq.s32.totalorder %v1843, 1
      %vm1876 = vcmp.eq.s32.totalorder %v1844, 1
      %vm1877 = vcmp.eq.s32.totalorder %v1845, 1
      %v1878 = vsel %vm1846, %v1612, %v1682
      %v1879 = vsel %vm1847, %v1614, %v1684
      %v1880 = vsel %vm1848, %v1617, %v1607
      %v1881 = vsel %vm1849, %v1619, %v1609
      %v1882 = vsel %vm1850, %v1622, %v1612
      %v1883 = vsel %vm1851, %v1624, %v1614
      %v1884 = vsel %vm1852, %v1627, %v1617
      %v1885 = vsel %vm1853, %v1629, %v1619
      %v1886 = vsel %vm1854, %v1632, %v1622
      %v1887 = vsel %vm1855, %v1634, %v1624
      %v1888 = vsel %vm1856, %v1637, %v1627
      %v1889 = vsel %vm1857, %v1639, %v1629
      %v1890 = vsel %vm1858, %v1642, %v1632
      %v1891 = vsel %vm1859, %v1644, %v1634
      %v1892 = vsel %vm1860, %v1647, %v1637
      %v1893 = vsel %vm1861, %v1649, %v1639
      %v1894 = vsel %vm1862, %v1652, %v1642
      %v1895 = vsel %vm1863, %v1654, %v1644
      %v1896 = vsel %vm1864, %v1657, %v1647
      %v1897 = vsel %vm1865, %v1659, %v1649
      %v1898 = vsel %vm1866, %v1662, %v1652
      %v1899 = vsel %vm1867, %v1664, %v1654
      %v1900 = vsel %vm1868, %v1667, %v1657
      %v1901 = vsel %vm1869, %v1669, %v1659
      %v1902 = vsel %vm1870, %v1672, %v1662
      %v1903 = vsel %vm1871, %v1674, %v1664
      %v1904 = vsel %vm1872, %v1677, %v1667
      %v1905 = vsel %vm1873, %v1679, %v1669
      %v1906 = vsel %vm1874, %v1682, %v1672
      %v1907 = vsel %vm1875, %v1684, %v1674
      %v1908 = vsel %vm1876, %v1607, %v1677
      %v1909 = vsel %vm1877, %v1609, %v1679
      %1942 = vrot.lane.b32.xlu0 %v1878, 4
      %v1943 = vpop.permute.xlu0 %1942
      %1944 = vrot.lane.b32.xlu0 %v1879, 4
      %v1945 = vpop.permute.xlu0 %1944
      %1946 = vrot.lane.b32.xlu0 %v1880, 4
      %v1947 = vpop.permute.xlu0 %1946
      %1948 = vrot.lane.b32.xlu0 %v1881, 4
      %v1949 = vpop.permute.xlu0 %1948
      %1950 = vrot.lane.b32.xlu0 %v1882, 4
      %v1951 = vpop.permute.xlu0 %1950
      %1952 = vrot.lane.b32.xlu0 %v1883, 4
      %v1953 = vpop.permute.xlu0 %1952
      %1954 = vrot.lane.b32.xlu0 %v1884, 4
      %v1955 = vpop.permute.xlu0 %1954
      %1956 = vrot.lane.b32.xlu0 %v1885, 4
      %v1957 = vpop.permute.xlu0 %1956
      %1958 = vrot.lane.b32.xlu0 %v1886, 4
      %v1959 = vpop.permute.xlu0 %1958
      %1960 = vrot.lane.b32.xlu0 %v1887, 4
      %v1961 = vpop.permute.xlu0 %1960
      %1962 = vrot.lane.b32.xlu0 %v1888, 4
      %v1963 = vpop.permute.xlu0 %1962
      %1964 = vrot.lane.b32.xlu0 %v1889, 4
      %v1965 = vpop.permute.xlu0 %1964
      %1966 = vrot.lane.b32.xlu0 %v1890, 4
      %v1967 = vpop.permute.xlu0 %1966
      %1968 = vrot.lane.b32.xlu0 %v1891, 4
      %v1969 = vpop.permute.xlu0 %1968
      %1970 = vrot.lane.b32.xlu0 %v1892, 4
      %v1971 = vpop.permute.xlu0 %1970
      %1972 = vrot.lane.b32.xlu0 %v1893, 4
      %v1973 = vpop.permute.xlu0 %1972
      %1974 = vrot.lane.b32.xlu0 %v1894, 4
      %v1975 = vpop.permute.xlu0 %1974
      %1976 = vrot.lane.b32.xlu0 %v1895, 4
      %v1977 = vpop.permute.xlu0 %1976
      %1978 = vrot.lane.b32.xlu0 %v1896, 4
      %v1979 = vpop.permute.xlu0 %1978
      %1980 = vrot.lane.b32.xlu0 %v1897, 4
      %v1981 = vpop.permute.xlu0 %1980
      %1982 = vrot.lane.b32.xlu0 %v1898, 4
      %v1983 = vpop.permute.xlu0 %1982
      %1984 = vrot.lane.b32.xlu0 %v1899, 4
      %v1985 = vpop.permute.xlu0 %1984
      %1986 = vrot.lane.b32.xlu0 %v1900, 4
      %v1987 = vpop.permute.xlu0 %1986
      %1988 = vrot.lane.b32.xlu0 %v1901, 4
      %v1989 = vpop.permute.xlu0 %1988
      %1990 = vrot.lane.b32.xlu0 %v1902, 4
      %v1991 = vpop.permute.xlu0 %1990
      %1992 = vrot.lane.b32.xlu0 %v1903, 4
      %v1993 = vpop.permute.xlu0 %1992
      %1994 = vrot.lane.b32.xlu0 %v1904, 4
      %v1995 = vpop.permute.xlu0 %1994
      %1996 = vrot.lane.b32.xlu0 %v1905, 4
      %v1997 = vpop.permute.xlu0 %1996
      %1998 = vrot.lane.b32.xlu0 %v1906, 4
      %v1999 = vpop.permute.xlu0 %1998
      %2000 = vrot.lane.b32.xlu0 %v1907, 4
      %v2001 = vpop.permute.xlu0 %2000
      %2002 = vrot.lane.b32.xlu0 %v1908, 4
      %v2003 = vpop.permute.xlu0 %2002
      %2004 = vrot.lane.b32.xlu0 %v1909, 4
      %v2005 = vpop.permute.xlu0 %2004
      %v2038 = vadd.f32 %v1607, %v1943
      %v2039 = vadd.f32 %v1609, %v1945
      %v2040 = vadd.f32 %v1612, %v1947
      %v2041 = vadd.f32 %v1614, %v1949
      %v2042 = vadd.f32 %v1617, %v1951
      %v2043 = vadd.f32 %v1619, %v1953
      %v2044 = vadd.f32 %v1622, %v1955
      %v2045 = vadd.f32 %v1624, %v1957
      %v2046 = vadd.f32 %v1627, %v1959
      %v2047 = vadd.f32 %v1629, %v1961
      %v2048 = vadd.f32 %v1632, %v1963
      %v2049 = vadd.f32 %v1634, %v1965
      %v2050 = vadd.f32 %v1637, %v1967
      %v2051 = vadd.f32 %v1639, %v1969
      %v2052 = vadd.f32 %v1642, %v1971
      %v2053 = vadd.f32 %v1644, %v1973
      %v2054 = vadd.f32 %v1647, %v1975
      %v2055 = vadd.f32 %v1649, %v1977
      %v2056 = vadd.f32 %v1652, %v1979
      %v2057 = vadd.f32 %v1654, %v1981
      %v2058 = vadd.f32 %v1657, %v1983
      %v2059 = vadd.f32 %v1659, %v1985
      %v2060 = vadd.f32 %v1662, %v1987
      %v2061 = vadd.f32 %v1664, %v1989
      %v2062 = vadd.f32 %v1667, %v1991
      %v2063 = vadd.f32 %v1669, %v1993
      %v2064 = vadd.f32 %v1672, %v1995
      %v2065 = vadd.f32 %v1674, %v1997
      %v2066 = vadd.f32 %v1677, %v1999
      %v2067 = vadd.f32 %v1679, %v2001
      %v2068 = vadd.f32 %v1682, %v2003
      %v2069 = vadd.f32 %v1684, %v2005
      %v2070 = vsel %vm685, 1, 0
      %v2071 = vsel %vm686, 1, 0
      %v2072 = vsel %vm687, 1, 0
      %v2073 = vsel %vm688, 1, 0
      %v2074 = vsel %vm689, 1, 0
      %v2075 = vsel %vm690, 1, 0
      %v2076 = vsel %vm691, 1, 0
      %v2077 = vsel %vm692, 1, 0
      %v2078 = vsel %vm693, 1, 0
      %v2079 = vsel %vm694, 1, 0
      %v2080 = vsel %vm695, 1, 0
      %v2081 = vsel %vm696, 1, 0
      %v2082 = vsel %vm697, 1, 0
      %v2083 = vsel %vm698, 1, 0
      %v2084 = vsel %vm699, 1, 0
      %v2085 = vsel %vm700, 1, 0
      %v2086 = vsel %vm701, 1, 0
      %v2087 = vsel %vm702, 1, 0
      %v2088 = vsel %vm703, 1, 0
      %v2089 = vsel %vm704, 1, 0
      %v2090 = vsel %vm705, 1, 0
      %v2091 = vsel %vm706, 1, 0
      %v2092 = vsel %vm707, 1, 0
      %v2093 = vsel %vm708, 1, 0
      %v2094 = vsel %vm709, 1, 0
      %v2095 = vsel %vm710, 1, 0
      %v2096 = vsel %vm711, 1, 0
      %v2097 = vsel %vm712, 1, 0
      %v2098 = vsel %vm713, 1, 0
      %v2099 = vsel %vm714, 1, 0
      %v2100 = vsel %vm715, 1, 0
      %v2101 = vsel %vm716, 1, 0
      %vm2102 = vcmp.eq.s32.totalorder %v2070, 1
      %vm2103 = vcmp.eq.s32.totalorder %v2071, 1
      %vm2104 = vcmp.eq.s32.totalorder %v2072, 1
      %vm2105 = vcmp.eq.s32.totalorder %v2073, 1
      %vm2106 = vcmp.eq.s32.totalorder %v2074, 1
      %vm2107 = vcmp.eq.s32.totalorder %v2075, 1
      %vm2108 = vcmp.eq.s32.totalorder %v2076, 1
      %vm2109 = vcmp.eq.s32.totalorder %v2077, 1
      %vm2110 = vcmp.eq.s32.totalorder %v2078, 1
      %vm2111 = vcmp.eq.s32.totalorder %v2079, 1
      %vm2112 = vcmp.eq.s32.totalorder %v2080, 1
      %vm2113 = vcmp.eq.s32.totalorder %v2081, 1
      %vm2114 = vcmp.eq.s32.totalorder %v2082, 1
      %vm2115 = vcmp.eq.s32.totalorder %v2083, 1
      %vm2116 = vcmp.eq.s32.totalorder %v2084, 1
      %vm2117 = vcmp.eq.s32.totalorder %v2085, 1
      %vm2118 = vcmp.eq.s32.totalorder %v2086, 1
      %vm2119 = vcmp.eq.s32.totalorder %v2087, 1
      %vm2120 = vcmp.eq.s32.totalorder %v2088, 1
      %vm2121 = vcmp.eq.s32.totalorder %v2089, 1
      %vm2122 = vcmp.eq.s32.totalorder %v2090, 1
      %vm2123 = vcmp.eq.s32.totalorder %v2091, 1
      %vm2124 = vcmp.eq.s32.totalorder %v2092, 1
      %vm2125 = vcmp.eq.s32.totalorder %v2093, 1
      %vm2126 = vcmp.eq.s32.totalorder %v2094, 1
      %vm2127 = vcmp.eq.s32.totalorder %v2095, 1
      %vm2128 = vcmp.eq.s32.totalorder %v2096, 1
      %vm2129 = vcmp.eq.s32.totalorder %v2097, 1
      %vm2130 = vcmp.eq.s32.totalorder %v2098, 1
      %vm2131 = vcmp.eq.s32.totalorder %v2099, 1
      %vm2132 = vcmp.eq.s32.totalorder %v2100, 1
      %vm2133 = vcmp.eq.s32.totalorder %v2101, 1
      %v2134 = vsel %vm2102, %v1779, %v1723
      %v2135 = vsel %vm2103, %v1781, %v1725
      %v2136 = vsel %vm2104, %v1719, %v1727
      %v2137 = vsel %vm2105, %v1721, %v1729
      %v2138 = vsel %vm2106, %v1723, %v1731
      %v2139 = vsel %vm2107, %v1725, %v1733
      %v2140 = vsel %vm2108, %v1727, %v1735
      %v2141 = vsel %vm2109, %v1729, %v1737
      %v2142 = vsel %vm2110, %v1731, %v1739
      %v2143 = vsel %vm2111, %v1733, %v1741
      %v2144 = vsel %vm2112, %v1735, %v1743
      %v2145 = vsel %vm2113, %v1737, %v1745
      %v2146 = vsel %vm2114, %v1739, %v1747
      %v2147 = vsel %vm2115, %v1741, %v1749
      %v2148 = vsel %vm2116, %v1743, %v1751
      %v2149 = vsel %vm2117, %v1745, %v1753
      %v2150 = vsel %vm2118, %v1747, %v1755
      %v2151 = vsel %vm2119, %v1749, %v1757
      %v2152 = vsel %vm2120, %v1751, %v1759
      %v2153 = vsel %vm2121, %v1753, %v1761
      %v2154 = vsel %vm2122, %v1755, %v1763
      %v2155 = vsel %vm2123, %v1757, %v1765
      %v2156 = vsel %vm2124, %v1759, %v1767
      %v2157 = vsel %vm2125, %v1761, %v1769
      %v2158 = vsel %vm2126, %v1763, %v1771
      %v2159 = vsel %vm2127, %v1765, %v1773
      %v2160 = vsel %vm2128, %v1767, %v1775
      %v2161 = vsel %vm2129, %v1769, %v1777
      %v2162 = vsel %vm2130, %v1771, %v1779
      %v2163 = vsel %vm2131, %v1773, %v1781
      %v2164 = vsel %vm2132, %v1775, %v1719
      %v2165 = vsel %vm2133, %v1777, %v1721
      %2198 = vrot.lane.b32.xlu0 %v2134, 4
      %v2199 = vpop.permute.xlu0 %2198
      %2200 = vrot.lane.b32.xlu0 %v2135, 4
      %v2201 = vpop.permute.xlu0 %2200
      %2202 = vrot.lane.b32.xlu0 %v2136, 4
      %v2203 = vpop.permute.xlu0 %2202
      %2204 = vrot.lane.b32.xlu0 %v2137, 4
      %v2205 = vpop.permute.xlu0 %2204
      %2206 = vrot.lane.b32.xlu0 %v2138, 4
      %v2207 = vpop.permute.xlu0 %2206
      %2208 = vrot.lane.b32.xlu0 %v2139, 4
      %v2209 = vpop.permute.xlu0 %2208
      %2210 = vrot.lane.b32.xlu0 %v2140, 4
      %v2211 = vpop.permute.xlu0 %2210
      %2212 = vrot.lane.b32.xlu0 %v2141, 4
      %v2213 = vpop.permute.xlu0 %2212
      %2214 = vrot.lane.b32.xlu0 %v2142, 4
      %v2215 = vpop.permute.xlu0 %2214
      %2216 = vrot.lane.b32.xlu0 %v2143, 4
      %v2217 = vpop.permute.xlu0 %2216
      %2218 = vrot.lane.b32.xlu0 %v2144, 4
      %v2219 = vpop.permute.xlu0 %2218
      %2220 = vrot.lane.b32.xlu0 %v2145, 4
      %v2221 = vpop.permute.xlu0 %2220
      %2222 = vrot.lane.b32.xlu0 %v2146, 4
      %v2223 = vpop.permute.xlu0 %2222
      %2224 = vrot.lane.b32.xlu0 %v2147, 4
      %v2225 = vpop.permute.xlu0 %2224
      %2226 = vrot.lane.b32.xlu0 %v2148, 4
      %v2227 = vpop.permute.xlu0 %2226
      %2228 = vrot.lane.b32.xlu0 %v2149, 4
      %v2229 = vpop.permute.xlu0 %2228
      %2230 = vrot.lane.b32.xlu0 %v2150, 4
      %v2231 = vpop.permute.xlu0 %2230
      %2232 = vrot.lane.b32.xlu0 %v2151, 4
      %v2233 = vpop.permute.xlu0 %2232
      %2234 = vrot.lane.b32.xlu0 %v2152, 4
      %v2235 = vpop.permute.xlu0 %2234
      %2236 = vrot.lane.b32.xlu0 %v2153, 4
      %v2237 = vpop.permute.xlu0 %2236
      %2238 = vrot.lane.b32.xlu0 %v2154, 4
      %v2239 = vpop.permute.xlu0 %2238
      %2240 = vrot.lane.b32.xlu0 %v2155, 4
      %v2241 = vpop.permute.xlu0 %2240
      %2242 = vrot.lane.b32.xlu0 %v2156, 4
      %v2243 = vpop.permute.xlu0 %2242
      %2244 = vrot.lane.b32.xlu0 %v2157, 4
      %v2245 = vpop.permute.xlu0 %2244
      %2246 = vrot.lane.b32.xlu0 %v2158, 4
      %v2247 = vpop.permute.xlu0 %2246
      %2248 = vrot.lane.b32.xlu0 %v2159, 4
      %v2249 = vpop.permute.xlu0 %2248
      %2250 = vrot.lane.b32.xlu0 %v2160, 4
      %v2251 = vpop.permute.xlu0 %2250
      %2252 = vrot.lane.b32.xlu0 %v2161, 4
      %v2253 = vpop.permute.xlu0 %2252
      %2254 = vrot.lane.b32.xlu0 %v2162, 4
      %v2255 = vpop.permute.xlu0 %2254
      %2256 = vrot.lane.b32.xlu0 %v2163, 4
      %v2257 = vpop.permute.xlu0 %2256
      %2258 = vrot.lane.b32.xlu0 %v2164, 4
      %v2259 = vpop.permute.xlu0 %2258
      %2260 = vrot.lane.b32.xlu0 %v2165, 4
      %v2261 = vpop.permute.xlu0 %2260
      %v2294 = vadd.f32 %v2038, %v2199
      %v2295 = vadd.f32 %v2039, %v2201
      %v2296 = vadd.f32 %v2040, %v2203
      %v2297 = vadd.f32 %v2041, %v2205
      %v2298 = vadd.f32 %v2042, %v2207
      %v2299 = vadd.f32 %v2043, %v2209
      %v2300 = vadd.f32 %v2044, %v2211
      %v2301 = vadd.f32 %v2045, %v2213
      %v2302 = vadd.f32 %v2046, %v2215
      %v2303 = vadd.f32 %v2047, %v2217
      %v2304 = vadd.f32 %v2048, %v2219
      %v2305 = vadd.f32 %v2049, %v2221
      %v2306 = vadd.f32 %v2050, %v2223
      %v2307 = vadd.f32 %v2051, %v2225
      %v2308 = vadd.f32 %v2052, %v2227
      %v2309 = vadd.f32 %v2053, %v2229
      %v2310 = vadd.f32 %v2054, %v2231
      %v2311 = vadd.f32 %v2055, %v2233
      %v2312 = vadd.f32 %v2056, %v2235
      %v2313 = vadd.f32 %v2057, %v2237
      %v2314 = vadd.f32 %v2058, %v2239
      %v2315 = vadd.f32 %v2059, %v2241
      %v2316 = vadd.f32 %v2060, %v2243
      %v2317 = vadd.f32 %v2061, %v2245
      %v2318 = vadd.f32 %v2062, %v2247
      %v2319 = vadd.f32 %v2063, %v2249
      %v2320 = vadd.f32 %v2064, %v2251
      %v2321 = vadd.f32 %v2065, %v2253
      %v2322 = vadd.f32 %v2066, %v2255
      %v2323 = vadd.f32 %v2067, %v2257
      %v2324 = vadd.f32 %v2068, %v2259
      %v2325 = vadd.f32 %v2069, %v2261
      %vm2326 = vcmask 64544
      %v2327 = vsel %vm2326, %v2294, 0.0
      %v2328 = vsel %vm2326, %v2295, 0.0
      %v2329 = vadd.f32 %v2327, %v2328
      %v2330 = vsel %vm2326, %v2296, 0.0
      %v2331 = vadd.f32 %v2329, %v2330
      %v2332 = vsel %vm2326, %v2297, 0.0
      %v2333 = vadd.f32 %v2331, %v2332
      %v2334 = vsel %vm2326, %v2298, 0.0
      %v2335 = vadd.f32 %v2333, %v2334
      %v2336 = vsel %vm2326, %v2299, 0.0
      %v2337 = vadd.f32 %v2335, %v2336
      %v2338 = vsel %vm2326, %v2300, 0.0
      %v2339 = vadd.f32 %v2337, %v2338
      %v2340 = vsel %vm2326, %v2301, 0.0
      %v2341 = vadd.f32 %v2339, %v2340
      %v2342 = vsel %vm2326, %v2302, 0.0
      %v2343 = vadd.f32 %v2341, %v2342
      %v2344 = vsel %vm2326, %v2303, 0.0
      %v2345 = vadd.f32 %v2343, %v2344
      %v2346 = vsel %vm2326, %v2304, 0.0
      %v2347 = vadd.f32 %v2345, %v2346
      %v2348 = vsel %vm2326, %v2305, 0.0
      %v2349 = vadd.f32 %v2347, %v2348
      %v2350 = vsel %vm2326, %v2306, 0.0
      %v2351 = vadd.f32 %v2349, %v2350
      %v2352 = vsel %vm2326, %v2307, 0.0
      %v2353 = vadd.f32 %v2351, %v2352
      %v2354 = vsel %vm2326, %v2308, 0.0
      %v2355 = vadd.f32 %v2353, %v2354
      %v2356 = vsel %vm2326, %v2309, 0.0
      %v2357 = vadd.f32 %v2355, %v2356
      %v2358 = vsel %vm2326, %v2310, 0.0
      %v2359 = vadd.f32 %v2357, %v2358
      %v2360 = vsel %vm2326, %v2311, 0.0
      %v2361 = vadd.f32 %v2359, %v2360
      %v2362 = vsel %vm2326, %v2312, 0.0
      %v2363 = vadd.f32 %v2361, %v2362
      %v2364 = vsel %vm2326, %v2313, 0.0
      %v2365 = vadd.f32 %v2363, %v2364
      %v2366 = vsel %vm2326, %v2314, 0.0
      %v2367 = vadd.f32 %v2365, %v2366
      %v2368 = vsel %vm2326, %v2315, 0.0
      %v2369 = vadd.f32 %v2367, %v2368
      %v2370 = vsel %vm2326, %v2316, 0.0
      %v2371 = vadd.f32 %v2369, %v2370
      %v2372 = vsel %vm2326, %v2317, 0.0
      %v2373 = vadd.f32 %v2371, %v2372
      %v2374 = vsel %vm2326, %v2318, 0.0
      %v2375 = vadd.f32 %v2373, %v2374
      %v2376 = vsel %vm2326, %v2319, 0.0
      %v2377 = vadd.f32 %v2375, %v2376
      %v2378 = vsel %vm2326, %v2320, 0.0
      %v2379 = vadd.f32 %v2377, %v2378
      %v2380 = vsel %vm2326, %v2321, 0.0
      %v2381 = vadd.f32 %v2379, %v2380
      %v2382 = vsel %vm2326, %v2322, 0.0
      %v2383 = vadd.f32 %v2381, %v2382
      %v2384 = vsel %vm2326, %v2323, 0.0
      %v2385 = vadd.f32 %v2383, %v2384
      %v2386 = vsel %vm2326, %v2324, 0.0
      %v2387 = vadd.f32 %v2385, %v2386
      %v2388 = vsel %vm2326, %v2325, 0.0
      %v2389 = vadd.f32 %v2387, %v2388
      %v2390 = vrot.slane %v2389, 4
      %v2391 = vadd.f32 %v2389, %v2390
      %v2392 = vrot.slane %v2391, 2
      %v2393 = vadd.f32 %v2391, %v2392
      %v2394 = vrot.slane %v2393, 1
      %v2395 = vadd.f32 %v2393, %v2394
      %v2396 = vmul.f32 %v2395, 0.00390625
      %v2397 = vmul.f32 %v2294, %v2294
      %v2398 = vmul.f32 %v2295, %v2295
      %v2399 = vmul.f32 %v2296, %v2296
      %v2400 = vmul.f32 %v2297, %v2297
      %v2401 = vmul.f32 %v2298, %v2298
      %v2402 = vmul.f32 %v2299, %v2299
      %v2403 = vmul.f32 %v2300, %v2300
      %v2404 = vmul.f32 %v2301, %v2301
      %v2405 = vmul.f32 %v2302, %v2302
      %v2406 = vmul.f32 %v2303, %v2303
      %v2407 = vmul.f32 %v2304, %v2304
      %v2408 = vmul.f32 %v2305, %v2305
      %v2409 = vmul.f32 %v2306, %v2306
      %v2410 = vmul.f32 %v2307, %v2307
      %v2411 = vmul.f32 %v2308, %v2308
      %v2412 = vmul.f32 %v2309, %v2309
      %v2413 = vmul.f32 %v2310, %v2310
      %v2414 = vmul.f32 %v2311, %v2311
      %v2415 = vmul.f32 %v2312, %v2312
      %v2416 = vmul.f32 %v2313, %v2313
      %v2417 = vmul.f32 %v2314, %v2314
      %v2418 = vmul.f32 %v2315, %v2315
      %v2419 = vmul.f32 %v2316, %v2316
      %v2420 = vmul.f32 %v2317, %v2317
      %v2421 = vmul.f32 %v2318, %v2318
      %v2422 = vmul.f32 %v2319, %v2319
      %v2423 = vmul.f32 %v2320, %v2320
      %v2424 = vmul.f32 %v2321, %v2321
      %v2425 = vmul.f32 %v2322, %v2322
      %v2426 = vmul.f32 %v2323, %v2323
      %v2427 = vmul.f32 %v2324, %v2324
      %v2428 = vmul.f32 %v2325, %v2325
      %v2429 = vsel %vm2326, %v2397, 0.0
      %v2430 = vsel %vm2326, %v2398, 0.0
      %v2431 = vadd.f32 %v2429, %v2430
      %v2432 = vsel %vm2326, %v2399, 0.0
      %v2433 = vadd.f32 %v2431, %v2432
      %v2434 = vsel %vm2326, %v2400, 0.0
      %v2435 = vadd.f32 %v2433, %v2434
      %v2436 = vsel %vm2326, %v2401, 0.0
      %v2437 = vadd.f32 %v2435, %v2436
      %v2438 = vsel %vm2326, %v2402, 0.0
      %v2439 = vadd.f32 %v2437, %v2438
      %v2440 = vsel %vm2326, %v2403, 0.0
      %v2441 = vadd.f32 %v2439, %v2440
      %v2442 = vsel %vm2326, %v2404, 0.0
      %v2443 = vadd.f32 %v2441, %v2442
      %v2444 = vsel %vm2326, %v2405, 0.0
      %v2445 = vadd.f32 %v2443, %v2444
      %v2446 = vsel %vm2326, %v2406, 0.0
      %v2447 = vadd.f32 %v2445, %v2446
      %v2448 = vsel %vm2326, %v2407, 0.0
      %v2449 = vadd.f32 %v2447, %v2448
      %v2450 = vsel %vm2326, %v2408, 0.0
      %v2451 = vadd.f32 %v2449, %v2450
      %v2452 = vsel %vm2326, %v2409, 0.0
      %v2453 = vadd.f32 %v2451, %v2452
      %v2454 = vsel %vm2326, %v2410, 0.0
      %v2455 = vadd.f32 %v2453, %v2454
      %v2456 = vsel %vm2326, %v2411, 0.0
      %v2457 = vadd.f32 %v2455, %v2456
      %v2458 = vsel %vm2326, %v2412, 0.0
      %v2459 = vadd.f32 %v2457, %v2458
      %v2460 = vsel %vm2326, %v2413, 0.0
      %v2461 = vadd.f32 %v2459, %v2460
      %v2462 = vsel %vm2326, %v2414, 0.0
      %v2463 = vadd.f32 %v2461, %v2462
      %v2464 = vsel %vm2326, %v2415, 0.0
      %v2465 = vadd.f32 %v2463, %v2464
      %v2466 = vsel %vm2326, %v2416, 0.0
      %v2467 = vadd.f32 %v2465, %v2466
      %v2468 = vsel %vm2326, %v2417, 0.0
      %v2469 = vadd.f32 %v2467, %v2468
      %v2470 = vsel %vm2326, %v2418, 0.0
      %v2471 = vadd.f32 %v2469, %v2470
      %v2472 = vsel %vm2326, %v2419, 0.0
      %v2473 = vadd.f32 %v2471, %v2472
      %v2474 = vsel %vm2326, %v2420, 0.0
      %v2475 = vadd.f32 %v2473, %v2474
      %v2476 = vsel %vm2326, %v2421, 0.0
      %v2477 = vadd.f32 %v2475, %v2476
      %v2478 = vsel %vm2326, %v2422, 0.0
      %v2479 = vadd.f32 %v2477, %v2478
      %v2480 = vsel %vm2326, %v2423, 0.0
      %v2481 = vadd.f32 %v2479, %v2480
      %v2482 = vsel %vm2326, %v2424, 0.0
      %v2483 = vadd.f32 %v2481, %v2482
      %v2484 = vsel %vm2326, %v2425, 0.0
      %v2485 = vadd.f32 %v2483, %v2484
      %v2486 = vsel %vm2326, %v2426, 0.0
      %v2487 = vadd.f32 %v2485, %v2486
      %v2488 = vsel %vm2326, %v2427, 0.0
      %v2489 = vadd.f32 %v2487, %v2488
      %v2490 = vsel %vm2326, %v2428, 0.0
      %v2491 = vadd.f32 %v2489, %v2490
      %v2492 = vrot.slane %v2491, 4
      %v2493 = vadd.f32 %v2491, %v2492
      %v2494 = vrot.slane %v2493, 2
      %v2495 = vadd.f32 %v2493, %v2494
      %v2496 = vrot.slane %v2495, 1
      %v2497 = vadd.f32 %v2495, %v2496
      %v2498 = vmul.f32 %v2497, 0.00390625
      %v2499 = vmul.f32 %v2396, %v2396
      %v2500 = vsub.f32 %v2498, %v2499
      %v2501 = vmax.f32 %v2500, 0.0
      %v2502 = vsub.f32 %v2294, %v2396
      %v2503 = vsub.f32 %v2295, %v2396
      %v2504 = vsub.f32 %v2296, %v2396
      %v2505 = vsub.f32 %v2297, %v2396
      %v2506 = vsub.f32 %v2298, %v2396
      %v2507 = vsub.f32 %v2299, %v2396
      %v2508 = vsub.f32 %v2300, %v2396
      %v2509 = vsub.f32 %v2301, %v2396
      %v2510 = vsub.f32 %v2302, %v2396
      %v2511 = vsub.f32 %v2303, %v2396
      %v2512 = vsub.f32 %v2304, %v2396
      %v2513 = vsub.f32 %v2305, %v2396
      %v2514 = vsub.f32 %v2306, %v2396
      %v2515 = vsub.f32 %v2307, %v2396
      %v2516 = vsub.f32 %v2308, %v2396
      %v2517 = vsub.f32 %v2309, %v2396
      %v2518 = vsub.f32 %v2310, %v2396
      %v2519 = vsub.f32 %v2311, %v2396
      %v2520 = vsub.f32 %v2312, %v2396
      %v2521 = vsub.f32 %v2313, %v2396
      %v2522 = vsub.f32 %v2314, %v2396
      %v2523 = vsub.f32 %v2315, %v2396
      %v2524 = vsub.f32 %v2316, %v2396
      %v2525 = vsub.f32 %v2317, %v2396
      %v2526 = vsub.f32 %v2318, %v2396
      %v2527 = vsub.f32 %v2319, %v2396
      %v2528 = vsub.f32 %v2320, %v2396
      %v2529 = vsub.f32 %v2321, %v2396
      %v2530 = vsub.f32 %v2322, %v2396
      %v2531 = vsub.f32 %v2323, %v2396
      %v2532 = vsub.f32 %v2324, %v2396
      %v2533 = vsub.f32 %v2325, %v2396
      %v2534 = vadd.f32 %v2501, 1e-05
      %v2535 = vrsqrt.pop %v2534
      %v2536 = vmul.f32 %v2535, %v2534
      %v2537 = vmul.f32 %v2536, %v2535
      %v2538 = vmul.f32 0.5, %v2537
      %v2539 = vsub.f32 1.5, %v2538
      %v2540 = vmul.f32 %v2535, %v2539
      %vm2541 = vweird.f32 %v2534
      %vm2542 = vweird.f32 %v2535
      %vm2543 = vmor %vm2541, %vm2542
      %v2544 = vsel %vm2543, %v2535, %v2540
      %v2545 = vmul.f32 %v2502, %v2544
      %v2546 = vmul.f32 %v2503, %v2544
      %v2547 = vmul.f32 %v2504, %v2544
      %v2548 = vmul.f32 %v2505, %v2544
      %v2549 = vmul.f32 %v2506, %v2544
      %v2550 = vmul.f32 %v2507, %v2544
      %v2551 = vmul.f32 %v2508, %v2544
      %v2552 = vmul.f32 %v2509, %v2544
      %v2553 = vmul.f32 %v2510, %v2544
      %v2554 = vmul.f32 %v2511, %v2544
      %v2555 = vmul.f32 %v2512, %v2544
      %v2556 = vmul.f32 %v2513, %v2544
      %v2557 = vmul.f32 %v2514, %v2544
      %v2558 = vmul.f32 %v2515, %v2544
      %v2559 = vmul.f32 %v2516, %v2544
      %v2560 = vmul.f32 %v2517, %v2544
      %v2561 = vmul.f32 %v2518, %v2544
      %v2562 = vmul.f32 %v2519, %v2544
      %v2563 = vmul.f32 %v2520, %v2544
      %v2564 = vmul.f32 %v2521, %v2544
      %v2565 = vmul.f32 %v2522, %v2544
      %v2566 = vmul.f32 %v2523, %v2544
      %v2567 = vmul.f32 %v2524, %v2544
      %v2568 = vmul.f32 %v2525, %v2544
      %v2569 = vmul.f32 %v2526, %v2544
      %v2570 = vmul.f32 %v2527, %v2544
      %v2571 = vmul.f32 %v2528, %v2544
      %v2572 = vmul.f32 %v2529, %v2544
      %v2573 = vmul.f32 %v2530, %v2544
      %v2574 = vmul.f32 %v2531, %v2544
      %v2575 = vmul.f32 %v2532, %v2544
      %v2576 = vmul.f32 %v2533, %v2544
      %v2577 = vmax.f32 %v2545, 0.0
      %v2578 = vmax.f32 %v2546, 0.0
      %v2579 = vmax.f32 %v2547, 0.0
      %v2580 = vmax.f32 %v2548, 0.0
      %v2581 = vmax.f32 %v2549, 0.0
      %v2582 = vmax.f32 %v2550, 0.0
      %v2583 = vmax.f32 %v2551, 0.0
      %v2584 = vmax.f32 %v2552, 0.0
      %v2585 = vmax.f32 %v2553, 0.0
      %v2586 = vmax.f32 %v2554, 0.0
      %v2587 = vmax.f32 %v2555, 0.0
      %v2588 = vmax.f32 %v2556, 0.0
      %v2589 = vmax.f32 %v2557, 0.0
      %v2590 = vmax.f32 %v2558, 0.0
      %v2591 = vmax.f32 %v2559, 0.0
      %v2592 = vmax.f32 %v2560, 0.0
      %v2593 = vmax.f32 %v2561, 0.0
      %v2594 = vmax.f32 %v2562, 0.0
      %v2595 = vmax.f32 %v2563, 0.0
      %v2596 = vmax.f32 %v2564, 0.0
      %v2597 = vmax.f32 %v2565, 0.0
      %v2598 = vmax.f32 %v2566, 0.0
      %v2599 = vmax.f32 %v2567, 0.0
      %v2600 = vmax.f32 %v2568, 0.0
      %v2601 = vmax.f32 %v2569, 0.0
      %v2602 = vmax.f32 %v2570, 0.0
      %v2603 = vmax.f32 %v2571, 0.0
      %v2604 = vmax.f32 %v2572, 0.0
      %v2605 = vmax.f32 %v2573, 0.0
      %v2606 = vmax.f32 %v2574, 0.0
      %v2607 = vmax.f32 %v2575, 0.0
      %v2608 = vmax.f32 %v2576, 0.0
      %2641 = vrot.lane.b32.xlu0 %v2577, 124
      %v2642 = vpop.permute.xlu0 %2641
      %2643 = vrot.lane.b32.xlu0 %v2578, 124
      %v2644 = vpop.permute.xlu0 %2643
      %2645 = vrot.lane.b32.xlu0 %v2579, 124
      %v2646 = vpop.permute.xlu0 %2645
      %2647 = vrot.lane.b32.xlu0 %v2580, 124
      %v2648 = vpop.permute.xlu0 %2647
      %2649 = vrot.lane.b32.xlu0 %v2581, 124
      %v2650 = vpop.permute.xlu0 %2649
      %2651 = vrot.lane.b32.xlu0 %v2582, 124
      %v2652 = vpop.permute.xlu0 %2651
      %2653 = vrot.lane.b32.xlu0 %v2583, 124
      %v2654 = vpop.permute.xlu0 %2653
      %2655 = vrot.lane.b32.xlu0 %v2584, 124
      %v2656 = vpop.permute.xlu0 %2655
      %2657 = vrot.lane.b32.xlu0 %v2585, 124
      %v2658 = vpop.permute.xlu0 %2657
      %2659 = vrot.lane.b32.xlu0 %v2586, 124
      %v2660 = vpop.permute.xlu0 %2659
      %2661 = vrot.lane.b32.xlu0 %v2587, 124
      %v2662 = vpop.permute.xlu0 %2661
      %2663 = vrot.lane.b32.xlu0 %v2588, 124
      %v2664 = vpop.permute.xlu0 %2663
      %2665 = vrot.lane.b32.xlu0 %v2589, 124
      %v2666 = vpop.permute.xlu0 %2665
      %2667 = vrot.lane.b32.xlu0 %v2590, 124
      %v2668 = vpop.permute.xlu0 %2667
      %2669 = vrot.lane.b32.xlu0 %v2591, 124
      %v2670 = vpop.permute.xlu0 %2669
      %2671 = vrot.lane.b32.xlu0 %v2592, 124
      %v2672 = vpop.permute.xlu0 %2671
      %2673 = vrot.lane.b32.xlu0 %v2593, 124
      %v2674 = vpop.permute.xlu0 %2673
      %2675 = vrot.lane.b32.xlu0 %v2594, 124
      %v2676 = vpop.permute.xlu0 %2675
      %2677 = vrot.lane.b32.xlu0 %v2595, 124
      %v2678 = vpop.permute.xlu0 %2677
      %2679 = vrot.lane.b32.xlu0 %v2596, 124
      %v2680 = vpop.permute.xlu0 %2679
      %2681 = vrot.lane.b32.xlu0 %v2597, 124
      %v2682 = vpop.permute.xlu0 %2681
      %2683 = vrot.lane.b32.xlu0 %v2598, 124
      %v2684 = vpop.permute.xlu0 %2683
      %2685 = vrot.lane.b32.xlu0 %v2599, 124
      %v2686 = vpop.permute.xlu0 %2685
      %2687 = vrot.lane.b32.xlu0 %v2600, 124
      %v2688 = vpop.permute.xlu0 %2687
      %2689 = vrot.lane.b32.xlu0 %v2601, 124
      %v2690 = vpop.permute.xlu0 %2689
      %2691 = vrot.lane.b32.xlu0 %v2602, 124
      %v2692 = vpop.permute.xlu0 %2691
      %2693 = vrot.lane.b32.xlu0 %v2603, 124
      %v2694 = vpop.permute.xlu0 %2693
      %2695 = vrot.lane.b32.xlu0 %v2604, 124
      %v2696 = vpop.permute.xlu0 %2695
      %2697 = vrot.lane.b32.xlu0 %v2605, 124
      %v2698 = vpop.permute.xlu0 %2697
      %2699 = vrot.lane.b32.xlu0 %v2606, 124
      %v2700 = vpop.permute.xlu0 %2699
      %2701 = vrot.lane.b32.xlu0 %v2607, 124
      %v2702 = vpop.permute.xlu0 %2701
      %2703 = vrot.lane.b32.xlu0 %v2608, 124
      %v2704 = vpop.permute.xlu0 %2703
      %v2737 = vrot.slane %v2642, 7
      %v2738 = vrot.slane %v2644, 7
      %v2739 = vrot.slane %v2646, 7
      %v2740 = vrot.slane %v2648, 7
      %v2741 = vrot.slane %v2650, 7
      %v2742 = vrot.slane %v2652, 7
      %v2743 = vrot.slane %v2654, 7
      %v2744 = vrot.slane %v2656, 7
      %v2745 = vrot.slane %v2658, 7
      %v2746 = vrot.slane %v2660, 7
      %v2747 = vrot.slane %v2662, 7
      %v2748 = vrot.slane %v2664, 7
      %v2749 = vrot.slane %v2666, 7
      %v2750 = vrot.slane %v2668, 7
      %v2751 = vrot.slane %v2670, 7
      %v2752 = vrot.slane %v2672, 7
      %v2753 = vrot.slane %v2674, 7
      %v2754 = vrot.slane %v2676, 7
      %v2755 = vrot.slane %v2678, 7
      %v2756 = vrot.slane %v2680, 7
      %v2757 = vrot.slane %v2682, 7
      %v2758 = vrot.slane %v2684, 7
      %v2759 = vrot.slane %v2686, 7
      %v2760 = vrot.slane %v2688, 7
      %v2761 = vrot.slane %v2690, 7
      %v2762 = vrot.slane %v2692, 7
      %v2763 = vrot.slane %v2694, 7
      %v2764 = vrot.slane %v2696, 7
      %v2765 = vrot.slane %v2698, 7
      %v2766 = vrot.slane %v2700, 7
      %v2767 = vrot.slane %v2702, 7
      %v2768 = vrot.slane %v2704, 7
      %v2769 = vsel %vm781, %v2767, %v2768
      %v2770 = vsel %vm781, %v2766, %v2767
      %v2771 = vsel %vm781, %v2765, %v2766
      %v2772 = vsel %vm781, %v2764, %v2765
      %v2773 = vsel %vm781, %v2763, %v2764
      %v2774 = vsel %vm781, %v2762, %v2763
      %v2775 = vsel %vm781, %v2761, %v2762
      %v2776 = vsel %vm781, %v2760, %v2761
      %v2777 = vsel %vm781, %v2759, %v2760
      %v2778 = vsel %vm781, %v2758, %v2759
      %v2779 = vsel %vm781, %v2757, %v2758
      %v2780 = vsel %vm781, %v2756, %v2757
      %v2781 = vsel %vm781, %v2755, %v2756
      %v2782 = vsel %vm781, %v2754, %v2755
      %v2783 = vsel %vm781, %v2753, %v2754
      %v2784 = vsel %vm781, %v2752, %v2753
      %v2785 = vsel %vm781, %v2751, %v2752
      %v2786 = vsel %vm781, %v2750, %v2751
      %v2787 = vsel %vm781, %v2749, %v2750
      %v2788 = vsel %vm781, %v2748, %v2749
      %v2789 = vsel %vm781, %v2747, %v2748
      %v2790 = vsel %vm781, %v2746, %v2747
      %v2791 = vsel %vm781, %v2745, %v2746
      %v2792 = vsel %vm781, %v2744, %v2745
      %v2793 = vsel %vm781, %v2743, %v2744
      %v2794 = vsel %vm781, %v2742, %v2743
      %v2795 = vsel %vm781, %v2741, %v2742
      %v2796 = vsel %vm781, %v2740, %v2741
      %v2797 = vsel %vm781, %v2739, %v2740
      %v2798 = vsel %vm781, %v2738, %v2739
      %v2799 = vsel %vm781, %v2737, %v2738
      %v2800 = vsel %vm781, %v2768, %v2737
      %v2801 = vrot.slane %v2642, 1
      %v2802 = vrot.slane %v2644, 1
      %v2803 = vrot.slane %v2646, 1
      %v2804 = vrot.slane %v2648, 1
      %v2805 = vrot.slane %v2650, 1
      %v2806 = vrot.slane %v2652, 1
      %v2807 = vrot.slane %v2654, 1
      %v2808 = vrot.slane %v2656, 1
      %v2809 = vrot.slane %v2658, 1
      %v2810 = vrot.slane %v2660, 1
      %v2811 = vrot.slane %v2662, 1
      %v2812 = vrot.slane %v2664, 1
      %v2813 = vrot.slane %v2666, 1
      %v2814 = vrot.slane %v2668, 1
      %v2815 = vrot.slane %v2670, 1
      %v2816 = vrot.slane %v2672, 1
      %v2817 = vrot.slane %v2674, 1
      %v2818 = vrot.slane %v2676, 1
      %v2819 = vrot.slane %v2678, 1
      %v2820 = vrot.slane %v2680, 1
      %v2821 = vrot.slane %v2682, 1
      %v2822 = vrot.slane %v2684, 1
      %v2823 = vrot.slane %v2686, 1
      %v2824 = vrot.slane %v2688, 1
      %v2825 = vrot.slane %v2690, 1
      %v2826 = vrot.slane %v2692, 1
      %v2827 = vrot.slane %v2694, 1
      %v2828 = vrot.slane %v2696, 1
      %v2829 = vrot.slane %v2698, 1
      %v2830 = vrot.slane %v2700, 1
      %v2831 = vrot.slane %v2702, 1
      %v2832 = vrot.slane %v2704, 1
      %v2833 = vsel %vm846, %v2831, %v2832
      %v2834 = vsel %vm846, %v2830, %v2831
      %v2835 = vsel %vm846, %v2829, %v2830
      %v2836 = vsel %vm846, %v2828, %v2829
      %v2837 = vsel %vm846, %v2827, %v2828
      %v2838 = vsel %vm846, %v2826, %v2827
      %v2839 = vsel %vm846, %v2825, %v2826
      %v2840 = vsel %vm846, %v2824, %v2825
      %v2841 = vsel %vm846, %v2823, %v2824
      %v2842 = vsel %vm846, %v2822, %v2823
      %v2843 = vsel %vm846, %v2821, %v2822
      %v2844 = vsel %vm846, %v2820, %v2821
      %v2845 = vsel %vm846, %v2819, %v2820
      %v2846 = vsel %vm846, %v2818, %v2819
      %v2847 = vsel %vm846, %v2817, %v2818
      %v2848 = vsel %vm846, %v2816, %v2817
      %v2849 = vsel %vm846, %v2815, %v2816
      %v2850 = vsel %vm846, %v2814, %v2815
      %v2851 = vsel %vm846, %v2813, %v2814
      %v2852 = vsel %vm846, %v2812, %v2813
      %v2853 = vsel %vm846, %v2811, %v2812
      %v2854 = vsel %vm846, %v2810, %v2811
      %v2855 = vsel %vm846, %v2809, %v2810
      %v2856 = vsel %vm846, %v2808, %v2809
      %v2857 = vsel %vm846, %v2807, %v2808
      %v2858 = vsel %vm846, %v2806, %v2807
      %v2859 = vsel %vm846, %v2805, %v2806
      %v2860 = vsel %vm846, %v2804, %v2805
      %v2861 = vsel %vm846, %v2803, %v2804
      %v2862 = vsel %vm846, %v2802, %v2803
      %v2863 = vsel %vm846, %v2801, %v2802
      %v2864 = vsel %vm846, %v2832, %v2801
      %v2865 = vsel %vm911, %v2863, %v2800
      %v2866 = vsel %vm912, %v2862, %v2799
      %v2867 = vsel %vm913, %v2861, %v2798
      %v2868 = vsel %vm914, %v2860, %v2797
      %v2869 = vsel %vm915, %v2859, %v2796
      %v2870 = vsel %vm916, %v2858, %v2795
      %v2871 = vsel %vm917, %v2857, %v2794
      %v2872 = vsel %vm918, %v2856, %v2793
      %v2873 = vsel %vm919, %v2855, %v2792
      %v2874 = vsel %vm920, %v2854, %v2791
      %v2875 = vsel %vm921, %v2853, %v2790
      %v2876 = vsel %vm922, %v2852, %v2789
      %v2877 = vsel %vm923, %v2851, %v2788
      %v2878 = vsel %vm924, %v2850, %v2787
      %v2879 = vsel %vm925, %v2849, %v2786
      %v2880 = vsel %vm926, %v2848, %v2785
      %v2881 = vsel %vm927, %v2847, %v2784
      %v2882 = vsel %vm928, %v2846, %v2783
      %v2883 = vsel %vm929, %v2845, %v2782
      %v2884 = vsel %vm930, %v2844, %v2781
      %v2885 = vsel %vm931, %v2843, %v2780
      %v2886 = vsel %vm932, %v2842, %v2779
      %v2887 = vsel %vm933, %v2841, %v2778
      %v2888 = vsel %vm934, %v2840, %v2777
      %v2889 = vsel %vm935, %v2839, %v2776
      %v2890 = vsel %vm936, %v2838, %v2775
      %v2891 = vsel %vm937, %v2837, %v2774
      %v2892 = vsel %vm938, %v2836, %v2773
      %v2893 = vsel %vm939, %v2835, %v2772
      %v2894 = vsel %vm940, %v2834, %v2771
      %v2895 = vsel %vm941, %v2833, %v2770
      %v2896 = vsel %vm942, %v2864, %v2769
      %v2897 = vsel %vm1007, %v2800, %v2863
      %v2898 = vsel %vm1008, %v2799, %v2862
      %v2899 = vsel %vm1009, %v2798, %v2861
      %v2900 = vsel %vm1010, %v2797, %v2860
      %v2901 = vsel %vm1011, %v2796, %v2859
      %v2902 = vsel %vm1012, %v2795, %v2858
      %v2903 = vsel %vm1013, %v2794, %v2857
      %v2904 = vsel %vm1014, %v2793, %v2856
      %v2905 = vsel %vm1015, %v2792, %v2855
      %v2906 = vsel %vm1016, %v2791, %v2854
      %v2907 = vsel %vm1017, %v2790, %v2853
      %v2908 = vsel %vm1018, %v2789, %v2852
      %v2909 = vsel %vm1019, %v2788, %v2851
      %v2910 = vsel %vm1020, %v2787, %v2850
      %v2911 = vsel %vm1021, %v2786, %v2849
      %v2912 = vsel %vm1022, %v2785, %v2848
      %v2913 = vsel %vm1023, %v2784, %v2847
      %v2914 = vsel %vm1024, %v2783, %v2846
      %v2915 = vsel %vm1025, %v2782, %v2845
      %v2916 = vsel %vm1026, %v2781, %v2844
      %v2917 = vsel %vm1027, %v2780, %v2843
      %v2918 = vsel %vm1028, %v2779, %v2842
      %v2919 = vsel %vm1029, %v2778, %v2841
      %v2920 = vsel %vm1030, %v2777, %v2840
      %v2921 = vsel %vm1031, %v2776, %v2839
      %v2922 = vsel %vm1032, %v2775, %v2838
      %v2923 = vsel %vm1033, %v2774, %v2837
      %v2924 = vsel %vm1034, %v2773, %v2836
      %v2925 = vsel %vm1035, %v2772, %v2835
      %v2926 = vsel %vm1036, %v2771, %v2834
      %v2927 = vsel %vm1037, %v2770, %v2833
      %v2928 = vsel %vm1038, %v2769, %v2864
      %v2929 = vpack.c.bf16 %v2865, %v2865
      %v2930 = vpack.c.bf16 %v2866, %v2866
      %v2931 = vpack.c.bf16 %v2867, %v2867
      %v2932 = vpack.c.bf16 %v2868, %v2868
      %v2933 = vpack.c.bf16 %v2869, %v2869
      %v2934 = vpack.c.bf16 %v2870, %v2870
      %v2935 = vpack.c.bf16 %v2871, %v2871
      %v2936 = vpack.c.bf16 %v2872, %v2872
      %v2937 = vpack.c.bf16 %v2873, %v2873
      %v2938 = vpack.c.bf16 %v2874, %v2874
      %v2939 = vpack.c.bf16 %v2875, %v2875
      %v2940 = vpack.c.bf16 %v2876, %v2876
      %v2941 = vpack.c.bf16 %v2877, %v2877
      %v2942 = vpack.c.bf16 %v2878, %v2878
      %v2943 = vpack.c.bf16 %v2879, %v2879
      %v2944 = vpack.c.bf16 %v2880, %v2880
      %v2945 = vpack.c.bf16 %v2881, %v2881
      %v2946 = vpack.c.bf16 %v2882, %v2882
      %v2947 = vpack.c.bf16 %v2883, %v2883
      %v2948 = vpack.c.bf16 %v2884, %v2884
      %v2949 = vpack.c.bf16 %v2885, %v2885
      %v2950 = vpack.c.bf16 %v2886, %v2886
      %v2951 = vpack.c.bf16 %v2887, %v2887
      %v2952 = vpack.c.bf16 %v2888, %v2888
      %v2953 = vpack.c.bf16 %v2889, %v2889
      %v2954 = vpack.c.bf16 %v2890, %v2890
      %v2955 = vpack.c.bf16 %v2891, %v2891
      %v2956 = vpack.c.bf16 %v2892, %v2892
      %v2957 = vpack.c.bf16 %v2893, %v2893
      %v2958 = vpack.c.bf16 %v2894, %v2894
      %v2959 = vpack.c.bf16 %v2895, %v2895
      %v2960 = vpack.c.bf16 %v2896, %v2896
      %v2961 = vpack.c.bf16 %v2577, %v2577
      %v2962 = vpack.c.bf16 %v2578, %v2578
      %v2963 = vpack.c.bf16 %v2579, %v2579
      %v2964 = vpack.c.bf16 %v2580, %v2580
      %v2965 = vpack.c.bf16 %v2581, %v2581
      %v2966 = vpack.c.bf16 %v2582, %v2582
      %v2967 = vpack.c.bf16 %v2583, %v2583
      %v2968 = vpack.c.bf16 %v2584, %v2584
      %v2969 = vpack.c.bf16 %v2585, %v2585
      %v2970 = vpack.c.bf16 %v2586, %v2586
      %v2971 = vpack.c.bf16 %v2587, %v2587
      %v2972 = vpack.c.bf16 %v2588, %v2588
      %v2973 = vpack.c.bf16 %v2589, %v2589
      %v2974 = vpack.c.bf16 %v2590, %v2590
      %v2975 = vpack.c.bf16 %v2591, %v2591
      %v2976 = vpack.c.bf16 %v2592, %v2592
      %v2977 = vpack.c.bf16 %v2593, %v2593
      %v2978 = vpack.c.bf16 %v2594, %v2594
      %v2979 = vpack.c.bf16 %v2595, %v2595
      %v2980 = vpack.c.bf16 %v2596, %v2596
      %v2981 = vpack.c.bf16 %v2597, %v2597
      %v2982 = vpack.c.bf16 %v2598, %v2598
      %v2983 = vpack.c.bf16 %v2599, %v2599
      %v2984 = vpack.c.bf16 %v2600, %v2600
      %v2985 = vpack.c.bf16 %v2601, %v2601
      %v2986 = vpack.c.bf16 %v2602, %v2602
      %v2987 = vpack.c.bf16 %v2603, %v2603
      %v2988 = vpack.c.bf16 %v2604, %v2604
      %v2989 = vpack.c.bf16 %v2605, %v2605
      %v2990 = vpack.c.bf16 %v2606, %v2606
      %v2991 = vpack.c.bf16 %v2607, %v2607
      %v2992 = vpack.c.bf16 %v2608, %v2608
      %v2993 = vpack.c.bf16 %v2897, %v2897
      %v2994 = vpack.c.bf16 %v2898, %v2898
      %v2995 = vpack.c.bf16 %v2899, %v2899
      %v2996 = vpack.c.bf16 %v2900, %v2900
      %v2997 = vpack.c.bf16 %v2901, %v2901
      %v2998 = vpack.c.bf16 %v2902, %v2902
      %v2999 = vpack.c.bf16 %v2903, %v2903
      %v3000 = vpack.c.bf16 %v2904, %v2904
      %v3001 = vpack.c.bf16 %v2905, %v2905
      %v3002 = vpack.c.bf16 %v2906, %v2906
      %v3003 = vpack.c.bf16 %v2907, %v2907
      %v3004 = vpack.c.bf16 %v2908, %v2908
      %v3005 = vpack.c.bf16 %v2909, %v2909
      %v3006 = vpack.c.bf16 %v2910, %v2910
      %v3007 = vpack.c.bf16 %v2911, %v2911
      %v3008 = vpack.c.bf16 %v2912, %v2912
      %v3009 = vpack.c.bf16 %v2913, %v2913
      %v3010 = vpack.c.bf16 %v2914, %v2914
      %v3011 = vpack.c.bf16 %v2915, %v2915
      %v3012 = vpack.c.bf16 %v2916, %v2916
      %v3013 = vpack.c.bf16 %v2917, %v2917
      %v3014 = vpack.c.bf16 %v2918, %v2918
      %v3015 = vpack.c.bf16 %v2919, %v2919
      %v3016 = vpack.c.bf16 %v2920, %v2920
      %v3017 = vpack.c.bf16 %v2921, %v2921
      %v3018 = vpack.c.bf16 %v2922, %v2922
      %v3019 = vpack.c.bf16 %v2923, %v2923
      %v3020 = vpack.c.bf16 %v2924, %v2924
      %v3021 = vpack.c.bf16 %v2925, %v2925
      %v3022 = vpack.c.bf16 %v2926, %v2926
      %v3023 = vpack.c.bf16 %v2927, %v2927
      %v3024 = vpack.c.bf16 %v2928, %v2928
      %v3057 = vunpack.c.l.b16 %v2929
      %v3058 = vunpack.c.l.b16 %v2930
      %v3059 = vunpack.c.l.b16 %v2931
      %v3060 = vunpack.c.l.b16 %v2932
      %v3061 = vunpack.c.l.b16 %v2933
      %v3062 = vunpack.c.l.b16 %v2934
      %v3063 = vunpack.c.l.b16 %v2935
      %v3064 = vunpack.c.l.b16 %v2936
      %v3065 = vunpack.c.l.b16 %v2937
      %v3066 = vunpack.c.l.b16 %v2938
      %v3067 = vunpack.c.l.b16 %v2939
      %v3068 = vunpack.c.l.b16 %v2940
      %v3069 = vunpack.c.l.b16 %v2941
      %v3070 = vunpack.c.l.b16 %v2942
      %v3071 = vunpack.c.l.b16 %v2943
      %v3072 = vunpack.c.l.b16 %v2944
      %v3073 = vunpack.c.l.b16 %v2945
      %v3074 = vunpack.c.l.b16 %v2946
      %v3075 = vunpack.c.l.b16 %v2947
      %v3076 = vunpack.c.l.b16 %v2948
      %v3077 = vunpack.c.l.b16 %v2949
      %v3078 = vunpack.c.l.b16 %v2950
      %v3079 = vunpack.c.l.b16 %v2951
      %v3080 = vunpack.c.l.b16 %v2952
      %v3081 = vunpack.c.l.b16 %v2953
      %v3082 = vunpack.c.l.b16 %v2954
      %v3083 = vunpack.c.l.b16 %v2955
      %v3084 = vunpack.c.l.b16 %v2956
      %v3085 = vunpack.c.l.b16 %v2957
      %v3086 = vunpack.c.l.b16 %v2958
      %v3087 = vunpack.c.l.b16 %v2959
      %v3088 = vunpack.c.l.b16 %v2960
      %v3089 = vpack.c.b16 %v3058, %v3057
      %v3090 = vpack.c.b16 %v3060, %v3059
      %v3091 = vpack.c.b16 %v3062, %v3061
      %v3092 = vpack.c.b16 %v3064, %v3063
      %v3093 = vpack.c.b16 %v3066, %v3065
      %v3094 = vpack.c.b16 %v3068, %v3067
      %v3095 = vpack.c.b16 %v3070, %v3069
      %v3096 = vpack.c.b16 %v3072, %v3071
      %v3097 = vpack.c.b16 %v3074, %v3073
      %v3098 = vpack.c.b16 %v3076, %v3075
      %v3099 = vpack.c.b16 %v3078, %v3077
      %v3100 = vpack.c.b16 %v3080, %v3079
      %v3101 = vpack.c.b16 %v3082, %v3081
      %v3102 = vpack.c.b16 %v3084, %v3083
      %v3103 = vpack.c.b16 %v3086, %v3085
      %v3104 = vpack.c.b16 %v3088, %v3087
      %v3137 = vunpack.c.l.b16 %v2961
      %v3138 = vunpack.c.l.b16 %v2962
      %v3139 = vunpack.c.l.b16 %v2963
      %v3140 = vunpack.c.l.b16 %v2964
      %v3141 = vunpack.c.l.b16 %v2965
      %v3142 = vunpack.c.l.b16 %v2966
      %v3143 = vunpack.c.l.b16 %v2967
      %v3144 = vunpack.c.l.b16 %v2968
      %v3145 = vunpack.c.l.b16 %v2969
      %v3146 = vunpack.c.l.b16 %v2970
      %v3147 = vunpack.c.l.b16 %v2971
      %v3148 = vunpack.c.l.b16 %v2972
      %v3149 = vunpack.c.l.b16 %v2973
      %v3150 = vunpack.c.l.b16 %v2974
      %v3151 = vunpack.c.l.b16 %v2975
      %v3152 = vunpack.c.l.b16 %v2976
      %v3153 = vunpack.c.l.b16 %v2977
      %v3154 = vunpack.c.l.b16 %v2978
      %v3155 = vunpack.c.l.b16 %v2979
      %v3156 = vunpack.c.l.b16 %v2980
      %v3157 = vunpack.c.l.b16 %v2981
      %v3158 = vunpack.c.l.b16 %v2982
      %v3159 = vunpack.c.l.b16 %v2983
      %v3160 = vunpack.c.l.b16 %v2984
      %v3161 = vunpack.c.l.b16 %v2985
      %v3162 = vunpack.c.l.b16 %v2986
      %v3163 = vunpack.c.l.b16 %v2987
      %v3164 = vunpack.c.l.b16 %v2988
      %v3165 = vunpack.c.l.b16 %v2989
      %v3166 = vunpack.c.l.b16 %v2990
      %v3167 = vunpack.c.l.b16 %v2991
      %v3168 = vunpack.c.l.b16 %v2992
      %v3169 = vpack.c.b16 %v3138, %v3137
      %v3170 = vpack.c.b16 %v3140, %v3139
      %v3171 = vpack.c.b16 %v3142, %v3141
      %v3172 = vpack.c.b16 %v3144, %v3143
      %v3173 = vpack.c.b16 %v3146, %v3145
      %v3174 = vpack.c.b16 %v3148, %v3147
      %v3175 = vpack.c.b16 %v3150, %v3149
      %v3176 = vpack.c.b16 %v3152, %v3151
      %v3177 = vpack.c.b16 %v3154, %v3153
      %v3178 = vpack.c.b16 %v3156, %v3155
      %v3179 = vpack.c.b16 %v3158, %v3157
      %v3180 = vpack.c.b16 %v3160, %v3159
      %v3181 = vpack.c.b16 %v3162, %v3161
      %v3182 = vpack.c.b16 %v3164, %v3163
      %v3183 = vpack.c.b16 %v3166, %v3165
      %v3184 = vpack.c.b16 %v3168, %v3167
      %v3217 = vunpack.c.l.b16 %v2993
      %v3218 = vunpack.c.l.b16 %v2994
      %v3219 = vunpack.c.l.b16 %v2995
      %v3220 = vunpack.c.l.b16 %v2996
      %v3221 = vunpack.c.l.b16 %v2997
      %v3222 = vunpack.c.l.b16 %v2998
      %v3223 = vunpack.c.l.b16 %v2999
      %v3224 = vunpack.c.l.b16 %v3000
      %v3225 = vunpack.c.l.b16 %v3001
      %v3226 = vunpack.c.l.b16 %v3002
      %v3227 = vunpack.c.l.b16 %v3003
      %v3228 = vunpack.c.l.b16 %v3004
      %v3229 = vunpack.c.l.b16 %v3005
      %v3230 = vunpack.c.l.b16 %v3006
      %v3231 = vunpack.c.l.b16 %v3007
      %v3232 = vunpack.c.l.b16 %v3008
      %v3233 = vunpack.c.l.b16 %v3009
      %v3234 = vunpack.c.l.b16 %v3010
      %v3235 = vunpack.c.l.b16 %v3011
      %v3236 = vunpack.c.l.b16 %v3012
      %v3237 = vunpack.c.l.b16 %v3013
      %v3238 = vunpack.c.l.b16 %v3014
      %v3239 = vunpack.c.l.b16 %v3015
      %v3240 = vunpack.c.l.b16 %v3016
      %v3241 = vunpack.c.l.b16 %v3017
      %v3242 = vunpack.c.l.b16 %v3018
      %v3243 = vunpack.c.l.b16 %v3019
      %v3244 = vunpack.c.l.b16 %v3020
      %v3245 = vunpack.c.l.b16 %v3021
      %v3246 = vunpack.c.l.b16 %v3022
      %v3247 = vunpack.c.l.b16 %v3023
      %v3248 = vunpack.c.l.b16 %v3024
      %v3249 = vpack.c.b16 %v3218, %v3217
      %v3250 = vpack.c.b16 %v3220, %v3219
      %v3251 = vpack.c.b16 %v3222, %v3221
      %v3252 = vpack.c.b16 %v3224, %v3223
      %v3253 = vpack.c.b16 %v3226, %v3225
      %v3254 = vpack.c.b16 %v3228, %v3227
      %v3255 = vpack.c.b16 %v3230, %v3229
      %v3256 = vpack.c.b16 %v3232, %v3231
      %v3257 = vpack.c.b16 %v3234, %v3233
      %v3258 = vpack.c.b16 %v3236, %v3235
      %v3259 = vpack.c.b16 %v3238, %v3237
      %v3260 = vpack.c.b16 %v3240, %v3239
      %v3261 = vpack.c.b16 %v3242, %v3241
      %v3262 = vpack.c.b16 %v3244, %v3243
      %v3263 = vpack.c.b16 %v3246, %v3245
      %v3264 = vpack.c.b16 %v3248, %v3247
      %3265 = vrot.lane.b32.xlu0 %v3249, 8
      %v3266 = vpop.permute.xlu0 %3265
      %3267 = vrot.lane.b32.xlu0 %v3250, 8
      %v3268 = vpop.permute.xlu0 %3267
      %3269 = vrot.lane.b32.xlu0 %v3251, 8
      %v3270 = vpop.permute.xlu0 %3269
      %3271 = vrot.lane.b32.xlu0 %v3252, 8
      %v3272 = vpop.permute.xlu0 %3271
      %3273 = vrot.lane.b32.xlu0 %v3253, 8
      %v3274 = vpop.permute.xlu0 %3273
      %3275 = vrot.lane.b32.xlu0 %v3254, 8
      %v3276 = vpop.permute.xlu0 %3275
      %3277 = vrot.lane.b32.xlu0 %v3255, 8
      %v3278 = vpop.permute.xlu0 %3277
      %3279 = vrot.lane.b32.xlu0 %v3256, 8
      %v3280 = vpop.permute.xlu0 %3279
      %3281 = vrot.lane.b32.xlu0 %v3257, 8
      %v3282 = vpop.permute.xlu0 %3281
      %3283 = vrot.lane.b32.xlu0 %v3258, 8
      %v3284 = vpop.permute.xlu0 %3283
      %3285 = vrot.lane.b32.xlu0 %v3259, 8
      %v3286 = vpop.permute.xlu0 %3285
      %3287 = vrot.lane.b32.xlu0 %v3260, 8
      %v3288 = vpop.permute.xlu0 %3287
      %3289 = vrot.lane.b32.xlu0 %v3261, 8
      %v3290 = vpop.permute.xlu0 %3289
      %3291 = vrot.lane.b32.xlu0 %v3262, 8
      %v3292 = vpop.permute.xlu0 %3291
      %3293 = vrot.lane.b32.xlu0 %v3263, 8
      %v3294 = vpop.permute.xlu0 %3293
      %3295 = vrot.lane.b32.xlu0 %v3264, 8
      %v3296 = vpop.permute.xlu0 %3295
      %v3299 = vsel %vm1471, %v3089, %v3169
      %v3302 = vsel %vm1471, %v3090, %v3170
      %v3305 = vsel %vm1471, %v3091, %v3171
      %v3308 = vsel %vm1471, %v3092, %v3172
      %v3311 = vsel %vm1471, %v3093, %v3173
      %v3314 = vsel %vm1471, %v3094, %v3174
      %v3317 = vsel %vm1471, %v3095, %v3175
      %v3320 = vsel %vm1471, %v3096, %v3176
      %v3323 = vsel %vm1471, %v3097, %v3177
      %v3326 = vsel %vm1471, %v3098, %v3178
      %v3329 = vsel %vm1471, %v3099, %v3179
      %v3332 = vsel %vm1471, %v3100, %v3180
      %v3335 = vsel %vm1471, %v3101, %v3181
      %v3338 = vsel %vm1471, %v3102, %v3182
      %v3341 = vsel %vm1471, %v3103, %v3183
      %v3344 = vsel %vm1471, %v3104, %v3184
      %v3346 = vsel %vm1520, %v3299, %v3266
      %v3348 = vsel %vm1520, %v3302, %v3268
      %v3350 = vsel %vm1520, %v3305, %v3270
      %v3352 = vsel %vm1520, %v3308, %v3272
      %v3354 = vsel %vm1520, %v3311, %v3274
      %v3356 = vsel %vm1520, %v3314, %v3276
      %v3358 = vsel %vm1520, %v3317, %v3278
      %v3360 = vsel %vm1520, %v3320, %v3280
      %v3362 = vsel %vm1520, %v3323, %v3282
      %v3364 = vsel %vm1520, %v3326, %v3284
      %v3366 = vsel %vm1520, %v3329, %v3286
      %v3368 = vsel %vm1520, %v3332, %v3288
      %v3370 = vsel %vm1520, %v3335, %v3290
      %v3372 = vsel %vm1520, %v3338, %v3292
      %v3374 = vsel %vm1520, %v3341, %v3294
      %v3376 = vsel %vm1520, %v3344, %v3296
      %v3377 = vld [vmem:[%s2] sm:$0xf]
      %v3378 = vld [vmem:[%s2 + $0x4] sm:$0x3]
      %v3381 = vunpack.c.l.b16 %v3377
      %v3382 = vunpack.c.l.b16 %v3378
      %v3383 = vpack.c.b16 %v3382, %v3381
      %v3384 = vsel %vm1560, %v3346, 0
      %v3386 = vsel %vm1560, %v3348, 0
      %v3388 = vsel %vm1560, %v3350, 0
      %v3390 = vsel %vm1560, %v3352, 0
      %v3392 = vsel %vm1560, %v3354, 0
      %v3394 = vsel %vm1560, %v3356, 0
      %v3396 = vsel %vm1560, %v3358, 0
      %v3398 = vsel %vm1560, %v3360, 0
      %v3400 = vsel %vm1560, %v3362, 0
      %v3402 = vsel %vm1560, %v3364, 0
      %v3404 = vsel %vm1560, %v3366, 0
      %v3406 = vsel %vm1560, %v3368, 0
      %v3408 = vsel %vm1560, %v3370, 0
      %v3410 = vsel %vm1560, %v3372, 0
      %v3412 = vsel %vm1560, %v3374, 0
      %v3414 = vsel %vm1560, %v3376, 0
      %v3417 = vsel %vm1593, %v3383, 0
      %3419 = vmatpush.bf16.msra.mxu0 0
      %3420 = vmatpush.bf16.msra.mxu0 0
      %3421 = vmatpush.bf16.msra.mxu0 0
      %3422 = vmatpush.bf16.msra.mxu0 0
      %3423 = vmatpush.bf16.msra.mxu0 0
      %3424 = vmatpush.bf16.msra.mxu0 0
      %3425 = vmatpush.bf16.msra.mxu0 0
      %3426 = vmatpush.bf16.msra.mxu0 %v3417
      %3427 = vmatmul.bf16.gmra.mxu0 %v3384
      %v3428 = vpop.f32.mrf.mxu0
      %v3429 = vadd.f32 0.0, %v3428
      %v3430 = vpop.f32.mrf.mxu0
      %v3431 = vadd.f32 0.0, %v3430
      %3432 = vmatmul.bf16.gmra.mxu0 %v3386
      %v3433 = vpop.f32.mrf.mxu0
      %v3434 = vadd.f32 0.0, %v3433
      %v3435 = vpop.f32.mrf.mxu0
      %v3436 = vadd.f32 0.0, %v3435
      %3437 = vmatmul.bf16.gmra.mxu0 %v3388
      %v3438 = vpop.f32.mrf.mxu0
      %v3439 = vadd.f32 0.0, %v3438
      %v3440 = vpop.f32.mrf.mxu0
      %v3441 = vadd.f32 0.0, %v3440
      %3442 = vmatmul.bf16.gmra.mxu0 %v3390
      %v3443 = vpop.f32.mrf.mxu0
      %v3444 = vadd.f32 0.0, %v3443
      %v3445 = vpop.f32.mrf.mxu0
      %v3446 = vadd.f32 0.0, %v3445
      %3447 = vmatmul.bf16.gmra.mxu0 %v3392
      %v3448 = vpop.f32.mrf.mxu0
      %v3449 = vadd.f32 0.0, %v3448
      %v3450 = vpop.f32.mrf.mxu0
      %v3451 = vadd.f32 0.0, %v3450
      %3452 = vmatmul.bf16.gmra.mxu0 %v3394
      %v3453 = vpop.f32.mrf.mxu0
      %v3454 = vadd.f32 0.0, %v3453
      %v3455 = vpop.f32.mrf.mxu0
      %v3456 = vadd.f32 0.0, %v3455
      %3457 = vmatmul.bf16.gmra.mxu0 %v3396
      %v3458 = vpop.f32.mrf.mxu0
      %v3459 = vadd.f32 0.0, %v3458
      %v3460 = vpop.f32.mrf.mxu0
      %v3461 = vadd.f32 0.0, %v3460
      %3462 = vmatmul.bf16.gmra.mxu0 %v3398
      %v3463 = vpop.f32.mrf.mxu0
      %v3464 = vadd.f32 0.0, %v3463
      %v3465 = vpop.f32.mrf.mxu0
      %v3466 = vadd.f32 0.0, %v3465
      %3467 = vmatmul.bf16.gmra.mxu0 %v3400
      %v3468 = vpop.f32.mrf.mxu0
      %v3469 = vadd.f32 0.0, %v3468
      %v3470 = vpop.f32.mrf.mxu0
      %v3471 = vadd.f32 0.0, %v3470
      %3472 = vmatmul.bf16.gmra.mxu0 %v3402
      %v3473 = vpop.f32.mrf.mxu0
      %v3474 = vadd.f32 0.0, %v3473
      %v3475 = vpop.f32.mrf.mxu0
      %v3476 = vadd.f32 0.0, %v3475
      %3477 = vmatmul.bf16.gmra.mxu0 %v3404
      %v3478 = vpop.f32.mrf.mxu0
      %v3479 = vadd.f32 0.0, %v3478
      %v3480 = vpop.f32.mrf.mxu0
      %v3481 = vadd.f32 0.0, %v3480
      %3482 = vmatmul.bf16.gmra.mxu0 %v3406
      %v3483 = vpop.f32.mrf.mxu0
      %v3484 = vadd.f32 0.0, %v3483
      %v3485 = vpop.f32.mrf.mxu0
      %v3486 = vadd.f32 0.0, %v3485
      %3487 = vmatmul.bf16.gmra.mxu0 %v3408
      %v3488 = vpop.f32.mrf.mxu0
      %v3489 = vadd.f32 0.0, %v3488
      %v3490 = vpop.f32.mrf.mxu0
      %v3491 = vadd.f32 0.0, %v3490
      %3492 = vmatmul.bf16.gmra.mxu0 %v3410
      %v3493 = vpop.f32.mrf.mxu0
      %v3494 = vadd.f32 0.0, %v3493
      %v3495 = vpop.f32.mrf.mxu0
      %v3496 = vadd.f32 0.0, %v3495
      %3497 = vmatmul.bf16.gmra.mxu0 %v3412
      %v3498 = vpop.f32.mrf.mxu0
      %v3499 = vadd.f32 0.0, %v3498
      %v3500 = vpop.f32.mrf.mxu0
      %v3501 = vadd.f32 0.0, %v3500
      %3502 = vmatmul.bf16.gmra.mxu0 %v3414
      %v3503 = vpop.f32.mrf.mxu0
      %v3504 = vadd.f32 0.0, %v3503
      %v3505 = vpop.f32.mrf.mxu0
      %v3506 = vadd.f32 0.0, %v3505
      %3507 = vdwg.mxu0
      %3540 = vrot.lane.b32.xlu0 %v3429, 120
      %v3541 = vpop.permute.xlu0 %3540
      %3542 = vrot.lane.b32.xlu0 %v3431, 120
      %v3543 = vpop.permute.xlu0 %3542
      %3544 = vrot.lane.b32.xlu0 %v3434, 120
      %v3545 = vpop.permute.xlu0 %3544
      %3546 = vrot.lane.b32.xlu0 %v3436, 120
      %v3547 = vpop.permute.xlu0 %3546
      %3548 = vrot.lane.b32.xlu0 %v3439, 120
      %v3549 = vpop.permute.xlu0 %3548
      %3550 = vrot.lane.b32.xlu0 %v3441, 120
      %v3551 = vpop.permute.xlu0 %3550
      %3552 = vrot.lane.b32.xlu0 %v3444, 120
      %v3553 = vpop.permute.xlu0 %3552
      %3554 = vrot.lane.b32.xlu0 %v3446, 120
      %v3555 = vpop.permute.xlu0 %3554
      %3556 = vrot.lane.b32.xlu0 %v3449, 120
      %v3557 = vpop.permute.xlu0 %3556
      %3558 = vrot.lane.b32.xlu0 %v3451, 120
      %v3559 = vpop.permute.xlu0 %3558
      %3560 = vrot.lane.b32.xlu0 %v3454, 120
      %v3561 = vpop.permute.xlu0 %3560
      %3562 = vrot.lane.b32.xlu0 %v3456, 120
      %v3563 = vpop.permute.xlu0 %3562
      %3564 = vrot.lane.b32.xlu0 %v3459, 120
      %v3565 = vpop.permute.xlu0 %3564
      %3566 = vrot.lane.b32.xlu0 %v3461, 120
      %v3567 = vpop.permute.xlu0 %3566
      %3568 = vrot.lane.b32.xlu0 %v3464, 120
      %v3569 = vpop.permute.xlu0 %3568
      %3570 = vrot.lane.b32.xlu0 %v3466, 120
      %v3571 = vpop.permute.xlu0 %3570
      %3572 = vrot.lane.b32.xlu0 %v3469, 120
      %v3573 = vpop.permute.xlu0 %3572
      %3574 = vrot.lane.b32.xlu0 %v3471, 120
      %v3575 = vpop.permute.xlu0 %3574
      %3576 = vrot.lane.b32.xlu0 %v3474, 120
      %v3577 = vpop.permute.xlu0 %3576
      %3578 = vrot.lane.b32.xlu0 %v3476, 120
      %v3579 = vpop.permute.xlu0 %3578
      %3580 = vrot.lane.b32.xlu0 %v3479, 120
      %v3581 = vpop.permute.xlu0 %3580
      %3582 = vrot.lane.b32.xlu0 %v3481, 120
      %v3583 = vpop.permute.xlu0 %3582
      %3584 = vrot.lane.b32.xlu0 %v3484, 120
      %v3585 = vpop.permute.xlu0 %3584
      %3586 = vrot.lane.b32.xlu0 %v3486, 120
      %v3587 = vpop.permute.xlu0 %3586
      %3588 = vrot.lane.b32.xlu0 %v3489, 120
      %v3589 = vpop.permute.xlu0 %3588
      %3590 = vrot.lane.b32.xlu0 %v3491, 120
      %v3591 = vpop.permute.xlu0 %3590
      %3592 = vrot.lane.b32.xlu0 %v3494, 120
      %v3593 = vpop.permute.xlu0 %3592
      %3594 = vrot.lane.b32.xlu0 %v3496, 120
      %v3595 = vpop.permute.xlu0 %3594
      %3596 = vrot.lane.b32.xlu0 %v3499, 120
      %v3597 = vpop.permute.xlu0 %3596
      %3598 = vrot.lane.b32.xlu0 %v3501, 120
      %v3599 = vpop.permute.xlu0 %3598
      %3600 = vrot.lane.b32.xlu0 %v3504, 120
      %v3601 = vpop.permute.xlu0 %3600
      %3602 = vrot.lane.b32.xlu0 %v3506, 120
      %v3603 = vpop.permute.xlu0 %3602
      %v3636 = vsel %vm1846, %v3434, %v3504
      %v3637 = vsel %vm1847, %v3436, %v3506
      %v3638 = vsel %vm1848, %v3439, %v3429
      %v3639 = vsel %vm1849, %v3441, %v3431
      %v3640 = vsel %vm1850, %v3444, %v3434
      %v3641 = vsel %vm1851, %v3446, %v3436
      %v3642 = vsel %vm1852, %v3449, %v3439
      %v3643 = vsel %vm1853, %v3451, %v3441
      %v3644 = vsel %vm1854, %v3454, %v3444
      %v3645 = vsel %vm1855, %v3456, %v3446
      %v3646 = vsel %vm1856, %v3459, %v3449
      %v3647 = vsel %vm1857, %v3461, %v3451
      %v3648 = vsel %vm1858, %v3464, %v3454
      %v3649 = vsel %vm1859, %v3466, %v3456
      %v3650 = vsel %vm1860, %v3469, %v3459
      %v3651 = vsel %vm1861, %v3471, %v3461
      %v3652 = vsel %vm1862, %v3474, %v3464
      %v3653 = vsel %vm1863, %v3476, %v3466
      %v3654 = vsel %vm1864, %v3479, %v3469
      %v3655 = vsel %vm1865, %v3481, %v3471
      %v3656 = vsel %vm1866, %v3484, %v3474
      %v3657 = vsel %vm1867, %v3486, %v3476
      %v3658 = vsel %vm1868, %v3489, %v3479
      %v3659 = vsel %vm1869, %v3491, %v3481
      %v3660 = vsel %vm1870, %v3494, %v3484
      %v3661 = vsel %vm1871, %v3496, %v3486
      %v3662 = vsel %vm1872, %v3499, %v3489
      %v3663 = vsel %vm1873, %v3501, %v3491
      %v3664 = vsel %vm1874, %v3504, %v3494
      %v3665 = vsel %vm1875, %v3506, %v3496
      %v3666 = vsel %vm1876, %v3429, %v3499
      %v3667 = vsel %vm1877, %v3431, %v3501
      %3700 = vrot.lane.b32.xlu0 %v3636, 4
      %v3701 = vpop.permute.xlu0 %3700
      %3702 = vrot.lane.b32.xlu0 %v3637, 4
      %v3703 = vpop.permute.xlu0 %3702
      %3704 = vrot.lane.b32.xlu0 %v3638, 4
      %v3705 = vpop.permute.xlu0 %3704
      %3706 = vrot.lane.b32.xlu0 %v3639, 4
      %v3707 = vpop.permute.xlu0 %3706
      %3708 = vrot.lane.b32.xlu0 %v3640, 4
      %v3709 = vpop.permute.xlu0 %3708
      %3710 = vrot.lane.b32.xlu0 %v3641, 4
      %v3711 = vpop.permute.xlu0 %3710
      %3712 = vrot.lane.b32.xlu0 %v3642, 4
      %v3713 = vpop.permute.xlu0 %3712
      %3714 = vrot.lane.b32.xlu0 %v3643, 4
      %v3715 = vpop.permute.xlu0 %3714
      %3716 = vrot.lane.b32.xlu0 %v3644, 4
      %v3717 = vpop.permute.xlu0 %3716
      %3718 = vrot.lane.b32.xlu0 %v3645, 4
      %v3719 = vpop.permute.xlu0 %3718
      %3720 = vrot.lane.b32.xlu0 %v3646, 4
      %v3721 = vpop.permute.xlu0 %3720
      %3722 = vrot.lane.b32.xlu0 %v3647, 4
      %v3723 = vpop.permute.xlu0 %3722
      %3724 = vrot.lane.b32.xlu0 %v3648, 4
      %v3725 = vpop.permute.xlu0 %3724
      %3726 = vrot.lane.b32.xlu0 %v3649, 4
      %v3727 = vpop.permute.xlu0 %3726
      %3728 = vrot.lane.b32.xlu0 %v3650, 4
      %v3729 = vpop.permute.xlu0 %3728
      %3730 = vrot.lane.b32.xlu0 %v3651, 4
      %v3731 = vpop.permute.xlu0 %3730
      %3732 = vrot.lane.b32.xlu0 %v3652, 4
      %v3733 = vpop.permute.xlu0 %3732
      %3734 = vrot.lane.b32.xlu0 %v3653, 4
      %v3735 = vpop.permute.xlu0 %3734
      %3736 = vrot.lane.b32.xlu0 %v3654, 4
      %v3737 = vpop.permute.xlu0 %3736
      %3738 = vrot.lane.b32.xlu0 %v3655, 4
      %v3739 = vpop.permute.xlu0 %3738
      %3740 = vrot.lane.b32.xlu0 %v3656, 4
      %v3741 = vpop.permute.xlu0 %3740
      %3742 = vrot.lane.b32.xlu0 %v3657, 4
      %v3743 = vpop.permute.xlu0 %3742
      %3744 = vrot.lane.b32.xlu0 %v3658, 4
      %v3745 = vpop.permute.xlu0 %3744
      %3746 = vrot.lane.b32.xlu0 %v3659, 4
      %v3747 = vpop.permute.xlu0 %3746
      %3748 = vrot.lane.b32.xlu0 %v3660, 4
      %v3749 = vpop.permute.xlu0 %3748
      %3750 = vrot.lane.b32.xlu0 %v3661, 4
      %v3751 = vpop.permute.xlu0 %3750
      %3752 = vrot.lane.b32.xlu0 %v3662, 4
      %v3753 = vpop.permute.xlu0 %3752
      %3754 = vrot.lane.b32.xlu0 %v3663, 4
      %v3755 = vpop.permute.xlu0 %3754
      %3756 = vrot.lane.b32.xlu0 %v3664, 4
      %v3757 = vpop.permute.xlu0 %3756
      %3758 = vrot.lane.b32.xlu0 %v3665, 4
      %v3759 = vpop.permute.xlu0 %3758
      %3760 = vrot.lane.b32.xlu0 %v3666, 4
      %v3761 = vpop.permute.xlu0 %3760
      %3762 = vrot.lane.b32.xlu0 %v3667, 4
      %v3763 = vpop.permute.xlu0 %3762
      %v3796 = vadd.f32 %v3429, %v3701
      %v3797 = vadd.f32 %v3431, %v3703
      %v3798 = vadd.f32 %v3434, %v3705
      %v3799 = vadd.f32 %v3436, %v3707
      %v3800 = vadd.f32 %v3439, %v3709
      %v3801 = vadd.f32 %v3441, %v3711
      %v3802 = vadd.f32 %v3444, %v3713
      %v3803 = vadd.f32 %v3446, %v3715
      %v3804 = vadd.f32 %v3449, %v3717
      %v3805 = vadd.f32 %v3451, %v3719
      %v3806 = vadd.f32 %v3454, %v3721
      %v3807 = vadd.f32 %v3456, %v3723
      %v3808 = vadd.f32 %v3459, %v3725
      %v3809 = vadd.f32 %v3461, %v3727
      %v3810 = vadd.f32 %v3464, %v3729
      %v3811 = vadd.f32 %v3466, %v3731
      %v3812 = vadd.f32 %v3469, %v3733
      %v3813 = vadd.f32 %v3471, %v3735
      %v3814 = vadd.f32 %v3474, %v3737
      %v3815 = vadd.f32 %v3476, %v3739
      %v3816 = vadd.f32 %v3479, %v3741
      %v3817 = vadd.f32 %v3481, %v3743
      %v3818 = vadd.f32 %v3484, %v3745
      %v3819 = vadd.f32 %v3486, %v3747
      %v3820 = vadd.f32 %v3489, %v3749
      %v3821 = vadd.f32 %v3491, %v3751
      %v3822 = vadd.f32 %v3494, %v3753
      %v3823 = vadd.f32 %v3496, %v3755
      %v3824 = vadd.f32 %v3499, %v3757
      %v3825 = vadd.f32 %v3501, %v3759
      %v3826 = vadd.f32 %v3504, %v3761
      %v3827 = vadd.f32 %v3506, %v3763
      %v3828 = vsel %vm2102, %v3601, %v3545
      %v3829 = vsel %vm2103, %v3603, %v3547
      %v3830 = vsel %vm2104, %v3541, %v3549
      %v3831 = vsel %vm2105, %v3543, %v3551
      %v3832 = vsel %vm2106, %v3545, %v3553
      %v3833 = vsel %vm2107, %v3547, %v3555
      %v3834 = vsel %vm2108, %v3549, %v3557
      %v3835 = vsel %vm2109, %v3551, %v3559
      %v3836 = vsel %vm2110, %v3553, %v3561
      %v3837 = vsel %vm2111, %v3555, %v3563
      %v3838 = vsel %vm2112, %v3557, %v3565
      %v3839 = vsel %vm2113, %v3559, %v3567
      %v3840 = vsel %vm2114, %v3561, %v3569
      %v3841 = vsel %vm2115, %v3563, %v3571
      %v3842 = vsel %vm2116, %v3565, %v3573
      %v3843 = vsel %vm2117, %v3567, %v3575
      %v3844 = vsel %vm2118, %v3569, %v3577
      %v3845 = vsel %vm2119, %v3571, %v3579
      %v3846 = vsel %vm2120, %v3573, %v3581
      %v3847 = vsel %vm2121, %v3575, %v3583
      %v3848 = vsel %vm2122, %v3577, %v3585
      %v3849 = vsel %vm2123, %v3579, %v3587
      %v3850 = vsel %vm2124, %v3581, %v3589
      %v3851 = vsel %vm2125, %v3583, %v3591
      %v3852 = vsel %vm2126, %v3585, %v3593
      %v3853 = vsel %vm2127, %v3587, %v3595
      %v3854 = vsel %vm2128, %v3589, %v3597
      %v3855 = vsel %vm2129, %v3591, %v3599
      %v3856 = vsel %vm2130, %v3593, %v3601
      %v3857 = vsel %vm2131, %v3595, %v3603
      %v3858 = vsel %vm2132, %v3597, %v3541
      %v3859 = vsel %vm2133, %v3599, %v3543
      %3892 = vrot.lane.b32.xlu0 %v3828, 4
      %v3893 = vpop.permute.xlu0 %3892
      %3894 = vrot.lane.b32.xlu0 %v3829, 4
      %v3895 = vpop.permute.xlu0 %3894
      %3896 = vrot.lane.b32.xlu0 %v3830, 4
      %v3897 = vpop.permute.xlu0 %3896
      %3898 = vrot.lane.b32.xlu0 %v3831, 4
      %v3899 = vpop.permute.xlu0 %3898
      %3900 = vrot.lane.b32.xlu0 %v3832, 4
      %v3901 = vpop.permute.xlu0 %3900
      %3902 = vrot.lane.b32.xlu0 %v3833, 4
      %v3903 = vpop.permute.xlu0 %3902
      %3904 = vrot.lane.b32.xlu0 %v3834, 4
      %v3905 = vpop.permute.xlu0 %3904
      %3906 = vrot.lane.b32.xlu0 %v3835, 4
      %v3907 = vpop.permute.xlu0 %3906
      %3908 = vrot.lane.b32.xlu0 %v3836, 4
      %v3909 = vpop.permute.xlu0 %3908
      %3910 = vrot.lane.b32.xlu0 %v3837, 4
      %v3911 = vpop.permute.xlu0 %3910
      %3912 = vrot.lane.b32.xlu0 %v3838, 4
      %v3913 = vpop.permute.xlu0 %3912
      %3914 = vrot.lane.b32.xlu0 %v3839, 4
      %v3915 = vpop.permute.xlu0 %3914
      %3916 = vrot.lane.b32.xlu0 %v3840, 4
      %v3917 = vpop.permute.xlu0 %3916
      %3918 = vrot.lane.b32.xlu0 %v3841, 4
      %v3919 = vpop.permute.xlu0 %3918
      %3920 = vrot.lane.b32.xlu0 %v3842, 4
      %v3921 = vpop.permute.xlu0 %3920
      %3922 = vrot.lane.b32.xlu0 %v3843, 4
      %v3923 = vpop.permute.xlu0 %3922
      %3924 = vrot.lane.b32.xlu0 %v3844, 4
      %v3925 = vpop.permute.xlu0 %3924
      %3926 = vrot.lane.b32.xlu0 %v3845, 4
      %v3927 = vpop.permute.xlu0 %3926
      %3928 = vrot.lane.b32.xlu0 %v3846, 4
      %v3929 = vpop.permute.xlu0 %3928
      %3930 = vrot.lane.b32.xlu0 %v3847, 4
      %v3931 = vpop.permute.xlu0 %3930
      %3932 = vrot.lane.b32.xlu0 %v3848, 4
      %v3933 = vpop.permute.xlu0 %3932
      %3934 = vrot.lane.b32.xlu0 %v3849, 4
      %v3935 = vpop.permute.xlu0 %3934
      %3936 = vrot.lane.b32.xlu0 %v3850, 4
      %v3937 = vpop.permute.xlu0 %3936
      %3938 = vrot.lane.b32.xlu0 %v3851, 4
      %v3939 = vpop.permute.xlu0 %3938
      %3940 = vrot.lane.b32.xlu0 %v3852, 4
      %v3941 = vpop.permute.xlu0 %3940
      %3942 = vrot.lane.b32.xlu0 %v3853, 4
      %v3943 = vpop.permute.xlu0 %3942
      %3944 = vrot.lane.b32.xlu0 %v3854, 4
      %v3945 = vpop.permute.xlu0 %3944
      %3946 = vrot.lane.b32.xlu0 %v3855, 4
      %v3947 = vpop.permute.xlu0 %3946
      %3948 = vrot.lane.b32.xlu0 %v3856, 4
      %v3949 = vpop.permute.xlu0 %3948
      %3950 = vrot.lane.b32.xlu0 %v3857, 4
      %v3951 = vpop.permute.xlu0 %3950
      %3952 = vrot.lane.b32.xlu0 %v3858, 4
      %v3953 = vpop.permute.xlu0 %3952
      %3954 = vrot.lane.b32.xlu0 %v3859, 4
      %v3955 = vpop.permute.xlu0 %3954
      %v3988 = vadd.f32 %v3796, %v3893
      %v3989 = vadd.f32 %v3797, %v3895
      %v3990 = vadd.f32 %v3798, %v3897
      %v3991 = vadd.f32 %v3799, %v3899
      %v3992 = vadd.f32 %v3800, %v3901
      %v3993 = vadd.f32 %v3801, %v3903
      %v3994 = vadd.f32 %v3802, %v3905
      %v3995 = vadd.f32 %v3803, %v3907
      %v3996 = vadd.f32 %v3804, %v3909
      %v3997 = vadd.f32 %v3805, %v3911
      %v3998 = vadd.f32 %v3806, %v3913
      %v3999 = vadd.f32 %v3807, %v3915
      %v4000 = vadd.f32 %v3808, %v3917
      %v4001 = vadd.f32 %v3809, %v3919
      %v4002 = vadd.f32 %v3810, %v3921
      %v4003 = vadd.f32 %v3811, %v3923
      %v4004 = vadd.f32 %v3812, %v3925
      %v4005 = vadd.f32 %v3813, %v3927
      %v4006 = vadd.f32 %v3814, %v3929
      %v4007 = vadd.f32 %v3815, %v3931
      %v4008 = vadd.f32 %v3816, %v3933
      %v4009 = vadd.f32 %v3817, %v3935
      %v4010 = vadd.f32 %v3818, %v3937
      %v4011 = vadd.f32 %v3819, %v3939
      %v4012 = vadd.f32 %v3820, %v3941
      %v4013 = vadd.f32 %v3821, %v3943
      %v4014 = vadd.f32 %v3822, %v3945
      %v4015 = vadd.f32 %v3823, %v3947
      %v4016 = vadd.f32 %v3824, %v3949
      %v4017 = vadd.f32 %v3825, %v3951
      %v4018 = vadd.f32 %v3826, %v3953
      %v4019 = vadd.f32 %v3827, %v3955
      %v4020 = vsel %vm2326, %v3988, 0.0
      %v4021 = vsel %vm2326, %v3989, 0.0
      %v4022 = vadd.f32 %v4020, %v4021
      %v4023 = vsel %vm2326, %v3990, 0.0
      %v4024 = vadd.f32 %v4022, %v4023
      %v4025 = vsel %vm2326, %v3991, 0.0
      %v4026 = vadd.f32 %v4024, %v4025
      %v4027 = vsel %vm2326, %v3992, 0.0
      %v4028 = vadd.f32 %v4026, %v4027
      %v4029 = vsel %vm2326, %v3993, 0.0
      %v4030 = vadd.f32 %v4028, %v4029
      %v4031 = vsel %vm2326, %v3994, 0.0
      %v4032 = vadd.f32 %v4030, %v4031
      %v4033 = vsel %vm2326, %v3995, 0.0
      %v4034 = vadd.f32 %v4032, %v4033
      %v4035 = vsel %vm2326, %v3996, 0.0
      %v4036 = vadd.f32 %v4034, %v4035
      %v4037 = vsel %vm2326, %v3997, 0.0
      %v4038 = vadd.f32 %v4036, %v4037
      %v4039 = vsel %vm2326, %v3998, 0.0
      %v4040 = vadd.f32 %v4038, %v4039
      %v4041 = vsel %vm2326, %v3999, 0.0
      %v4042 = vadd.f32 %v4040, %v4041
      %v4043 = vsel %vm2326, %v4000, 0.0
      %v4044 = vadd.f32 %v4042, %v4043
      %v4045 = vsel %vm2326, %v4001, 0.0
      %v4046 = vadd.f32 %v4044, %v4045
      %v4047 = vsel %vm2326, %v4002, 0.0
      %v4048 = vadd.f32 %v4046, %v4047
      %v4049 = vsel %vm2326, %v4003, 0.0
      %v4050 = vadd.f32 %v4048, %v4049
      %v4051 = vsel %vm2326, %v4004, 0.0
      %v4052 = vadd.f32 %v4050, %v4051
      %v4053 = vsel %vm2326, %v4005, 0.0
      %v4054 = vadd.f32 %v4052, %v4053
      %v4055 = vsel %vm2326, %v4006, 0.0
      %v4056 = vadd.f32 %v4054, %v4055
      %v4057 = vsel %vm2326, %v4007, 0.0
      %v4058 = vadd.f32 %v4056, %v4057
      %v4059 = vsel %vm2326, %v4008, 0.0
      %v4060 = vadd.f32 %v4058, %v4059
      %v4061 = vsel %vm2326, %v4009, 0.0
      %v4062 = vadd.f32 %v4060, %v4061
      %v4063 = vsel %vm2326, %v4010, 0.0
      %v4064 = vadd.f32 %v4062, %v4063
      %v4065 = vsel %vm2326, %v4011, 0.0
      %v4066 = vadd.f32 %v4064, %v4065
      %v4067 = vsel %vm2326, %v4012, 0.0
      %v4068 = vadd.f32 %v4066, %v4067
      %v4069 = vsel %vm2326, %v4013, 0.0
      %v4070 = vadd.f32 %v4068, %v4069
      %v4071 = vsel %vm2326, %v4014, 0.0
      %v4072 = vadd.f32 %v4070, %v4071
      %v4073 = vsel %vm2326, %v4015, 0.0
      %v4074 = vadd.f32 %v4072, %v4073
      %v4075 = vsel %vm2326, %v4016, 0.0
      %v4076 = vadd.f32 %v4074, %v4075
      %v4077 = vsel %vm2326, %v4017, 0.0
      %v4078 = vadd.f32 %v4076, %v4077
      %v4079 = vsel %vm2326, %v4018, 0.0
      %v4080 = vadd.f32 %v4078, %v4079
      %v4081 = vsel %vm2326, %v4019, 0.0
      %v4082 = vadd.f32 %v4080, %v4081
      %v4083 = vrot.slane %v4082, 4
      %v4084 = vadd.f32 %v4082, %v4083
      %v4085 = vrot.slane %v4084, 2
      %v4086 = vadd.f32 %v4084, %v4085
      %v4087 = vrot.slane %v4086, 1
      %v4088 = vadd.f32 %v4086, %v4087
      %v4089 = vmul.f32 %v4088, 0.00390625
      %v4090 = vmul.f32 %v3988, %v3988
      %v4091 = vmul.f32 %v3989, %v3989
      %v4092 = vmul.f32 %v3990, %v3990
      %v4093 = vmul.f32 %v3991, %v3991
      %v4094 = vmul.f32 %v3992, %v3992
      %v4095 = vmul.f32 %v3993, %v3993
      %v4096 = vmul.f32 %v3994, %v3994
      %v4097 = vmul.f32 %v3995, %v3995
      %v4098 = vmul.f32 %v3996, %v3996
      %v4099 = vmul.f32 %v3997, %v3997
      %v4100 = vmul.f32 %v3998, %v3998
      %v4101 = vmul.f32 %v3999, %v3999
      %v4102 = vmul.f32 %v4000, %v4000
      %v4103 = vmul.f32 %v4001, %v4001
      %v4104 = vmul.f32 %v4002, %v4002
      %v4105 = vmul.f32 %v4003, %v4003
      %v4106 = vmul.f32 %v4004, %v4004
      %v4107 = vmul.f32 %v4005, %v4005
      %v4108 = vmul.f32 %v4006, %v4006
      %v4109 = vmul.f32 %v4007, %v4007
      %v4110 = vmul.f32 %v4008, %v4008
      %v4111 = vmul.f32 %v4009, %v4009
      %v4112 = vmul.f32 %v4010, %v4010
      %v4113 = vmul.f32 %v4011, %v4011
      %v4114 = vmul.f32 %v4012, %v4012
      %v4115 = vmul.f32 %v4013, %v4013
      %v4116 = vmul.f32 %v4014, %v4014
      %v4117 = vmul.f32 %v4015, %v4015
      %v4118 = vmul.f32 %v4016, %v4016
      %v4119 = vmul.f32 %v4017, %v4017
      %v4120 = vmul.f32 %v4018, %v4018
      %v4121 = vmul.f32 %v4019, %v4019
      %v4122 = vsel %vm2326, %v4090, 0.0
      %v4123 = vsel %vm2326, %v4091, 0.0
      %v4124 = vadd.f32 %v4122, %v4123
      %v4125 = vsel %vm2326, %v4092, 0.0
      %v4126 = vadd.f32 %v4124, %v4125
      %v4127 = vsel %vm2326, %v4093, 0.0
      %v4128 = vadd.f32 %v4126, %v4127
      %v4129 = vsel %vm2326, %v4094, 0.0
      %v4130 = vadd.f32 %v4128, %v4129
      %v4131 = vsel %vm2326, %v4095, 0.0
      %v4132 = vadd.f32 %v4130, %v4131
      %v4133 = vsel %vm2326, %v4096, 0.0
      %v4134 = vadd.f32 %v4132, %v4133
      %v4135 = vsel %vm2326, %v4097, 0.0
      %v4136 = vadd.f32 %v4134, %v4135
      %v4137 = vsel %vm2326, %v4098, 0.0
      %v4138 = vadd.f32 %v4136, %v4137
      %v4139 = vsel %vm2326, %v4099, 0.0
      %v4140 = vadd.f32 %v4138, %v4139
      %v4141 = vsel %vm2326, %v4100, 0.0
      %v4142 = vadd.f32 %v4140, %v4141
      %v4143 = vsel %vm2326, %v4101, 0.0
      %v4144 = vadd.f32 %v4142, %v4143
      %v4145 = vsel %vm2326, %v4102, 0.0
      %v4146 = vadd.f32 %v4144, %v4145
      %v4147 = vsel %vm2326, %v4103, 0.0
      %v4148 = vadd.f32 %v4146, %v4147
      %v4149 = vsel %vm2326, %v4104, 0.0
      %v4150 = vadd.f32 %v4148, %v4149
      %v4151 = vsel %vm2326, %v4105, 0.0
      %v4152 = vadd.f32 %v4150, %v4151
      %v4153 = vsel %vm2326, %v4106, 0.0
      %v4154 = vadd.f32 %v4152, %v4153
      %v4155 = vsel %vm2326, %v4107, 0.0
      %v4156 = vadd.f32 %v4154, %v4155
      %v4157 = vsel %vm2326, %v4108, 0.0
      %v4158 = vadd.f32 %v4156, %v4157
      %v4159 = vsel %vm2326, %v4109, 0.0
      %v4160 = vadd.f32 %v4158, %v4159
      %v4161 = vsel %vm2326, %v4110, 0.0
      %v4162 = vadd.f32 %v4160, %v4161
      %v4163 = vsel %vm2326, %v4111, 0.0
      %v4164 = vadd.f32 %v4162, %v4163
      %v4165 = vsel %vm2326, %v4112, 0.0
      %v4166 = vadd.f32 %v4164, %v4165
      %v4167 = vsel %vm2326, %v4113, 0.0
      %v4168 = vadd.f32 %v4166, %v4167
      %v4169 = vsel %vm2326, %v4114, 0.0
      %v4170 = vadd.f32 %v4168, %v4169
      %v4171 = vsel %vm2326, %v4115, 0.0
      %v4172 = vadd.f32 %v4170, %v4171
      %v4173 = vsel %vm2326, %v4116, 0.0
      %v4174 = vadd.f32 %v4172, %v4173
      %v4175 = vsel %vm2326, %v4117, 0.0
      %v4176 = vadd.f32 %v4174, %v4175
      %v4177 = vsel %vm2326, %v4118, 0.0
      %v4178 = vadd.f32 %v4176, %v4177
      %v4179 = vsel %vm2326, %v4119, 0.0
      %v4180 = vadd.f32 %v4178, %v4179
      %v4181 = vsel %vm2326, %v4120, 0.0
      %v4182 = vadd.f32 %v4180, %v4181
      %v4183 = vsel %vm2326, %v4121, 0.0
      %v4184 = vadd.f32 %v4182, %v4183
      %v4185 = vrot.slane %v4184, 4
      %v4186 = vadd.f32 %v4184, %v4185
      %v4187 = vrot.slane %v4186, 2
      %v4188 = vadd.f32 %v4186, %v4187
      %v4189 = vrot.slane %v4188, 1
      %v4190 = vadd.f32 %v4188, %v4189
      %v4191 = vmul.f32 %v4190, 0.00390625
      %v4192 = vmul.f32 %v4089, %v4089
      %v4193 = vsub.f32 %v4191, %v4192
      %v4194 = vmax.f32 %v4193, 0.0
      %v4195 = vsub.f32 %v3988, %v4089
      %v4196 = vsub.f32 %v3989, %v4089
      %v4197 = vsub.f32 %v3990, %v4089
      %v4198 = vsub.f32 %v3991, %v4089
      %v4199 = vsub.f32 %v3992, %v4089
      %v4200 = vsub.f32 %v3993, %v4089
      %v4201 = vsub.f32 %v3994, %v4089
      %v4202 = vsub.f32 %v3995, %v4089
      %v4203 = vsub.f32 %v3996, %v4089
      %v4204 = vsub.f32 %v3997, %v4089
      %v4205 = vsub.f32 %v3998, %v4089
      %v4206 = vsub.f32 %v3999, %v4089
      %v4207 = vsub.f32 %v4000, %v4089
      %v4208 = vsub.f32 %v4001, %v4089
      %v4209 = vsub.f32 %v4002, %v4089
      %v4210 = vsub.f32 %v4003, %v4089
      %v4211 = vsub.f32 %v4004, %v4089
      %v4212 = vsub.f32 %v4005, %v4089
      %v4213 = vsub.f32 %v4006, %v4089
      %v4214 = vsub.f32 %v4007, %v4089
      %v4215 = vsub.f32 %v4008, %v4089
      %v4216 = vsub.f32 %v4009, %v4089
      %v4217 = vsub.f32 %v4010, %v4089
      %v4218 = vsub.f32 %v4011, %v4089
      %v4219 = vsub.f32 %v4012, %v4089
      %v4220 = vsub.f32 %v4013, %v4089
      %v4221 = vsub.f32 %v4014, %v4089
      %v4222 = vsub.f32 %v4015, %v4089
      %v4223 = vsub.f32 %v4016, %v4089
      %v4224 = vsub.f32 %v4017, %v4089
      %v4225 = vsub.f32 %v4018, %v4089
      %v4226 = vsub.f32 %v4019, %v4089
      %v4227 = vadd.f32 %v4194, 1e-05
      %v4228 = vrsqrt.pop %v4227
      %v4229 = vmul.f32 %v4228, %v4227
      %v4230 = vmul.f32 %v4229, %v4228
      %v4231 = vmul.f32 0.5, %v4230
      %v4232 = vsub.f32 1.5, %v4231
      %v4233 = vmul.f32 %v4228, %v4232
      %vm4234 = vweird.f32 %v4227
      %vm4235 = vweird.f32 %v4228
      %vm4236 = vmor %vm4234, %vm4235
      %v4237 = vsel %vm4236, %v4228, %v4233
      %v4238 = vmul.f32 %v4195, %v4237
      %v4239 = vmul.f32 %v4196, %v4237
      %v4240 = vmul.f32 %v4197, %v4237
      %v4241 = vmul.f32 %v4198, %v4237
      %v4242 = vmul.f32 %v4199, %v4237
      %v4243 = vmul.f32 %v4200, %v4237
      %v4244 = vmul.f32 %v4201, %v4237
      %v4245 = vmul.f32 %v4202, %v4237
      %v4246 = vmul.f32 %v4203, %v4237
      %v4247 = vmul.f32 %v4204, %v4237
      %v4248 = vmul.f32 %v4205, %v4237
      %v4249 = vmul.f32 %v4206, %v4237
      %v4250 = vmul.f32 %v4207, %v4237
      %v4251 = vmul.f32 %v4208, %v4237
      %v4252 = vmul.f32 %v4209, %v4237
      %v4253 = vmul.f32 %v4210, %v4237
      %v4254 = vmul.f32 %v4211, %v4237
      %v4255 = vmul.f32 %v4212, %v4237
      %v4256 = vmul.f32 %v4213, %v4237
      %v4257 = vmul.f32 %v4214, %v4237
      %v4258 = vmul.f32 %v4215, %v4237
      %v4259 = vmul.f32 %v4216, %v4237
      %v4260 = vmul.f32 %v4217, %v4237
      %v4261 = vmul.f32 %v4218, %v4237
      %v4262 = vmul.f32 %v4219, %v4237
      %v4263 = vmul.f32 %v4220, %v4237
      %v4264 = vmul.f32 %v4221, %v4237
      %v4265 = vmul.f32 %v4222, %v4237
      %v4266 = vmul.f32 %v4223, %v4237
      %v4267 = vmul.f32 %v4224, %v4237
      %v4268 = vmul.f32 %v4225, %v4237
      %v4269 = vmul.f32 %v4226, %v4237
      %4302 = vrot.lane.b32.xlu0 %v717, 4
      %v4303 = vpop.permute.xlu0 %4302
      %4304 = vrot.lane.b32.xlu0 %v718, 4
      %v4305 = vpop.permute.xlu0 %4304
      %4306 = vrot.lane.b32.xlu0 %v719, 4
      %v4307 = vpop.permute.xlu0 %4306
      %4308 = vrot.lane.b32.xlu0 %v720, 4
      %v4309 = vpop.permute.xlu0 %4308
      %4310 = vrot.lane.b32.xlu0 %v721, 4
      %v4311 = vpop.permute.xlu0 %4310
      %4312 = vrot.lane.b32.xlu0 %v722, 4
      %v4313 = vpop.permute.xlu0 %4312
      %4314 = vrot.lane.b32.xlu0 %v723, 4
      %v4315 = vpop.permute.xlu0 %4314
      %4316 = vrot.lane.b32.xlu0 %v724, 4
      %v4317 = vpop.permute.xlu0 %4316
      %4318 = vrot.lane.b32.xlu0 %v725, 4
      %v4319 = vpop.permute.xlu0 %4318
      %4320 = vrot.lane.b32.xlu0 %v726, 4
      %v4321 = vpop.permute.xlu0 %4320
      %4322 = vrot.lane.b32.xlu0 %v727, 4
      %v4323 = vpop.permute.xlu0 %4322
      %4324 = vrot.lane.b32.xlu0 %v728, 4
      %v4325 = vpop.permute.xlu0 %4324
      %4326 = vrot.lane.b32.xlu0 %v729, 4
      %v4327 = vpop.permute.xlu0 %4326
      %4328 = vrot.lane.b32.xlu0 %v730, 4
      %v4329 = vpop.permute.xlu0 %4328
      %4330 = vrot.lane.b32.xlu0 %v731, 4
      %v4331 = vpop.permute.xlu0 %4330
      %4332 = vrot.lane.b32.xlu0 %v732, 4
      %v4333 = vpop.permute.xlu0 %4332
      %4334 = vrot.lane.b32.xlu0 %v733, 4
      %v4335 = vpop.permute.xlu0 %4334
      %4336 = vrot.lane.b32.xlu0 %v734, 4
      %v4337 = vpop.permute.xlu0 %4336
      %4338 = vrot.lane.b32.xlu0 %v735, 4
      %v4339 = vpop.permute.xlu0 %4338
      %4340 = vrot.lane.b32.xlu0 %v736, 4
      %v4341 = vpop.permute.xlu0 %4340
      %4342 = vrot.lane.b32.xlu0 %v737, 4
      %v4343 = vpop.permute.xlu0 %4342
      %4344 = vrot.lane.b32.xlu0 %v738, 4
      %v4345 = vpop.permute.xlu0 %4344
      %4346 = vrot.lane.b32.xlu0 %v739, 4
      %v4347 = vpop.permute.xlu0 %4346
      %4348 = vrot.lane.b32.xlu0 %v740, 4
      %v4349 = vpop.permute.xlu0 %4348
      %4350 = vrot.lane.b32.xlu0 %v741, 4
      %v4351 = vpop.permute.xlu0 %4350
      %4352 = vrot.lane.b32.xlu0 %v742, 4
      %v4353 = vpop.permute.xlu0 %4352
      %4354 = vrot.lane.b32.xlu0 %v743, 4
      %v4355 = vpop.permute.xlu0 %4354
      %4356 = vrot.lane.b32.xlu0 %v744, 4
      %v4357 = vpop.permute.xlu0 %4356
      %4358 = vrot.lane.b32.xlu0 %v745, 4
      %v4359 = vpop.permute.xlu0 %4358
      %4360 = vrot.lane.b32.xlu0 %v746, 4
      %v4361 = vpop.permute.xlu0 %4360
      %4362 = vrot.lane.b32.xlu0 %v747, 4
      %v4363 = vpop.permute.xlu0 %4362
      %4364 = vrot.lane.b32.xlu0 %v748, 4
      %v4365 = vpop.permute.xlu0 %4364
      %v4398 = vadd.f32 %v4238, %v4303
      %v4399 = vadd.f32 %v4239, %v4305
      %v4400 = vadd.f32 %v4240, %v4307
      %v4401 = vadd.f32 %v4241, %v4309
      %v4402 = vadd.f32 %v4242, %v4311
      %v4403 = vadd.f32 %v4243, %v4313
      %v4404 = vadd.f32 %v4244, %v4315
      %v4405 = vadd.f32 %v4245, %v4317
      %v4406 = vadd.f32 %v4246, %v4319
      %v4407 = vadd.f32 %v4247, %v4321
      %v4408 = vadd.f32 %v4248, %v4323
      %v4409 = vadd.f32 %v4249, %v4325
      %v4410 = vadd.f32 %v4250, %v4327
      %v4411 = vadd.f32 %v4251, %v4329
      %v4412 = vadd.f32 %v4252, %v4331
      %v4413 = vadd.f32 %v4253, %v4333
      %v4414 = vadd.f32 %v4254, %v4335
      %v4415 = vadd.f32 %v4255, %v4337
      %v4416 = vadd.f32 %v4256, %v4339
      %v4417 = vadd.f32 %v4257, %v4341
      %v4418 = vadd.f32 %v4258, %v4343
      %v4419 = vadd.f32 %v4259, %v4345
      %v4420 = vadd.f32 %v4260, %v4347
      %v4421 = vadd.f32 %v4261, %v4349
      %v4422 = vadd.f32 %v4262, %v4351
      %v4423 = vadd.f32 %v4263, %v4353
      %v4424 = vadd.f32 %v4264, %v4355
      %v4425 = vadd.f32 %v4265, %v4357
      %v4426 = vadd.f32 %v4266, %v4359
      %v4427 = vadd.f32 %v4267, %v4361
      %v4428 = vadd.f32 %v4268, %v4363
      %v4429 = vadd.f32 %v4269, %v4365
      %4462 = vrot.lane.b32.xlu0 %v4398, 124
      %v4463 = vpop.permute.xlu0 %4462
      %4464 = vrot.lane.b32.xlu0 %v4399, 124
      %v4465 = vpop.permute.xlu0 %4464
      %4466 = vrot.lane.b32.xlu0 %v4400, 124
      %v4467 = vpop.permute.xlu0 %4466
      %4468 = vrot.lane.b32.xlu0 %v4401, 124
      %v4469 = vpop.permute.xlu0 %4468
      %4470 = vrot.lane.b32.xlu0 %v4402, 124
      %v4471 = vpop.permute.xlu0 %4470
      %4472 = vrot.lane.b32.xlu0 %v4403, 124
      %v4473 = vpop.permute.xlu0 %4472
      %4474 = vrot.lane.b32.xlu0 %v4404, 124
      %v4475 = vpop.permute.xlu0 %4474
      %4476 = vrot.lane.b32.xlu0 %v4405, 124
      %v4477 = vpop.permute.xlu0 %4476
      %4478 = vrot.lane.b32.xlu0 %v4406, 124
      %v4479 = vpop.permute.xlu0 %4478
      %4480 = vrot.lane.b32.xlu0 %v4407, 124
      %v4481 = vpop.permute.xlu0 %4480
      %4482 = vrot.lane.b32.xlu0 %v4408, 124
      %v4483 = vpop.permute.xlu0 %4482
      %4484 = vrot.lane.b32.xlu0 %v4409, 124
      %v4485 = vpop.permute.xlu0 %4484
      %4486 = vrot.lane.b32.xlu0 %v4410, 124
      %v4487 = vpop.permute.xlu0 %4486
      %4488 = vrot.lane.b32.xlu0 %v4411, 124
      %v4489 = vpop.permute.xlu0 %4488
      %4490 = vrot.lane.b32.xlu0 %v4412, 124
      %v4491 = vpop.permute.xlu0 %4490
      %4492 = vrot.lane.b32.xlu0 %v4413, 124
      %v4493 = vpop.permute.xlu0 %4492
      %4494 = vrot.lane.b32.xlu0 %v4414, 124
      %v4495 = vpop.permute.xlu0 %4494
      %4496 = vrot.lane.b32.xlu0 %v4415, 124
      %v4497 = vpop.permute.xlu0 %4496
      %4498 = vrot.lane.b32.xlu0 %v4416, 124
      %v4499 = vpop.permute.xlu0 %4498
      %4500 = vrot.lane.b32.xlu0 %v4417, 124
      %v4501 = vpop.permute.xlu0 %4500
      %4502 = vrot.lane.b32.xlu0 %v4418, 124
      %v4503 = vpop.permute.xlu0 %4502
      %4504 = vrot.lane.b32.xlu0 %v4419, 124
      %v4505 = vpop.permute.xlu0 %4504
      %4506 = vrot.lane.b32.xlu0 %v4420, 124
      %v4507 = vpop.permute.xlu0 %4506
      %4508 = vrot.lane.b32.xlu0 %v4421, 124
      %v4509 = vpop.permute.xlu0 %4508
      %4510 = vrot.lane.b32.xlu0 %v4422, 124
      %v4511 = vpop.permute.xlu0 %4510
      %4512 = vrot.lane.b32.xlu0 %v4423, 124
      %v4513 = vpop.permute.xlu0 %4512
      %4514 = vrot.lane.b32.xlu0 %v4424, 124
      %v4515 = vpop.permute.xlu0 %4514
      %4516 = vrot.lane.b32.xlu0 %v4425, 124
      %v4517 = vpop.permute.xlu0 %4516
      %4518 = vrot.lane.b32.xlu0 %v4426, 124
      %v4519 = vpop.permute.xlu0 %4518
      %4520 = vrot.lane.b32.xlu0 %v4427, 124
      %v4521 = vpop.permute.xlu0 %4520
      %4522 = vrot.lane.b32.xlu0 %v4428, 124
      %v4523 = vpop.permute.xlu0 %4522
      %4524 = vrot.lane.b32.xlu0 %v4429, 124
      %v4525 = vpop.permute.xlu0 %4524
      %4558 = vst.msk [vmem:[%s170] sm:$0xff] %vm1471, %v4463
      %4559 = vst.msk [vmem:[%s170 + $0x8] sm:$0xff] %vm1471, %v4465
      %4560 = vst.msk [vmem:[%s170 + $0x10] sm:$0xff] %vm1471, %v4467
      %4561 = vst.msk [vmem:[%s170 + $0x18] sm:$0xff] %vm1471, %v4469
      %4562 = vst.msk [vmem:[%s170 + $0x20] sm:$0xff] %vm1471, %v4471
      %4563 = vst.msk [vmem:[%s170 + $0x28] sm:$0xff] %vm1471, %v4473
      %4564 = vst.msk [vmem:[%s170 + $0x30] sm:$0xff] %vm1471, %v4475
      %4565 = vst.msk [vmem:[%s170 + $0x38] sm:$0xff] %vm1471, %v4477
      %4566 = vst.msk [vmem:[%s170 + $0x40] sm:$0xff] %vm1471, %v4479
      %4567 = vst.msk [vmem:[%s170 + $0x48] sm:$0xff] %vm1471, %v4481
      %4568 = vst.msk [vmem:[%s170 + $0x50] sm:$0xff] %vm1471, %v4483
      %4569 = vst.msk [vmem:[%s170 + $0x58] sm:$0xff] %vm1471, %v4485
      %4570 = vst.msk [vmem:[%s170 + $0x60] sm:$0xff] %vm1471, %v4487
      %4571 = vst.msk [vmem:[%s170 + $0x68] sm:$0xff] %vm1471, %v4489
      %4572 = vst.msk [vmem:[%s170 + $0x70] sm:$0xff] %vm1471, %v4491
      %4573 = vst.msk [vmem:[%s170 + $0x78] sm:$0xff] %vm1471, %v4493
      %4574 = vst.msk [vmem:[%s170 + $0x80] sm:$0xff] %vm1471, %v4495
      %4575 = vst.msk [vmem:[%s170 + $0x88] sm:$0xff] %vm1471, %v4497
      %4576 = vst.msk [vmem:[%s170 + $0x90] sm:$0xff] %vm1471, %v4499
      %4577 = vst.msk [vmem:[%s170 + $0x98] sm:$0xff] %vm1471, %v4501
      %4578 = vst.msk [vmem:[%s170 + $0xa0] sm:$0xff] %vm1471, %v4503
      %4579 = vst.msk [vmem:[%s170 + $0xa8] sm:$0xff] %vm1471, %v4505
      %4580 = vst.msk [vmem:[%s170 + $0xb0] sm:$0xff] %vm1471, %v4507
      %4581 = vst.msk [vmem:[%s170 + $0xb8] sm:$0xff] %vm1471, %v4509
      %4582 = vst.msk [vmem:[%s170 + $0xc0] sm:$0xff] %vm1471, %v4511
      %4583 = vst.msk [vmem:[%s170 + $0xc8] sm:$0xff] %vm1471, %v4513
      %4584 = vst.msk [vmem:[%s170 + $0xd0] sm:$0xff] %vm1471, %v4515
      %4585 = vst.msk [vmem:[%s170 + $0xd8] sm:$0xff] %vm1471, %v4517
      %4586 = vst.msk [vmem:[%s170 + $0xe0] sm:$0xff] %vm1471, %v4519
      %4587 = vst.msk [vmem:[%s170 + $0xe8] sm:$0xff] %vm1471, %v4521
      %4588 = vst.msk [vmem:[%s170 + $0xf0] sm:$0xff] %vm1471, %v4523
      %4589 = vst.msk [vmem:[%s170 + $0xf8] sm:$0xff] %vm1471, %v4525
      %p4590 = scmp.lt.s32.totalorder %s14, 1
      %s4591 = scalar_select %p4590, %s14, 1
      %s4592 = smul.addr %s4591, 32
      %s4593 = smul.addr %s4592, 8
      %s4594 = scalar_lea.vmem %s3, %s4593
      // Predicated region
      $region33: #{tpu_custom_call.1} parent=31 // pred_check
        %p4595 = pneg %p100
      $region34: #{tpu_custom_call.1} parent=31 // pred_check_branch
        %4597 = sbr.rel (%p4595) target = $region36
      $region35: #{tpu_custom_call.1} parent=31 // pred_region
        _
      $region36: #{tpu_custom_call.1} parent=31 // pred_fallthru
        _
    $region32: #{tpu_custom_call.1} parent=5 // pred_fallthru
      _
    %p4598 = scmp.le.s32.totalorder 2, %s9
    // Predicated region
    $region37: #{tpu_custom_call.1} parent=5 // pred_check
      %p4599 = pneg %p4598
    $region38: #{tpu_custom_call.1} parent=5 // pred_check_branch
      %4601 = sbr.rel (%p4599) target = $region40
    $region39: #{tpu_custom_call.1} parent=5 // pred_region
      %s4602 = ssub.s32 %s9, 2
      // Predicated region
      $region41: #{tpu_custom_call.1} parent=39 // pred_check
        %p4603 = pneg %p106
      $region42: #{tpu_custom_call.1} parent=39 // pred_check_branch
        %4605 = sbr.rel (%p4603) target = $region44
      $region43: #{tpu_custom_call.1} parent=39 // pred_region
        %p4606 = scmp.lt.s32.totalorder %s15, 1
        %s4607 = scalar_select %p4606, %s15, 1
        %s4608 = smul.addr %s4607, 32
        %s4609 = smul.addr %s4608, 8
        %s4610 = scalar_lea.vmem %s3, %s4609
      $region44: #{tpu_custom_call.1} parent=39 // pred_fallthru
        _
    $region40: #{tpu_custom_call.1} parent=5 // pred_fallthru
      _
  $region6: #{tpu_custom_call.1} parent=0 // loop_footer
    %s13 = sadd.s32 1, %s9
  $region7: #{tpu_custom_call.1} parent=0 // loop_footer_branch
    %8 = sbr.rel target = $region3
  $region8: #{tpu_custom_call.1} parent=0 // loop_exit
    _

</llo_original>
